<compile_context>
chip_gen: v6e
topology: v6e:2x2x1
jax: 0.10.0
libtpu: 0.0.40
codegen_flags: <defaults>
</compile_context>

<pallas_src>
import numpy as np
import jax
import jax.numpy as jnp
from jax import lax
from jax.experimental import pallas as pl
from jax.experimental.pallas import tpu as pltpu

SENT_NUM = 100   # self.sentence_num in the PyTorch module
S_PAD = 128      # padded sentence slots (multiple of 8, full MXU M tile)
HIDDEN = 768     # hardcoded by nn.Linear(768, 768)


def _sent_gen_kernel(mask_ref, wf_ref, w_ref, b_ref, out_ref, acc_ref):
    # mask_ref : (B_pad, L) int32 in SMEM (scalar prefetch)
    # wf_ref   : (BB, L, D) f32 VMEM
    # w_ref    : (D, D) f32 (in, out layout);  b_ref : (1, D) f32
    # out_ref  : (BB, S_PAD, D) f32
    # acc_ref  : (BB * S_PAD, D) f32 VMEM scratch
    g = pl.program_id(0)
    BB, L, D = wf_ref.shape

    # Segment-max accumulator; -inf so untouched (empty) slots are detectable.
    acc_ref[...] = jnp.full(acc_ref.shape, -jnp.inf, dtype=acc_ref.dtype)

    for bi in range(BB):                       # static unroll over batch block
        row_base = bi * S_PAD

        def body(t, carry, bi=bi, row_base=row_base):
            seg = mask_ref[g * BB + bi, t]     # sentence id of token t (SMEM)

            # 0 = padding token; ids > SENT_NUM are truncated (PyTorch [:100]).
            @pl.when((seg > 0) & (seg <= SENT_NUM))
            def _():
                row = wf_ref[bi, pl.ds(t, 1), :]                # (1, D)
                idx = row_base + seg - 1
                acc_ref[pl.ds(idx, 1), :] = jnp.maximum(
                    acc_ref[pl.ds(idx, 1), :], row)

            return carry

        lax.fori_loop(0, L, body, 0)

    sent = acc_ref[...]                                         # (BB*S_PAD, D)
    # TODO(synk): PyTorch raises on an *interior* empty sentence id; here an
    # empty slot (still -inf) simply becomes zeros.
    sent = jnp.where(sent == -jnp.inf, 0.0, sent)

    # g_W2 linear layer: one batched GEMM on the MXU for all BB*S_PAD rows.
    out = jnp.dot(sent, w_ref[...], preferred_element_type=jnp.float32)
    out = out + b_ref[...]
    out_ref[...] = out.reshape(BB, S_PAD, D).astype(out_ref.dtype)


def sentence_generation(word_feature, sentence_mask_flat, W_torch, bias,
                        *, block_b=2):
    """word_feature: (B, L, D) f32; sentence_mask_flat: (B, L) int (0 = pad);
    W_torch: (D, D) f32 in PyTorch nn.Linear layout (out, in); bias: (D,)."""
    B, L, D = word_feature.shape
    assert D == HIDDEN, "g_W2 is hardwired to 768 -> 768"

    # PyTorch nn.Linear stores weight as (out, in) and computes x @ W.T + b.
    W = jnp.asarray(W_torch, jnp.float32).T              # -> (in, out)
    bias2 = jnp.asarray(bias, jnp.float32).reshape(1, D)

    BB = max(1, min(block_b, B))
    n_blocks = pl.cdiv(B, BB)
    B_pad = n_blocks * BB

    wf = jnp.asarray(word_feature, jnp.float32)
    mask = jnp.asarray(sentence_mask_flat, jnp.int32).reshape(B, L)
    if B_pad != B:
        wf = jnp.pad(wf, ((0, B_pad - B), (0, 0), (0, 0)))
        mask = jnp.pad(mask, ((0, B_pad - B), (0, 0)))

    out = pl.pallas_call(
        _sent_gen_kernel,
        out_shape=jax.ShapeDtypeStruct((B_pad, S_PAD, D), jnp.float32),
        grid_spec=pltpu.PrefetchScalarGridSpec(
            num_scalar_prefetch=1,                       # sentence mask -> SMEM
            grid=(n_blocks,),
            in_specs=[
                pl.BlockSpec((BB, L, D), lambda g, m: (g, 0, 0)),
                pl.BlockSpec((D, D), lambda g, m: (0, 0)),
                pl.BlockSpec((1, D), lambda g, m: (0, 0)),
            ],
            out_specs=pl.BlockSpec((BB, S_PAD, D), lambda g, m: (g, 0, 0)),
            scratch_shapes=[pltpu.VMEM((BB * S_PAD, D), jnp.float32)],
        ),
        compiler_params=pltpu.CompilerParams(
            dimension_semantics=("parallel",)),
    )(mask, wf, W, bias2)

    return out[:B, :SENT_NUM, :]


def _reference_numpy(word_feature, mask_flat, W_torch, bias):
    wf = np.asarray(word_feature, dtype=np.float32)
    mk = np.asarray(mask_flat)
    Wn = np.asarray(W_torch, dtype=np.float32)           # (out, in)
    bn = np.asarray(bias, dtype=np.float32)
    B, L, D = wf.shape
    sent = np.zeros((B, SENT_NUM, D), dtype=np.float32)
    for i in range(B):
        for j in range(1, SENT_NUM + 1):
            m = mk[i] == j
            if m.any():
                sent[i, j - 1] = wf[i][m].max(axis=0)
    return sent @ Wn.T + bn


if __name__ == "__main__":
    B, L, D = 2, 16, HIDDEN

    key = jax.random.PRNGKey(0)
    k_wf, k_w = jax.random.split(key)

    word_feature = jax.random.normal(k_wf, (B, L, D), dtype=jnp.float32)

    # flattened sentence masks (token -> sentence id, 0 = padding)
    sentence_mask = jnp.array(
        [[1, 1, 1, 2, 2, 2, 2, 3, 3, 3, 3, 3, 0, 0, 0, 0],
         [1, 1, 2, 2, 2, 3, 3, 3, 4, 4, 4, 4, 4, 0, 0, 0]],
        dtype=jnp.int32)

    # g_W2 parameters in PyTorch layout: xavier_uniform weight (out, in), zero bias.
    bound = float(np.sqrt(6.0 / (D + D)))
    W_torch = jax.random.uniform(k_w, (D, D), dtype=jnp.float32,
                                 minval=-bound, maxval=bound)
    bias = jnp.zeros((D,), dtype=jnp.float32)

    out = sentence_generation(word_feature, sentence_mask, W_torch, bias)
    out = jax.block_until_ready(out)

    ref = _reference_numpy(word_feature, sentence_mask, W_torch, bias)
    np.testing.assert_allclose(np.asarray(out), ref, rtol=1e-4, atol=1e-4)

    print("KERNEL_OK")
</pallas_src>

<mosaic_0001>
module attributes {stable_mosaic.version = 11 : i64} {
  func.func @_sent_gen_kernel(%arg0: i32, %arg1: memref<2x16xi32, #tpu.memory_space<smem>>, %arg2: memref<2x16x768xf32, #tpu.memory_space<vmem>>, %arg3: memref<768x768xf32, #tpu.memory_space<vmem>>, %arg4: memref<1x768xf32, #tpu.memory_space<vmem>>, %arg5: memref<2x128x768xf32, #tpu.memory_space<vmem>>, %arg6: memref<256x768xf32, #tpu.memory_space<vmem>>) attributes {dimension_semantics = [#tpu.dimension_semantics<parallel>], iteration_bounds = array<i64: 1>, scalar_prefetch = 1 : i64, scratch_operands = 1 : i64, tpu.core_type = #tpu.core_type<tc>, window_params = [{transform_indices = @transform_0, window_bounds = array<i64: 2, 16, 768>}, {pipeline_mode = #tpu.pipeline_mode<synchronous>, transform_indices = @transform_1, window_bounds = array<i64: 768, 768>}, {pipeline_mode = #tpu.pipeline_mode<synchronous>, transform_indices = @transform_2, window_bounds = array<i64: 1, 768>}, {transform_indices = @transform_3, window_bounds = array<i64: 2, 128, 768>}]} {
    %cst = arith.constant 0xFF800000 : f32
    %0 = vector.broadcast %cst : f32 to vector<256x768xf32>
    %c0 = arith.constant 0 : index
    %c0_0 = arith.constant 0 : index
    %1 = vector.load %arg6[%c0, %c0_0] : memref<256x768xf32, #tpu.memory_space<vmem>>, vector<256x768xf32>
    tpu.vector_store %arg6[%c0, %c0_0], %0 {strides = array<i32>} : memref<256x768xf32, #tpu.memory_space<vmem>>, vector<256x768xf32>,
    %c0_i32 = arith.constant 0 : i32
    %c16_i32 = arith.constant 16 : i32
    %2 = arith.addi %c0_i32, %c16_i32 : i32
    %c1_i32 = arith.constant 1 : i32
    scf.for %arg7 = %c0_i32 to %2 step %c1_i32  : i32 {
      %c2_i32 = arith.constant 2 : i32
      %16 = arith.muli %arg0, %c2_i32 : i32
      %c0_i32_18 = arith.constant 0 : i32
      %17 = arith.addi %16, %c0_i32_18 : i32
      %18 = arith.index_cast %17 : i32 to index
      %19 = arith.index_cast %arg7 : i32 to index
      %20 = memref.load %arg1[%18, %19] : memref<2x16xi32, #tpu.memory_space<smem>>
      %c0_i32_19 = arith.constant 0 : i32
      %21 = arith.cmpi sgt, %20, %c0_i32_19 : i32
      %c100_i32 = arith.constant 100 : i32
      %22 = arith.cmpi sle, %20, %c100_i32 : i32
      %23 = arith.andi %21, %22 : i1
      %24 = arith.extui %23 : i1 to i32
      %c0_i32_20 = arith.constant 0 : i32
      %25 = arith.cmpi ne, %24, %c0_i32_20 : i32
      scf.if %25 {
        %c0_21 = arith.constant 0 : index
        %26 = arith.index_cast %arg7 : i32 to index
        %c0_22 = arith.constant 0 : index
        %27 = vector.load %arg2[%c0_21, %26, %c0_22] : memref<2x16x768xf32, #tpu.memory_space<vmem>>, vector<1x1x768xf32>
        %28 = vector.shape_cast %27 : vector<1x1x768xf32> to vector<1x768xf32>
        %c0_i32_23 = arith.constant 0 : i32
        %29 = arith.addi %c0_i32_23, %20 : i32
        %c1_i32_24 = arith.constant 1 : i32
        %30 = arith.subi %29, %c1_i32_24 : i32
        %31 = arith.index_cast %30 : i32 to index
        %c0_25 = arith.constant 0 : index
        %32 = vector.load %arg6[%31, %c0_25] : memref<256x768xf32, #tpu.memory_space<vmem>>, vector<1x768xf32>
        %33 = arith.maximumf %32, %28 : vector<1x768xf32>
        %34 = arith.index_cast %30 : i32 to index
        %c0_26 = arith.constant 0 : index
        %35 = vector.load %arg6[%34, %c0_26] : memref<256x768xf32, #tpu.memory_space<vmem>>, vector<1x768xf32>
        tpu.vector_store %arg6[%34, %c0_26], %33 {strides = array<i32>} : memref<256x768xf32, #tpu.memory_space<vmem>>, vector<1x768xf32>,
      } else {
      }
    }
    %c16_i32_1 = arith.constant 16 : i32
    %c0_i32_2 = arith.constant 0 : i32
    %c16_i32_3 = arith.constant 16 : i32
    %3 = arith.addi %c0_i32_2, %c16_i32_3 : i32
    %c1_i32_4 = arith.constant 1 : i32
    scf.for %arg7 = %c0_i32_2 to %3 step %c1_i32_4  : i32 {
      %c2_i32 = arith.constant 2 : i32
      %16 = arith.muli %arg0, %c2_i32 : i32
      %c1_i32_18 = arith.constant 1 : i32
      %17 = arith.addi %16, %c1_i32_18 : i32
      %18 = arith.index_cast %17 : i32 to index
      %19 = arith.index_cast %arg7 : i32 to index
      %20 = memref.load %arg1[%18, %19] : memref<2x16xi32, #tpu.memory_space<smem>>
      %c0_i32_19 = arith.constant 0 : i32
      %21 = arith.cmpi sgt, %20, %c0_i32_19 : i32
      %c100_i32 = arith.constant 100 : i32
      %22 = arith.cmpi sle, %20, %c100_i32 : i32
      %23 = arith.andi %21, %22 : i1
      %24 = arith.extui %23 : i1 to i32
      %c0_i32_20 = arith.constant 0 : i32
      %25 = arith.cmpi ne, %24, %c0_i32_20 : i32
      scf.if %25 {
        %c1 = arith.constant 1 : index
        %26 = arith.index_cast %arg7 : i32 to index
        %c0_21 = arith.constant 0 : index
        %27 = vector.load %arg2[%c1, %26, %c0_21] : memref<2x16x768xf32, #tpu.memory_space<vmem>>, vector<1x1x768xf32>
        %28 = vector.shape_cast %27 : vector<1x1x768xf32> to vector<1x768xf32>
        %c128_i32 = arith.constant 128 : i32
        %29 = arith.addi %c128_i32, %20 : i32
        %c1_i32_22 = arith.constant 1 : i32
        %30 = arith.subi %29, %c1_i32_22 : i32
        %31 = arith.index_cast %30 : i32 to index
        %c0_23 = arith.constant 0 : index
        %32 = vector.load %arg6[%31, %c0_23] : memref<256x768xf32, #tpu.memory_space<vmem>>, vector<1x768xf32>
        %33 = arith.maximumf %32, %28 : vector<1x768xf32>
        %34 = arith.index_cast %30 : i32 to index
        %c0_24 = arith.constant 0 : index
        %35 = vector.load %arg6[%34, %c0_24] : memref<256x768xf32, #tpu.memory_space<vmem>>, vector<1x768xf32>
        tpu.vector_store %arg6[%34, %c0_24], %33 {strides = array<i32>} : memref<256x768xf32, #tpu.memory_space<vmem>>, vector<1x768xf32>,
      } else {
      }
    }
    %c16_i32_5 = arith.constant 16 : i32
    %c0_6 = arith.constant 0 : index
    %c0_7 = arith.constant 0 : index
    %4 = vector.load %arg6[%c0_6, %c0_7] : memref<256x768xf32, #tpu.memory_space<vmem>>, vector<256x768xf32>
    %cst_8 = arith.constant 0xFF800000 : f32
    %5 = vector.broadcast %cst_8 : f32 to vector<256x768xf32>
    %6 = arith.cmpf oeq, %4, %5 : vector<256x768xf32>
    %cst_9 = arith.constant 0.000000e+00 : f32
    %7 = vector.broadcast %cst_9 : f32 to vector<256x768xf32>
    %8 = arith.select %6, %7, %4 : vector<256x768xi1>, vector<256x768xf32>
    %c0_10 = arith.constant 0 : index
    %c0_11 = arith.constant 0 : index
    %9 = vector.load %arg3[%c0_10, %c0_11] : memref<768x768xf32, #tpu.memory_space<vmem>>, vector<768x768xf32>
    %cst_12 = arith.constant dense<0.000000e+00> : vector<256x768xf32>
    %10 = tpu.matmul %8, %9, %cst_12 {dimension_numbers = #tpu.dot_dimension_numbers<[1], [0], [0], [1], [0, 0, 1, 1], [], []>} : vector<256x768xf32>, vector<768x768xf32>, vector<256x768xf32> -> vector<256x768xf32>
    %c0_13 = arith.constant 0 : index
    %c0_14 = arith.constant 0 : index
    %11 = vector.load %arg4[%c0_13, %c0_14] : memref<1x768xf32, #tpu.memory_space<vmem>>, vector<1x768xf32>
    %12 = vector.broadcast %11 : vector<1x768xf32> to vector<256x768xf32>
    %13 = arith.addf %10, %12 : vector<256x768xf32>
    %14 = vector.shape_cast %13 : vector<256x768xf32> to vector<2x128x768xf32>
    %c0_15 = arith.constant 0 : index
    %c0_16 = arith.constant 0 : index
    %c0_17 = arith.constant 0 : index
    %15 = vector.load %arg5[%c0_15, %c0_16, %c0_17] : memref<2x128x768xf32, #tpu.memory_space<vmem>>, vector<2x128x768xf32>
    tpu.vector_store %arg5[%c0_15, %c0_16, %c0_17], %14 {strides = array<i32>} : memref<2x128x768xf32, #tpu.memory_space<vmem>>, vector<2x128x768xf32>,
    return
  }
  func.func @transform_0(%arg0: i32, %arg1: memref<2x16xi32, #tpu.memory_space<smem>>) -> (i32, i32, i32) {
    %c0_i32 = arith.constant 0 : i32
    %c0_i32_0 = arith.constant 0 : i32
    %c0_i32_1 = arith.constant 0 : i32
    return %arg0, %c0_i32, %c0_i32_0 : i32, i32, i32
  }
  func.func @transform_1(%arg0: i32, %arg1: memref<2x16xi32, #tpu.memory_space<smem>>) -> (i32, i32) {
    %c0_i32 = arith.constant 0 : i32
    %c0_i32_0 = arith.constant 0 : i32
    %c0_i32_1 = arith.constant 0 : i32
    return %c0_i32, %c0_i32_0 : i32, i32
  }
  func.func @transform_2(%arg0: i32, %arg1: memref<2x16xi32, #tpu.memory_space<smem>>) -> (i32, i32) {
    %c0_i32 = arith.constant 0 : i32
    %c0_i32_0 = arith.constant 0 : i32
    %c0_i32_1 = arith.constant 0 : i32
    return %c0_i32, %c0_i32_0 : i32, i32
  }
  func.func @transform_3(%arg0: i32, %arg1: memref<2x16xi32, #tpu.memory_space<smem>>) -> (i32, i32, i32) {
    %c0_i32 = arith.constant 0 : i32
    %c0_i32_0 = arith.constant 0 : i32
    %c0_i32_1 = arith.constant 0 : i32
    return %arg0, %c0_i32, %c0_i32_0 : i32, i32, i32
  }
}

</mosaic_0001>

<llo_original>
// kernel: tpu_custom_call.1
$region0: #{tpu_custom_call.1}
  #allocation0 [shape = 'u32[]', space=smem, size = 0x4, offset = 0x4, fixed_abs, tag = 'smem constant byte address 0x4 - core index']
  #allocation1 [shape = 'u32[144,128]{1,0:T(1,128)}', space=vmem, size = 0x12000, scoped, tag = 'internal scratch']
  #allocation2 [shape = 'f32[256,768]{1,0:T(8,128)}', space=vmem, size = 0xc0000, scoped, tag = 'scratch operand']
  #allocation3 [shape = 's32[1]{0}', space=sflag, size = 0x4, scoped, tag = 'scoped memory for tpu_custom_call.1']
  #allocation4 [shape = 'u8[1024]{0}', space=smem, size = 0x400, scoped, tag = 'prefetched SMEM operand 0']
  %s0 = inlined_call_operand.hbm [shape: s32[2,16], index: 0, kind: input, shape index: {}]
  %s1 = inlined_call_operand.hbm [shape: f32[2,16,768], index: 1, kind: input, shape index: {}]
  %s2 = inlined_call_operand.hbm [shape: f32[768,768], index: 2, kind: input, shape index: {}]
  %s3 = inlined_call_operand.hbm [shape: f32[1,768], index: 3, kind: input, shape index: {}]
  %s4 = inlined_call_operand.hbm [shape: f32[2,128,768], index: 4, kind: output, shape index: {}]
  %s5 = sld [smem:[#allocation0]]
  $region56: #{tpu_custom_call.1} parent=0
    _
  %s7 = ssub.s32 1, %s5
  %s8 = scalar_select 0, %s7, %s5
  %10 = dma.hbm_to_smem %s0, 32, [#allocation4], [#allocation3]
  %11 = dma.done [#allocation3], 32
  %12 = sfence
  $region1: #{tpu_custom_call.1} parent=0
    #allocation5 [shape = 'u8[98304]{0}', space=vmem, size = 0x18000, scoped, tag = 'input window, operand 1, single buffered']
    #allocation6 [shape = 's32[1]{0}', space=sflag, size = 0x4, scoped, tag = 'scoped memory for tpu_custom_call.1']
    #allocation7 [shape = 's32[1]{0}', space=sflag, size = 0x4, scoped, tag = 'scoped memory for tpu_custom_call.1']
    #allocation8 [shape = 'u8[2359296]{0}', space=vmem, size = 0x240000, scoped, tag = 'input window, operand 2, single buffered']
    #allocation9 [shape = 's32[1]{0}', space=sflag, size = 0x4, scoped, tag = 'scoped memory for tpu_custom_call.1']
    #allocation10 [shape = 'u8[3072]{0}', space=vmem, size = 0xc00, scoped, tag = 'input window, operand 3, single buffered']
    #allocation11 [shape = 'u8[786432]{0}', space=vmem, size = 0xc0000, scoped, tag = 'output window, operand 0, single buffered']
    %13 = vsyncpa [#allocation6], 0
    %14 = vsyncpa [#allocation9], 0
    %15 = vsyncpa [#allocation7], 0
    // Predicated region
    $region2: #{tpu_custom_call.1} parent=1 // pred_check
      _
    $region3: #{tpu_custom_call.1} parent=1 // pred_check_branch
      %17 = sbr.rel (0) target = $region5
    $region4: #{tpu_custom_call.1} parent=1 // pred_region
      %s19 = ssub.s32 3072, 3072
      %20 = vsyncadd [#allocation6], %s19
      %s21 = sshll.u32 [#allocation5], 4
      %s22 = int_to_ptr.vmem [resolvable:$true] %s21
      %27 = dma.hbm_to_vmem [thread:$0]  %s1, 3072, %s22, [#allocation6], 768, 768, 48
    $region5: #{tpu_custom_call.1} parent=1 // pred_fallthru
      _
    // Predicated region
    $region6: #{tpu_custom_call.1} parent=1 // pred_check
      _
    $region7: #{tpu_custom_call.1} parent=1 // pred_check_branch
      %29 = sbr.rel (0) target = $region9
    $region8: #{tpu_custom_call.1} parent=1 // pred_region
      %s31 = ssub.s32 73728, 73728
      %32 = vsyncadd [#allocation9], %s31
      %s33 = sshll.u32 [#allocation8], 4
      %s34 = int_to_ptr.vmem [resolvable:$true] %s33
      %39 = dma.hbm_to_vmem [thread:$0]  %s2, 73728, %s34, [#allocation9], 768, 768, 48
    $region9: #{tpu_custom_call.1} parent=1 // pred_fallthru
      _
    // Predicated region
    $region10: #{tpu_custom_call.1} parent=1 // pred_check
      _
    $region11: #{tpu_custom_call.1} parent=1 // pred_check_branch
      %41 = sbr.rel (0) target = $region13
    $region12: #{tpu_custom_call.1} parent=1 // pred_region
      %s43 = ssub.s32 96, 96
      %44 = vsyncadd [#allocation9], %s43
      %s46 = sshll.u32 [#allocation10], 4
      %s47 = int_to_ptr.vmem [resolvable:$true] %s46
      %49 = dma.hbm_to_vmem [thread:$0]  %s3, 96, %s47, [#allocation9]
    $region13: #{tpu_custom_call.1} parent=1 // pred_fallthru
      _
    // Predicated region
    $region14: #{tpu_custom_call.1} parent=1 // pred_check
      _
    $region15: #{tpu_custom_call.1} parent=1 // pred_check_branch
      %51 = sbr.rel (0) target = $region17
    $region16: #{tpu_custom_call.1} parent=1 // pred_region
      %52 = dma.done [#allocation6], 3072
    $region17: #{tpu_custom_call.1} parent=1 // pred_fallthru
      _
    // Predicated region
    $region18: #{tpu_custom_call.1} parent=1 // pred_check
      _
    $region19: #{tpu_custom_call.1} parent=1 // pred_check_branch
      %54 = sbr.rel (0) target = $region21
    $region20: #{tpu_custom_call.1} parent=1 // pred_region
      %55 = dma.done [#allocation9], 73728
    $region21: #{tpu_custom_call.1} parent=1 // pred_fallthru
      _
    // Predicated region
    $region22: #{tpu_custom_call.1} parent=1 // pred_check
      _
    $region23: #{tpu_custom_call.1} parent=1 // pred_check_branch
      %57 = sbr.rel (0) target = $region25
    $region24: #{tpu_custom_call.1} parent=1 // pred_region
      %58 = dma.done [#allocation9], 96
    $region25: #{tpu_custom_call.1} parent=1 // pred_fallthru
      _
    %59 = vst [vmem:[#allocation2] sm:$0xff] -inf
    %60 = vst [vmem:[#allocation2 + $0x8] sm:$0xff] -inf
    %61 = vst [vmem:[#allocation2 + $0x10] sm:$0xff] -inf
    %62 = vst [vmem:[#allocation2 + $0x18] sm:$0xff] -inf
    %63 = vst [vmem:[#allocation2 + $0x20] sm:$0xff] -inf
    %64 = vst [vmem:[#allocation2 + $0x28] sm:$0xff] -inf
    %65 = vst [vmem:[#allocation2 + $0x30] sm:$0xff] -inf
    %66 = vst [vmem:[#allocation2 + $0x38] sm:$0xff] -inf
    %67 = vst [vmem:[#allocation2 + $0x40] sm:$0xff] -inf
    %68 = vst [vmem:[#allocation2 + $0x48] sm:$0xff] -inf
    %69 = vst [vmem:[#allocation2 + $0x50] sm:$0xff] -inf
    %70 = vst [vmem:[#allocation2 + $0x58] sm:$0xff] -inf
    %71 = vst [vmem:[#allocation2 + $0x60] sm:$0xff] -inf
    %72 = vst [vmem:[#allocation2 + $0x68] sm:$0xff] -inf
    %73 = vst [vmem:[#allocation2 + $0x70] sm:$0xff] -inf
    %74 = vst [vmem:[#allocation2 + $0x78] sm:$0xff] -inf
    %75 = vst [vmem:[#allocation2 + $0x80] sm:$0xff] -inf
    %76 = vst [vmem:[#allocation2 + $0x88] sm:$0xff] -inf
    %77 = vst [vmem:[#allocation2 + $0x90] sm:$0xff] -inf
    %78 = vst [vmem:[#allocation2 + $0x98] sm:$0xff] -inf
    %79 = vst [vmem:[#allocation2 + $0xa0] sm:$0xff] -inf
    %80 = vst [vmem:[#allocation2 + $0xa8] sm:$0xff] -inf
    %81 = vst [vmem:[#allocation2 + $0xb0] sm:$0xff] -inf
    %82 = vst [vmem:[#allocation2 + $0xb8] sm:$0xff] -inf
    %83 = vst [vmem:[#allocation2 + $0xc0] sm:$0xff] -inf
    %84 = vst [vmem:[#allocation2 + $0xc8] sm:$0xff] -inf
    %85 = vst [vmem:[#allocation2 + $0xd0] sm:$0xff] -inf
    %86 = vst [vmem:[#allocation2 + $0xd8] sm:$0xff] -inf
    %87 = vst [vmem:[#allocation2 + $0xe0] sm:$0xff] -inf
    %88 = vst [vmem:[#allocation2 + $0xe8] sm:$0xff] -inf
    %89 = vst [vmem:[#allocation2 + $0xf0] sm:$0xff] -inf
    %90 = vst [vmem:[#allocation2 + $0xf8] sm:$0xff] -inf
    %91 = vst [vmem:[#allocation2 + $0x100] sm:$0xff] -inf
    %92 = vst [vmem:[#allocation2 + $0x108] sm:$0xff] -inf
    %93 = vst [vmem:[#allocation2 + $0x110] sm:$0xff] -inf
    %94 = vst [vmem:[#allocation2 + $0x118] sm:$0xff] -inf
    %95 = vst [vmem:[#allocation2 + $0x120] sm:$0xff] -inf
    %96 = vst [vmem:[#allocation2 + $0x128] sm:$0xff] -inf
    %97 = vst [vmem:[#allocation2 + $0x130] sm:$0xff] -inf
    %98 = vst [vmem:[#allocation2 + $0x138] sm:$0xff] -inf
    %99 = vst [vmem:[#allocation2 + $0x140] sm:$0xff] -inf
    %100 = vst [vmem:[#allocation2 + $0x148] sm:$0xff] -inf
    %101 = vst [vmem:[#allocation2 + $0x150] sm:$0xff] -inf
    %102 = vst [vmem:[#allocation2 + $0x158] sm:$0xff] -inf
    %103 = vst [vmem:[#allocation2 + $0x160] sm:$0xff] -inf
    %104 = vst [vmem:[#allocation2 + $0x168] sm:$0xff] -inf
    %105 = vst [vmem:[#allocation2 + $0x170] sm:$0xff] -inf
    %106 = vst [vmem:[#allocation2 + $0x178] sm:$0xff] -inf
    %107 = vst [vmem:[#allocation2 + $0x180] sm:$0xff] -inf
    %108 = vst [vmem:[#allocation2 + $0x188] sm:$0xff] -inf
    %109 = vst [vmem:[#allocation2 + $0x190] sm:$0xff] -inf
    %110 = vst [vmem:[#allocation2 + $0x198] sm:$0xff] -inf
    %111 = vst [vmem:[#allocation2 + $0x1a0] sm:$0xff] -inf
    %112 = vst [vmem:[#allocation2 + $0x1a8] sm:$0xff] -inf
    %113 = vst [vmem:[#allocation2 + $0x1b0] sm:$0xff] -inf
    %114 = vst [vmem:[#allocation2 + $0x1b8] sm:$0xff] -inf
    %115 = vst [vmem:[#allocation2 + $0x1c0] sm:$0xff] -inf
    %116 = vst [vmem:[#allocation2 + $0x1c8] sm:$0xff] -inf
    %117 = vst [vmem:[#allocation2 + $0x1d0] sm:$0xff] -inf
    %118 = vst [vmem:[#allocation2 + $0x1d8] sm:$0xff] -inf
    %119 = vst [vmem:[#allocation2 + $0x1e0] sm:$0xff] -inf
    %120 = vst [vmem:[#allocation2 + $0x1e8] sm:$0xff] -inf
    %121 = vst [vmem:[#allocation2 + $0x1f0] sm:$0xff] -inf
    %122 = vst [vmem:[#allocation2 + $0x1f8] sm:$0xff] -inf
    %123 = vst [vmem:[#allocation2 + $0x200] sm:$0xff] -inf
    %124 = vst [vmem:[#allocation2 + $0x208] sm:$0xff] -inf
    %125 = vst [vmem:[#allocation2 + $0x210] sm:$0xff] -inf
    %126 = vst [vmem:[#allocation2 + $0x218] sm:$0xff] -inf
    %127 = vst [vmem:[#allocation2 + $0x220] sm:$0xff] -inf
    %128 = vst [vmem:[#allocation2 + $0x228] sm:$0xff] -inf
    %129 = vst [vmem:[#allocation2 + $0x230] sm:$0xff] -inf
    %130 = vst [vmem:[#allocation2 + $0x238] sm:$0xff] -inf
    %131 = vst [vmem:[#allocation2 + $0x240] sm:$0xff] -inf
    %132 = vst [vmem:[#allocation2 + $0x248] sm:$0xff] -inf
    %133 = vst [vmem:[#allocation2 + $0x250] sm:$0xff] -inf
    %134 = vst [vmem:[#allocation2 + $0x258] sm:$0xff] -inf
    %135 = vst [vmem:[#allocation2 + $0x260] sm:$0xff] -inf
    %136 = vst [vmem:[#allocation2 + $0x268] sm:$0xff] -inf
    %137 = vst [vmem:[#allocation2 + $0x270] sm:$0xff] -inf
    %138 = vst [vmem:[#allocation2 + $0x278] sm:$0xff] -inf
    %139 = vst [vmem:[#allocation2 + $0x280] sm:$0xff] -inf
    %140 = vst [vmem:[#allocation2 + $0x288] sm:$0xff] -inf
    %141 = vst [vmem:[#allocation2 + $0x290] sm:$0xff] -inf
    %142 = vst [vmem:[#allocation2 + $0x298] sm:$0xff] -inf
    %143 = vst [vmem:[#allocation2 + $0x2a0] sm:$0xff] -inf
    %144 = vst [vmem:[#allocation2 + $0x2a8] sm:$0xff] -inf
    %145 = vst [vmem:[#allocation2 + $0x2b0] sm:$0xff] -inf
    %146 = vst [vmem:[#allocation2 + $0x2b8] sm:$0xff] -inf
    %147 = vst [vmem:[#allocation2 + $0x2c0] sm:$0xff] -inf
    %148 = vst [vmem:[#allocation2 + $0x2c8] sm:$0xff] -inf
    %149 = vst [vmem:[#allocation2 + $0x2d0] sm:$0xff] -inf
    %150 = vst [vmem:[#allocation2 + $0x2d8] sm:$0xff] -inf
    %151 = vst [vmem:[#allocation2 + $0x2e0] sm:$0xff] -inf
    %152 = vst [vmem:[#allocation2 + $0x2e8] sm:$0xff] -inf
    %153 = vst [vmem:[#allocation2 + $0x2f0] sm:$0xff] -inf
    %154 = vst [vmem:[#allocation2 + $0x2f8] sm:$0xff] -inf
    %155 = vst [vmem:[#allocation2 + $0x300] sm:$0xff] -inf
    %156 = vst [vmem:[#allocation2 + $0x308] sm:$0xff] -inf
    %157 = vst [vmem:[#allocation2 + $0x310] sm:$0xff] -inf
    %158 = vst [vmem:[#allocation2 + $0x318] sm:$0xff] -inf
    %159 = vst [vmem:[#allocation2 + $0x320] sm:$0xff] -inf
    %160 = vst [vmem:[#allocation2 + $0x328] sm:$0xff] -inf
    %161 = vst [vmem:[#allocation2 + $0x330] sm:$0xff] -inf
    %162 = vst [vmem:[#allocation2 + $0x338] sm:$0xff] -inf
    %163 = vst [vmem:[#allocation2 + $0x340] sm:$0xff] -inf
    %164 = vst [vmem:[#allocation2 + $0x348] sm:$0xff] -inf
    %165 = vst [vmem:[#allocation2 + $0x350] sm:$0xff] -inf
    %166 = vst [vmem:[#allocation2 + $0x358] sm:$0xff] -inf
    %167 = vst [vmem:[#allocation2 + $0x360] sm:$0xff] -inf
    %168 = vst [vmem:[#allocation2 + $0x368] sm:$0xff] -inf
    %169 = vst [vmem:[#allocation2 + $0x370] sm:$0xff] -inf
    %170 = vst [vmem:[#allocation2 + $0x378] sm:$0xff] -inf
    %171 = vst [vmem:[#allocation2 + $0x380] sm:$0xff] -inf
    %172 = vst [vmem:[#allocation2 + $0x388] sm:$0xff] -inf
    %173 = vst [vmem:[#allocation2 + $0x390] sm:$0xff] -inf
    %174 = vst [vmem:[#allocation2 + $0x398] sm:$0xff] -inf
    %175 = vst [vmem:[#allocation2 + $0x3a0] sm:$0xff] -inf
    %176 = vst [vmem:[#allocation2 + $0x3a8] sm:$0xff] -inf
    %177 = vst [vmem:[#allocation2 + $0x3b0] sm:$0xff] -inf
    %178 = vst [vmem:[#allocation2 + $0x3b8] sm:$0xff] -inf
    %179 = vst [vmem:[#allocation2 + $0x3c0] sm:$0xff] -inf
    %180 = vst [vmem:[#allocation2 + $0x3c8] sm:$0xff] -inf
    %181 = vst [vmem:[#allocation2 + $0x3d0] sm:$0xff] -inf
    %182 = vst [vmem:[#allocation2 + $0x3d8] sm:$0xff] -inf
    %183 = vst [vmem:[#allocation2 + $0x3e0] sm:$0xff] -inf
    %184 = vst [vmem:[#allocation2 + $0x3e8] sm:$0xff] -inf
    %185 = vst [vmem:[#allocation2 + $0x3f0] sm:$0xff] -inf
    %186 = vst [vmem:[#allocation2 + $0x3f8] sm:$0xff] -inf
    %187 = vst [vmem:[#allocation2 + $0x400] sm:$0xff] -inf
    %188 = vst [vmem:[#allocation2 + $0x408] sm:$0xff] -inf
    %189 = vst [vmem:[#allocation2 + $0x410] sm:$0xff] -inf
    %190 = vst [vmem:[#allocation2 + $0x418] sm:$0xff] -inf
    %191 = vst [vmem:[#allocation2 + $0x420] sm:$0xff] -inf
    %192 = vst [vmem:[#allocation2 + $0x428] sm:$0xff] -inf
    %193 = vst [vmem:[#allocation2 + $0x430] sm:$0xff] -inf
    %194 = vst [vmem:[#allocation2 + $0x438] sm:$0xff] -inf
    %195 = vst [vmem:[#allocation2 + $0x440] sm:$0xff] -inf
    %196 = vst [vmem:[#allocation2 + $0x448] sm:$0xff] -inf
    %197 = vst [vmem:[#allocation2 + $0x450] sm:$0xff] -inf
    %198 = vst [vmem:[#allocation2 + $0x458] sm:$0xff] -inf
    %199 = vst [vmem:[#allocation2 + $0x460] sm:$0xff] -inf
    %200 = vst [vmem:[#allocation2 + $0x468] sm:$0xff] -inf
    %201 = vst [vmem:[#allocation2 + $0x470] sm:$0xff] -inf
    %202 = vst [vmem:[#allocation2 + $0x478] sm:$0xff] -inf
    %203 = vst [vmem:[#allocation2 + $0x480] sm:$0xff] -inf
    %204 = vst [vmem:[#allocation2 + $0x488] sm:$0xff] -inf
    %205 = vst [vmem:[#allocation2 + $0x490] sm:$0xff] -inf
    %206 = vst [vmem:[#allocation2 + $0x498] sm:$0xff] -inf
    %207 = vst [vmem:[#allocation2 + $0x4a0] sm:$0xff] -inf
    %208 = vst [vmem:[#allocation2 + $0x4a8] sm:$0xff] -inf
    %209 = vst [vmem:[#allocation2 + $0x4b0] sm:$0xff] -inf
    %210 = vst [vmem:[#allocation2 + $0x4b8] sm:$0xff] -inf
    %211 = vst [vmem:[#allocation2 + $0x4c0] sm:$0xff] -inf
    %212 = vst [vmem:[#allocation2 + $0x4c8] sm:$0xff] -inf
    %213 = vst [vmem:[#allocation2 + $0x4d0] sm:$0xff] -inf
    %214 = vst [vmem:[#allocation2 + $0x4d8] sm:$0xff] -inf
    %215 = vst [vmem:[#allocation2 + $0x4e0] sm:$0xff] -inf
    %216 = vst [vmem:[#allocation2 + $0x4e8] sm:$0xff] -inf
    %217 = vst [vmem:[#allocation2 + $0x4f0] sm:$0xff] -inf
    %218 = vst [vmem:[#allocation2 + $0x4f8] sm:$0xff] -inf
    %219 = vst [vmem:[#allocation2 + $0x500] sm:$0xff] -inf
    %220 = vst [vmem:[#allocation2 + $0x508] sm:$0xff] -inf
    %221 = vst [vmem:[#allocation2 + $0x510] sm:$0xff] -inf
    %222 = vst [vmem:[#allocation2 + $0x518] sm:$0xff] -inf
    %223 = vst [vmem:[#allocation2 + $0x520] sm:$0xff] -inf
    %224 = vst [vmem:[#allocation2 + $0x528] sm:$0xff] -inf
    %225 = vst [vmem:[#allocation2 + $0x530] sm:$0xff] -inf
    %226 = vst [vmem:[#allocation2 + $0x538] sm:$0xff] -inf
    %227 = vst [vmem:[#allocation2 + $0x540] sm:$0xff] -inf
    %228 = vst [vmem:[#allocation2 + $0x548] sm:$0xff] -inf
    %229 = vst [vmem:[#allocation2 + $0x550] sm:$0xff] -inf
    %230 = vst [vmem:[#allocation2 + $0x558] sm:$0xff] -inf
    %231 = vst [vmem:[#allocation2 + $0x560] sm:$0xff] -inf
    %232 = vst [vmem:[#allocation2 + $0x568] sm:$0xff] -inf
    %233 = vst [vmem:[#allocation2 + $0x570] sm:$0xff] -inf
    %234 = vst [vmem:[#allocation2 + $0x578] sm:$0xff] -inf
    %235 = vst [vmem:[#allocation2 + $0x580] sm:$0xff] -inf
    %236 = vst [vmem:[#allocation2 + $0x588] sm:$0xff] -inf
    %237 = vst [vmem:[#allocation2 + $0x590] sm:$0xff] -inf
    %238 = vst [vmem:[#allocation2 + $0x598] sm:$0xff] -inf
    %239 = vst [vmem:[#allocation2 + $0x5a0] sm:$0xff] -inf
    %240 = vst [vmem:[#allocation2 + $0x5a8] sm:$0xff] -inf
    %241 = vst [vmem:[#allocation2 + $0x5b0] sm:$0xff] -inf
    %242 = vst [vmem:[#allocation2 + $0x5b8] sm:$0xff] -inf
    %243 = vst [vmem:[#allocation2 + $0x5c0] sm:$0xff] -inf
    %244 = vst [vmem:[#allocation2 + $0x5c8] sm:$0xff] -inf
    %245 = vst [vmem:[#allocation2 + $0x5d0] sm:$0xff] -inf
    %246 = vst [vmem:[#allocation2 + $0x5d8] sm:$0xff] -inf
    %247 = vst [vmem:[#allocation2 + $0x5e0] sm:$0xff] -inf
    %248 = vst [vmem:[#allocation2 + $0x5e8] sm:$0xff] -inf
    %249 = vst [vmem:[#allocation2 + $0x5f0] sm:$0xff] -inf
    %250 = vst [vmem:[#allocation2 + $0x5f8] sm:$0xff] -inf
    loop: start=0, step=1, limit=16
    $region26: #{tpu_custom_call.1} parent=1 // loop_pre_header
      _
    $region27: #{tpu_custom_call.1} parent=1 // loop_header
      %s252 = sphi 0, %s256
      %p253 = scmp.ge.s32.totalorder %s252, 16
    $region28: #{tpu_custom_call.1} parent=1 // loop_header_branch
      %255 = sbr.rel (%p253) target = $region32
    $region29: #{tpu_custom_call.1} parent=1 // loop_body
      %s257 = smul.u32 0, 2
      %s258 = sshra.s32 %s252, 7
      %s259 = sand.u32 %s252, 127
      %s260 = sadd.s32 %s258, %s257
      %s261 = smul.u32 %s260, 128
      %s262 = sshra.s32 %s252, 7
      %s263 = sand.u32 %s252, 127
      %s264 = sadd.s32 %s261, %s263
      %s265 = sld [smem:[#allocation4 + %s264]]
      %p266 = scmp.gt.s32.totalorder %s265, 0
      %p267 = scmp.le.s32.totalorder %s265, 100
      %p268 = pnand %p266, %p267
      %p269 = pneg %p268
      // Predicated region
      $region33: #{tpu_custom_call.1} parent=29 // pred_check
        _
      $region34: #{tpu_custom_call.1} parent=29 // pred_check_branch
        %271 = sbr.rel (%p268) target = $region36
      $region35: #{tpu_custom_call.1} parent=29 // pred_region
        %s272 = sshra.s32 %s252, 3
        %s273 = sand.u32 %s252, 7
        %s274 = sshra.s32 %s252, 3
        %s275 = sand.u32 %s252, 7
        %s276 = smul.u32 %s272, 6
        %s277 = smul.u32 %s276, 8
        %s278 = sadd.s32 %s277, %s275
        %s279 = scalar_lea.vmem [#allocation5], %s278
        %v280 = vld [vmem:[%s279] ss:$8 sm:$0xf]
        %v281 = vld [vmem:[%s279] ss:$8 sm:$0x30]
        %v282 = vor.u32 %v280, %v281
        %s283 = ssub.s32 %s265, 1
        %s284 = sshra.s32 %s283, 3
        %s285 = sand.u32 %s283, 7
        %s286 = sshra.s32 %s283, 3
        %s287 = sand.u32 %s283, 7
        %s288 = smul.u32 %s284, 6
        %s289 = smul.u32 %s288, 8
        %s290 = sadd.s32 %s289, %s287
        %s291 = scalar_lea.vmem [#allocation2], %s290
        %v292 = vld [vmem:[%s291] ss:$8 sm:$0xf]
        %v293 = vld [vmem:[%s291] ss:$8 sm:$0x30]
        %v294 = vor.u32 %v292, %v293
        %v295 = vmax.f32 %v294, %v282
        %v296 = vlaneseq
        %vm297 = vcmp.ge.s32.totalorder %v296, 0
        %vm298 = vcmp.lt.s32.totalorder %v296, 768
        %vm299 = vmand %vm297, %vm298
        %300 = vst.msk [vmem:[%s291] ss:$8 sm:$0xf] %vm299, %v295
        %301 = vst.msk [vmem:[%s291] ss:$8 sm:$0x30] %vm299, %v295
      $region36: #{tpu_custom_call.1} parent=29 // pred_fallthru
        _
    $region30: #{tpu_custom_call.1} parent=1 // loop_footer
      %s256 = sadd.s32 1, %s252
    $region31: #{tpu_custom_call.1} parent=1 // loop_footer_branch
      %251 = sbr.rel target = $region27
    $region32: #{tpu_custom_call.1} parent=1 // loop_exit
      _
    loop: start=0, step=1, limit=16
    $region37: #{tpu_custom_call.1} parent=1 // loop_pre_header
      _
    $region38: #{tpu_custom_call.1} parent=1 // loop_header
      %s303 = sphi 0, %s307
      %p304 = scmp.ge.s32.totalorder %s303, 16
    $region39: #{tpu_custom_call.1} parent=1 // loop_header_branch
      %306 = sbr.rel (%p304) target = $region43
    $region40: #{tpu_custom_call.1} parent=1 // loop_body
      %s308 = smul.u32 0, 2
      %s309 = sadd.s32 %s308, 1
      %s310 = sshra.s32 %s303, 7
      %s311 = sand.u32 %s303, 127
      %s312 = sadd.s32 %s310, %s309
      %s313 = smul.u32 %s312, 128
      %s314 = sshra.s32 %s303, 7
      %s315 = sand.u32 %s303, 127
      %s316 = sadd.s32 %s313, %s315
      %s317 = sld [smem:[#allocation4 + %s316]]
      %p318 = scmp.gt.s32.totalorder %s317, 0
      %p319 = scmp.le.s32.totalorder %s317, 100
      %p320 = pnand %p318, %p319
      %p321 = pneg %p320
      // Predicated region
      $region44: #{tpu_custom_call.1} parent=40 // pred_check
        _
      $region45: #{tpu_custom_call.1} parent=40 // pred_check_branch
        %323 = sbr.rel (%p320) target = $region47
      $region46: #{tpu_custom_call.1} parent=40 // pred_region
        %s324 = sshra.s32 %s303, 3
        %s325 = sand.u32 %s303, 7
        %s326 = sshra.s32 %s303, 3
        %s327 = sand.u32 %s303, 7
        %s328 = smul.u32 %s324, 6
        %s329 = smul.u32 %s328, 8
        %s330 = sadd.s32 %s329, %s327
        %s331 = sadd.s32 96, %s330
        %s332 = scalar_lea.vmem [#allocation5], %s331
        %v333 = vld [vmem:[%s332] ss:$8 sm:$0xf]
        %v334 = vld [vmem:[%s332] ss:$8 sm:$0x30]
        %v335 = vor.u32 %v333, %v334
        %s336 = sadd.s32 %s317, 127
        %s337 = sshra.s32 %s336, 3
        %s338 = sand.u32 %s336, 7
        %s339 = sshra.s32 %s336, 3
        %s340 = sand.u32 %s336, 7
        %s341 = smul.u32 %s337, 6
        %s342 = smul.u32 %s341, 8
        %s343 = sadd.s32 %s342, %s340
        %s344 = scalar_lea.vmem [#allocation2], %s343
        %v345 = vld [vmem:[%s344] ss:$8 sm:$0xf]
        %v346 = vld [vmem:[%s344] ss:$8 sm:$0x30]
        %v347 = vor.u32 %v345, %v346
        %v348 = vmax.f32 %v347, %v335
        %v349 = vlaneseq
        %vm350 = vcmp.ge.s32.totalorder %v349, 0
        %vm351 = vcmp.lt.s32.totalorder %v349, 768
        %vm352 = vmand %vm350, %vm351
        %353 = vst.msk [vmem:[%s344] ss:$8 sm:$0xf] %vm352, %v348
        %354 = vst.msk [vmem:[%s344] ss:$8 sm:$0x30] %vm352, %v348
      $region47: #{tpu_custom_call.1} parent=40 // pred_fallthru
        _
    $region41: #{tpu_custom_call.1} parent=1 // loop_footer
      %s307 = sadd.s32 1, %s303
    $region42: #{tpu_custom_call.1} parent=1 // loop_footer_branch
      %302 = sbr.rel target = $region38
    $region43: #{tpu_custom_call.1} parent=1 // loop_exit
      _
    %v355 = vld [vmem:[#allocation2] sm:$0xff]
    %v356 = vld [vmem:[#allocation2 + $0x8] sm:$0xff]
    %v357 = vld [vmem:[#allocation2 + $0x10] sm:$0xff]
    %v358 = vld [vmem:[#allocation2 + $0x18] sm:$0xff]
    %v359 = vld [vmem:[#allocation2 + $0x20] sm:$0xff]
    %v360 = vld [vmem:[#allocation2 + $0x28] sm:$0xff]
    %v361 = vld [vmem:[#allocation2 + $0x30] sm:$0xff]
    %v362 = vld [vmem:[#allocation2 + $0x38] sm:$0xff]
    %v363 = vld [vmem:[#allocation2 + $0x40] sm:$0xff]
    %v364 = vld [vmem:[#allocation2 + $0x48] sm:$0xff]
    %v365 = vld [vmem:[#allocation2 + $0x50] sm:$0xff]
    %v366 = vld [vmem:[#allocation2 + $0x58] sm:$0xff]
    %v367 = vld [vmem:[#allocation2 + $0x60] sm:$0xff]
    %v368 = vld [vmem:[#allocation2 + $0x68] sm:$0xff]
    %v369 = vld [vmem:[#allocation2 + $0x70] sm:$0xff]
    %v370 = vld [vmem:[#allocation2 + $0x78] sm:$0xff]
    %v371 = vld [vmem:[#allocation2 + $0x80] sm:$0xff]
    %v372 = vld [vmem:[#allocation2 + $0x88] sm:$0xff]
    %v373 = vld [vmem:[#allocation2 + $0x90] sm:$0xff]
    %v374 = vld [vmem:[#allocation2 + $0x98] sm:$0xff]
    %v375 = vld [vmem:[#allocation2 + $0xa0] sm:$0xff]
    %v376 = vld [vmem:[#allocation2 + $0xa8] sm:$0xff]
    %v377 = vld [vmem:[#allocation2 + $0xb0] sm:$0xff]
    %v378 = vld [vmem:[#allocation2 + $0xb8] sm:$0xff]
    %v379 = vld [vmem:[#allocation2 + $0xc0] sm:$0xff]
    %v380 = vld [vmem:[#allocation2 + $0xc8] sm:$0xff]
    %v381 = vld [vmem:[#allocation2 + $0xd0] sm:$0xff]
    %v382 = vld [vmem:[#allocation2 + $0xd8] sm:$0xff]
    %v383 = vld [vmem:[#allocation2 + $0xe0] sm:$0xff]
    %v384 = vld [vmem:[#allocation2 + $0xe8] sm:$0xff]
    %v385 = vld [vmem:[#allocation2 + $0xf0] sm:$0xff]
    %v386 = vld [vmem:[#allocation2 + $0xf8] sm:$0xff]
    %v387 = vld [vmem:[#allocation2 + $0x100] sm:$0xff]
    %v388 = vld [vmem:[#allocation2 + $0x108] sm:$0xff]
    %v389 = vld [vmem:[#allocation2 + $0x110] sm:$0xff]
    %v390 = vld [vmem:[#allocation2 + $0x118] sm:$0xff]
    %v391 = vld [vmem:[#allocation2 + $0x120] sm:$0xff]
    %v392 = vld [vmem:[#allocation2 + $0x128] sm:$0xff]
    %v393 = vld [vmem:[#allocation2 + $0x130] sm:$0xff]
    %v394 = vld [vmem:[#allocation2 + $0x138] sm:$0xff]
    %v395 = vld [vmem:[#allocation2 + $0x140] sm:$0xff]
    %v396 = vld [vmem:[#allocation2 + $0x148] sm:$0xff]
    %v397 = vld [vmem:[#allocation2 + $0x150] sm:$0xff]
    %v398 = vld [vmem:[#allocation2 + $0x158] sm:$0xff]
    %v399 = vld [vmem:[#allocation2 + $0x160] sm:$0xff]
    %v400 = vld [vmem:[#allocation2 + $0x168] sm:$0xff]
    %v401 = vld [vmem:[#allocation2 + $0x170] sm:$0xff]
    %v402 = vld [vmem:[#allocation2 + $0x178] sm:$0xff]
    %v403 = vld [vmem:[#allocation2 + $0x180] sm:$0xff]
    %v404 = vld [vmem:[#allocation2 + $0x188] sm:$0xff]
    %v405 = vld [vmem:[#allocation2 + $0x190] sm:$0xff]
    %v406 = vld [vmem:[#allocation2 + $0x198] sm:$0xff]
    %v407 = vld [vmem:[#allocation2 + $0x1a0] sm:$0xff]
    %v408 = vld [vmem:[#allocation2 + $0x1a8] sm:$0xff]
    %v409 = vld [vmem:[#allocation2 + $0x1b0] sm:$0xff]
    %v410 = vld [vmem:[#allocation2 + $0x1b8] sm:$0xff]
    %v411 = vld [vmem:[#allocation2 + $0x1c0] sm:$0xff]
    %v412 = vld [vmem:[#allocation2 + $0x1c8] sm:$0xff]
    %v413 = vld [vmem:[#allocation2 + $0x1d0] sm:$0xff]
    %v414 = vld [vmem:[#allocation2 + $0x1d8] sm:$0xff]
    %v415 = vld [vmem:[#allocation2 + $0x1e0] sm:$0xff]
    %v416 = vld [vmem:[#allocation2 + $0x1e8] sm:$0xff]
    %v417 = vld [vmem:[#allocation2 + $0x1f0] sm:$0xff]
    %v418 = vld [vmem:[#allocation2 + $0x1f8] sm:$0xff]
    %v419 = vld [vmem:[#allocation2 + $0x200] sm:$0xff]
    %v420 = vld [vmem:[#allocation2 + $0x208] sm:$0xff]
    %v421 = vld [vmem:[#allocation2 + $0x210] sm:$0xff]
    %v422 = vld [vmem:[#allocation2 + $0x218] sm:$0xff]
    %v423 = vld [vmem:[#allocation2 + $0x220] sm:$0xff]
    %v424 = vld [vmem:[#allocation2 + $0x228] sm:$0xff]
    %v425 = vld [vmem:[#allocation2 + $0x230] sm:$0xff]
    %v426 = vld [vmem:[#allocation2 + $0x238] sm:$0xff]
    %v427 = vld [vmem:[#allocation2 + $0x240] sm:$0xff]
    %v428 = vld [vmem:[#allocation2 + $0x248] sm:$0xff]
    %v429 = vld [vmem:[#allocation2 + $0x250] sm:$0xff]
    %v430 = vld [vmem:[#allocation2 + $0x258] sm:$0xff]
    %v431 = vld [vmem:[#allocation2 + $0x260] sm:$0xff]
    %v432 = vld [vmem:[#allocation2 + $0x268] sm:$0xff]
    %v433 = vld [vmem:[#allocation2 + $0x270] sm:$0xff]
    %v434 = vld [vmem:[#allocation2 + $0x278] sm:$0xff]
    %v435 = vld [vmem:[#allocation2 + $0x280] sm:$0xff]
    %v436 = vld [vmem:[#allocation2 + $0x288] sm:$0xff]
    %v437 = vld [vmem:[#allocation2 + $0x290] sm:$0xff]
    %v438 = vld [vmem:[#allocation2 + $0x298] sm:$0xff]
    %v439 = vld [vmem:[#allocation2 + $0x2a0] sm:$0xff]
    %v440 = vld [vmem:[#allocation2 + $0x2a8] sm:$0xff]
    %v441 = vld [vmem:[#allocation2 + $0x2b0] sm:$0xff]
    %v442 = vld [vmem:[#allocation2 + $0x2b8] sm:$0xff]
    %v443 = vld [vmem:[#allocation2 + $0x2c0] sm:$0xff]
    %v444 = vld [vmem:[#allocation2 + $0x2c8] sm:$0xff]
    %v445 = vld [vmem:[#allocation2 + $0x2d0] sm:$0xff]
    %v446 = vld [vmem:[#allocation2 + $0x2d8] sm:$0xff]
    %v447 = vld [vmem:[#allocation2 + $0x2e0] sm:$0xff]
    %v448 = vld [vmem:[#allocation2 + $0x2e8] sm:$0xff]
    %v449 = vld [vmem:[#allocation2 + $0x2f0] sm:$0xff]
    %v450 = vld [vmem:[#allocation2 + $0x2f8] sm:$0xff]
    %v451 = vld [vmem:[#allocation2 + $0x300] sm:$0xff]
    %v452 = vld [vmem:[#allocation2 + $0x308] sm:$0xff]
    %v453 = vld [vmem:[#allocation2 + $0x310] sm:$0xff]
    %v454 = vld [vmem:[#allocation2 + $0x318] sm:$0xff]
    %v455 = vld [vmem:[#allocation2 + $0x320] sm:$0xff]
    %v456 = vld [vmem:[#allocation2 + $0x328] sm:$0xff]
    %v457 = vld [vmem:[#allocation2 + $0x330] sm:$0xff]
    %v458 = vld [vmem:[#allocation2 + $0x338] sm:$0xff]
    %v459 = vld [vmem:[#allocation2 + $0x340] sm:$0xff]
    %v460 = vld [vmem:[#allocation2 + $0x348] sm:$0xff]
    %v461 = vld [vmem:[#allocation2 + $0x350] sm:$0xff]
    %v462 = vld [vmem:[#allocation2 + $0x358] sm:$0xff]
    %v463 = vld [vmem:[#allocation2 + $0x360] sm:$0xff]
    %v464 = vld [vmem:[#allocation2 + $0x368] sm:$0xff]
    %v465 = vld [vmem:[#allocation2 + $0x370] sm:$0xff]
    %v466 = vld [vmem:[#allocation2 + $0x378] sm:$0xff]
    %v467 = vld [vmem:[#allocation2 + $0x380] sm:$0xff]
    %v468 = vld [vmem:[#allocation2 + $0x388] sm:$0xff]
    %v469 = vld [vmem:[#allocation2 + $0x390] sm:$0xff]
    %v470 = vld [vmem:[#allocation2 + $0x398] sm:$0xff]
    %v471 = vld [vmem:[#allocation2 + $0x3a0] sm:$0xff]
    %v472 = vld [vmem:[#allocation2 + $0x3a8] sm:$0xff]
    %v473 = vld [vmem:[#allocation2 + $0x3b0] sm:$0xff]
    %v474 = vld [vmem:[#allocation2 + $0x3b8] sm:$0xff]
    %v475 = vld [vmem:[#allocation2 + $0x3c0] sm:$0xff]
    %v476 = vld [vmem:[#allocation2 + $0x3c8] sm:$0xff]
    %v477 = vld [vmem:[#allocation2 + $0x3d0] sm:$0xff]
    %v478 = vld [vmem:[#allocation2 + $0x3d8] sm:$0xff]
    %v479 = vld [vmem:[#allocation2 + $0x3e0] sm:$0xff]
    %v480 = vld [vmem:[#allocation2 + $0x3e8] sm:$0xff]
    %v481 = vld [vmem:[#allocation2 + $0x3f0] sm:$0xff]
    %v482 = vld [vmem:[#allocation2 + $0x3f8] sm:$0xff]
    %v483 = vld [vmem:[#allocation2 + $0x400] sm:$0xff]
    %v484 = vld [vmem:[#allocation2 + $0x408] sm:$0xff]
    %v485 = vld [vmem:[#allocation2 + $0x410] sm:$0xff]
    %v486 = vld [vmem:[#allocation2 + $0x418] sm:$0xff]
    %v487 = vld [vmem:[#allocation2 + $0x420] sm:$0xff]
    %v488 = vld [vmem:[#allocation2 + $0x428] sm:$0xff]
    %v489 = vld [vmem:[#allocation2 + $0x430] sm:$0xff]
    %v490 = vld [vmem:[#allocation2 + $0x438] sm:$0xff]
    %v491 = vld [vmem:[#allocation2 + $0x440] sm:$0xff]
    %v492 = vld [vmem:[#allocation2 + $0x448] sm:$0xff]
    %v493 = vld [vmem:[#allocation2 + $0x450] sm:$0xff]
    %v494 = vld [vmem:[#allocation2 + $0x458] sm:$0xff]
    %v495 = vld [vmem:[#allocation2 + $0x460] sm:$0xff]
    %v496 = vld [vmem:[#allocation2 + $0x468] sm:$0xff]
    %v497 = vld [vmem:[#allocation2 + $0x470] sm:$0xff]
    %v498 = vld [vmem:[#allocation2 + $0x478] sm:$0xff]
    %v499 = vld [vmem:[#allocation2 + $0x480] sm:$0xff]
    %v500 = vld [vmem:[#allocation2 + $0x488] sm:$0xff]
    %v501 = vld [vmem:[#allocation2 + $0x490] sm:$0xff]
    %v502 = vld [vmem:[#allocation2 + $0x498] sm:$0xff]
    %v503 = vld [vmem:[#allocation2 + $0x4a0] sm:$0xff]
    %v504 = vld [vmem:[#allocation2 + $0x4a8] sm:$0xff]
    %v505 = vld [vmem:[#allocation2 + $0x4b0] sm:$0xff]
    %v506 = vld [vmem:[#allocation2 + $0x4b8] sm:$0xff]
    %v507 = vld [vmem:[#allocation2 + $0x4c0] sm:$0xff]
    %v508 = vld [vmem:[#allocation2 + $0x4c8] sm:$0xff]
    %v509 = vld [vmem:[#allocation2 + $0x4d0] sm:$0xff]
    %v510 = vld [vmem:[#allocation2 + $0x4d8] sm:$0xff]
    %v511 = vld [vmem:[#allocation2 + $0x4e0] sm:$0xff]
    %v512 = vld [vmem:[#allocation2 + $0x4e8] sm:$0xff]
    %v513 = vld [vmem:[#allocation2 + $0x4f0] sm:$0xff]
    %v514 = vld [vmem:[#allocation2 + $0x4f8] sm:$0xff]
    %v515 = vld [vmem:[#allocation2 + $0x500] sm:$0xff]
    %v516 = vld [vmem:[#allocation2 + $0x508] sm:$0xff]
    %v517 = vld [vmem:[#allocation2 + $0x510] sm:$0xff]
    %v518 = vld [vmem:[#allocation2 + $0x518] sm:$0xff]
    %v519 = vld [vmem:[#allocation2 + $0x520] sm:$0xff]
    %v520 = vld [vmem:[#allocation2 + $0x528] sm:$0xff]
    %v521 = vld [vmem:[#allocation2 + $0x530] sm:$0xff]
    %v522 = vld [vmem:[#allocation2 + $0x538] sm:$0xff]
    %v523 = vld [vmem:[#allocation2 + $0x540] sm:$0xff]
    %v524 = vld [vmem:[#allocation2 + $0x548] sm:$0xff]
    %v525 = vld [vmem:[#allocation2 + $0x550] sm:$0xff]
    %v526 = vld [vmem:[#allocation2 + $0x558] sm:$0xff]
    %v527 = vld [vmem:[#allocation2 + $0x560] sm:$0xff]
    %v528 = vld [vmem:[#allocation2 + $0x568] sm:$0xff]
    %v529 = vld [vmem:[#allocation2 + $0x570] sm:$0xff]
    %v530 = vld [vmem:[#allocation2 + $0x578] sm:$0xff]
    %v531 = vld [vmem:[#allocation2 + $0x580] sm:$0xff]
    %v532 = vld [vmem:[#allocation2 + $0x588] sm:$0xff]
    %v533 = vld [vmem:[#allocation2 + $0x590] sm:$0xff]
    %v534 = vld [vmem:[#allocation2 + $0x598] sm:$0xff]
    %v535 = vld [vmem:[#allocation2 + $0x5a0] sm:$0xff]
    %v536 = vld [vmem:[#allocation2 + $0x5a8] sm:$0xff]
    %v537 = vld [vmem:[#allocation2 + $0x5b0] sm:$0xff]
    %v538 = vld [vmem:[#allocation2 + $0x5b8] sm:$0xff]
    %v539 = vld [vmem:[#allocation2 + $0x5c0] sm:$0xff]
    %v540 = vld [vmem:[#allocation2 + $0x5c8] sm:$0xff]
    %v541 = vld [vmem:[#allocation2 + $0x5d0] sm:$0xff]
    %v542 = vld [vmem:[#allocation2 + $0x5d8] sm:$0xff]
    %v543 = vld [vmem:[#allocation2 + $0x5e0] sm:$0xff]
    %v544 = vld [vmem:[#allocation2 + $0x5e8] sm:$0xff]
    %v545 = vld [vmem:[#allocation2 + $0x5f0] sm:$0xff]
    %v546 = vld [vmem:[#allocation2 + $0x5f8] sm:$0xff]
    %vm547 = vcmp.eq.f32.partialorder %v355, -inf
    %vm548 = vcmp.eq.f32.partialorder %v356, -inf
    %vm549 = vcmp.eq.f32.partialorder %v357, -inf
    %vm550 = vcmp.eq.f32.partialorder %v358, -inf
    %vm551 = vcmp.eq.f32.partialorder %v359, -inf
    %vm552 = vcmp.eq.f32.partialorder %v360, -inf
    %vm553 = vcmp.eq.f32.partialorder %v361, -inf
    %vm554 = vcmp.eq.f32.partialorder %v362, -inf
    %vm555 = vcmp.eq.f32.partialorder %v363, -inf
    %vm556 = vcmp.eq.f32.partialorder %v364, -inf
    %vm557 = vcmp.eq.f32.partialorder %v365, -inf
    %vm558 = vcmp.eq.f32.partialorder %v366, -inf
    %vm559 = vcmp.eq.f32.partialorder %v367, -inf
    %vm560 = vcmp.eq.f32.partialorder %v368, -inf
    %vm561 = vcmp.eq.f32.partialorder %v369, -inf
    %vm562 = vcmp.eq.f32.partialorder %v370, -inf
    %vm563 = vcmp.eq.f32.partialorder %v371, -inf
    %vm564 = vcmp.eq.f32.partialorder %v372, -inf
    %vm565 = vcmp.eq.f32.partialorder %v373, -inf
    %vm566 = vcmp.eq.f32.partialorder %v374, -inf
    %vm567 = vcmp.eq.f32.partialorder %v375, -inf
    %vm568 = vcmp.eq.f32.partialorder %v376, -inf
    %vm569 = vcmp.eq.f32.partialorder %v377, -inf
    %vm570 = vcmp.eq.f32.partialorder %v378, -inf
    %vm571 = vcmp.eq.f32.partialorder %v379, -inf
    %vm572 = vcmp.eq.f32.partialorder %v380, -inf
    %vm573 = vcmp.eq.f32.partialorder %v381, -inf
    %vm574 = vcmp.eq.f32.partialorder %v382, -inf
    %vm575 = vcmp.eq.f32.partialorder %v383, -inf
    %vm576 = vcmp.eq.f32.partialorder %v384, -inf
    %vm577 = vcmp.eq.f32.partialorder %v385, -inf
    %vm578 = vcmp.eq.f32.partialorder %v386, -inf
    %vm579 = vcmp.eq.f32.partialorder %v387, -inf
    %vm580 = vcmp.eq.f32.partialorder %v388, -inf
    %vm581 = vcmp.eq.f32.partialorder %v389, -inf
    %vm582 = vcmp.eq.f32.partialorder %v390, -inf
    %vm583 = vcmp.eq.f32.partialorder %v391, -inf
    %vm584 = vcmp.eq.f32.partialorder %v392, -inf
    %vm585 = vcmp.eq.f32.partialorder %v393, -inf
    %vm586 = vcmp.eq.f32.partialorder %v394, -inf
    %vm587 = vcmp.eq.f32.partialorder %v395, -inf
    %vm588 = vcmp.eq.f32.partialorder %v396, -inf
    %vm589 = vcmp.eq.f32.partialorder %v397, -inf
    %vm590 = vcmp.eq.f32.partialorder %v398, -inf
    %vm591 = vcmp.eq.f32.partialorder %v399, -inf
    %vm592 = vcmp.eq.f32.partialorder %v400, -inf
    %vm593 = vcmp.eq.f32.partialorder %v401, -inf
    %vm594 = vcmp.eq.f32.partialorder %v402, -inf
    %vm595 = vcmp.eq.f32.partialorder %v403, -inf
    %vm596 = vcmp.eq.f32.partialorder %v404, -inf
    %vm597 = vcmp.eq.f32.partialorder %v405, -inf
    %vm598 = vcmp.eq.f32.partialorder %v406, -inf
    %vm599 = vcmp.eq.f32.partialorder %v407, -inf
    %vm600 = vcmp.eq.f32.partialorder %v408, -inf
    %vm601 = vcmp.eq.f32.partialorder %v409, -inf
    %vm602 = vcmp.eq.f32.partialorder %v410, -inf
    %vm603 = vcmp.eq.f32.partialorder %v411, -inf
    %vm604 = vcmp.eq.f32.partialorder %v412, -inf
    %vm605 = vcmp.eq.f32.partialorder %v413, -inf
    %vm606 = vcmp.eq.f32.partialorder %v414, -inf
    %vm607 = vcmp.eq.f32.partialorder %v415, -inf
    %vm608 = vcmp.eq.f32.partialorder %v416, -inf
    %vm609 = vcmp.eq.f32.partialorder %v417, -inf
    %vm610 = vcmp.eq.f32.partialorder %v418, -inf
    %vm611 = vcmp.eq.f32.partialorder %v419, -inf
    %vm612 = vcmp.eq.f32.partialorder %v420, -inf
    %vm613 = vcmp.eq.f32.partialorder %v421, -inf
    %vm614 = vcmp.eq.f32.partialorder %v422, -inf
    %vm615 = vcmp.eq.f32.partialorder %v423, -inf
    %vm616 = vcmp.eq.f32.partialorder %v424, -inf
    %vm617 = vcmp.eq.f32.partialorder %v425, -inf
    %vm618 = vcmp.eq.f32.partialorder %v426, -inf
    %vm619 = vcmp.eq.f32.partialorder %v427, -inf
    %vm620 = vcmp.eq.f32.partialorder %v428, -inf
    %vm621 = vcmp.eq.f32.partialorder %v429, -inf
    %vm622 = vcmp.eq.f32.partialorder %v430, -inf
    %vm623 = vcmp.eq.f32.partialorder %v431, -inf
    %vm624 = vcmp.eq.f32.partialorder %v432, -inf
    %vm625 = vcmp.eq.f32.partialorder %v433, -inf
    %vm626 = vcmp.eq.f32.partialorder %v434, -inf
    %vm627 = vcmp.eq.f32.partialorder %v435, -inf
    %vm628 = vcmp.eq.f32.partialorder %v436, -inf
    %vm629 = vcmp.eq.f32.partialorder %v437, -inf
    %vm630 = vcmp.eq.f32.partialorder %v438, -inf
    %vm631 = vcmp.eq.f32.partialorder %v439, -inf
    %vm632 = vcmp.eq.f32.partialorder %v440, -inf
    %vm633 = vcmp.eq.f32.partialorder %v441, -inf
    %vm634 = vcmp.eq.f32.partialorder %v442, -inf
    %vm635 = vcmp.eq.f32.partialorder %v443, -inf
    %vm636 = vcmp.eq.f32.partialorder %v444, -inf
    %vm637 = vcmp.eq.f32.partialorder %v445, -inf
    %vm638 = vcmp.eq.f32.partialorder %v446, -inf
    %vm639 = vcmp.eq.f32.partialorder %v447, -inf
    %vm640 = vcmp.eq.f32.partialorder %v448, -inf
    %vm641 = vcmp.eq.f32.partialorder %v449, -inf
    %vm642 = vcmp.eq.f32.partialorder %v450, -inf
    %vm643 = vcmp.eq.f32.partialorder %v451, -inf
    %vm644 = vcmp.eq.f32.partialorder %v452, -inf
    %vm645 = vcmp.eq.f32.partialorder %v453, -inf
    %vm646 = vcmp.eq.f32.partialorder %v454, -inf
    %vm647 = vcmp.eq.f32.partialorder %v455, -inf
    %vm648 = vcmp.eq.f32.partialorder %v456, -inf
    %vm649 = vcmp.eq.f32.partialorder %v457, -inf
    %vm650 = vcmp.eq.f32.partialorder %v458, -inf
    %vm651 = vcmp.eq.f32.partialorder %v459, -inf
    %vm652 = vcmp.eq.f32.partialorder %v460, -inf
    %vm653 = vcmp.eq.f32.partialorder %v461, -inf
    %vm654 = vcmp.eq.f32.partialorder %v462, -inf
    %vm655 = vcmp.eq.f32.partialorder %v463, -inf
    %vm656 = vcmp.eq.f32.partialorder %v464, -inf
    %vm657 = vcmp.eq.f32.partialorder %v465, -inf
    %vm658 = vcmp.eq.f32.partialorder %v466, -inf
    %vm659 = vcmp.eq.f32.partialorder %v467, -inf
    %vm660 = vcmp.eq.f32.partialorder %v468, -inf
    %vm661 = vcmp.eq.f32.partialorder %v469, -inf
    %vm662 = vcmp.eq.f32.partialorder %v470, -inf
    %vm663 = vcmp.eq.f32.partialorder %v471, -inf
    %vm664 = vcmp.eq.f32.partialorder %v472, -inf
    %vm665 = vcmp.eq.f32.partialorder %v473, -inf
    %vm666 = vcmp.eq.f32.partialorder %v474, -inf
    %vm667 = vcmp.eq.f32.partialorder %v475, -inf
    %vm668 = vcmp.eq.f32.partialorder %v476, -inf
    %vm669 = vcmp.eq.f32.partialorder %v477, -inf
    %vm670 = vcmp.eq.f32.partialorder %v478, -inf
    %vm671 = vcmp.eq.f32.partialorder %v479, -inf
    %vm672 = vcmp.eq.f32.partialorder %v480, -inf
    %vm673 = vcmp.eq.f32.partialorder %v481, -inf
    %vm674 = vcmp.eq.f32.partialorder %v482, -inf
    %vm675 = vcmp.eq.f32.partialorder %v483, -inf
    %vm676 = vcmp.eq.f32.partialorder %v484, -inf
    %vm677 = vcmp.eq.f32.partialorder %v485, -inf
    %vm678 = vcmp.eq.f32.partialorder %v486, -inf
    %vm679 = vcmp.eq.f32.partialorder %v487, -inf
    %vm680 = vcmp.eq.f32.partialorder %v488, -inf
    %vm681 = vcmp.eq.f32.partialorder %v489, -inf
    %vm682 = vcmp.eq.f32.partialorder %v490, -inf
    %vm683 = vcmp.eq.f32.partialorder %v491, -inf
    %vm684 = vcmp.eq.f32.partialorder %v492, -inf
    %vm685 = vcmp.eq.f32.partialorder %v493, -inf
    %vm686 = vcmp.eq.f32.partialorder %v494, -inf
    %vm687 = vcmp.eq.f32.partialorder %v495, -inf
    %vm688 = vcmp.eq.f32.partialorder %v496, -inf
    %vm689 = vcmp.eq.f32.partialorder %v497, -inf
    %vm690 = vcmp.eq.f32.partialorder %v498, -inf
    %vm691 = vcmp.eq.f32.partialorder %v499, -inf
    %vm692 = vcmp.eq.f32.partialorder %v500, -inf
    %vm693 = vcmp.eq.f32.partialorder %v501, -inf
    %vm694 = vcmp.eq.f32.partialorder %v502, -inf
    %vm695 = vcmp.eq.f32.partialorder %v503, -inf
    %vm696 = vcmp.eq.f32.partialorder %v504, -inf
    %vm697 = vcmp.eq.f32.partialorder %v505, -inf
    %vm698 = vcmp.eq.f32.partialorder %v506, -inf
    %vm699 = vcmp.eq.f32.partialorder %v507, -inf
    %vm700 = vcmp.eq.f32.partialorder %v508, -inf
    %vm701 = vcmp.eq.f32.partialorder %v509, -inf
    %vm702 = vcmp.eq.f32.partialorder %v510, -inf
    %vm703 = vcmp.eq.f32.partialorder %v511, -inf
    %vm704 = vcmp.eq.f32.partialorder %v512, -inf
    %vm705 = vcmp.eq.f32.partialorder %v513, -inf
    %vm706 = vcmp.eq.f32.partialorder %v514, -inf
    %vm707 = vcmp.eq.f32.partialorder %v515, -inf
    %vm708 = vcmp.eq.f32.partialorder %v516, -inf
    %vm709 = vcmp.eq.f32.partialorder %v517, -inf
    %vm710 = vcmp.eq.f32.partialorder %v518, -inf
    %vm711 = vcmp.eq.f32.partialorder %v519, -inf
    %vm712 = vcmp.eq.f32.partialorder %v520, -inf
    %vm713 = vcmp.eq.f32.partialorder %v521, -inf
    %vm714 = vcmp.eq.f32.partialorder %v522, -inf
    %vm715 = vcmp.eq.f32.partialorder %v523, -inf
    %vm716 = vcmp.eq.f32.partialorder %v524, -inf
    %vm717 = vcmp.eq.f32.partialorder %v525, -inf
    %vm718 = vcmp.eq.f32.partialorder %v526, -inf
    %vm719 = vcmp.eq.f32.partialorder %v527, -inf
    %vm720 = vcmp.eq.f32.partialorder %v528, -inf
    %vm721 = vcmp.eq.f32.partialorder %v529, -inf
    %vm722 = vcmp.eq.f32.partialorder %v530, -inf
    %vm723 = vcmp.eq.f32.partialorder %v531, -inf
    %vm724 = vcmp.eq.f32.partialorder %v532, -inf
    %vm725 = vcmp.eq.f32.partialorder %v533, -inf
    %vm726 = vcmp.eq.f32.partialorder %v534, -inf
    %vm727 = vcmp.eq.f32.partialorder %v535, -inf
    %vm728 = vcmp.eq.f32.partialorder %v536, -inf
    %vm729 = vcmp.eq.f32.partialorder %v537, -inf
    %vm730 = vcmp.eq.f32.partialorder %v538, -inf
    %vm731 = vcmp.eq.f32.partialorder %v539, -inf
    %vm732 = vcmp.eq.f32.partialorder %v540, -inf
    %vm733 = vcmp.eq.f32.partialorder %v541, -inf
    %vm734 = vcmp.eq.f32.partialorder %v542, -inf
    %vm735 = vcmp.eq.f32.partialorder %v543, -inf
    %vm736 = vcmp.eq.f32.partialorder %v544, -inf
    %vm737 = vcmp.eq.f32.partialorder %v545, -inf
    %vm738 = vcmp.eq.f32.partialorder %v546, -inf
    %v739 = vsel %vm547, 0.0, %v355
    %v740 = vsel %vm548, 0.0, %v356
    %v741 = vsel %vm549, 0.0, %v357
    %v742 = vsel %vm550, 0.0, %v358
    %v743 = vsel %vm551, 0.0, %v359
    %v744 = vsel %vm552, 0.0, %v360
    %v745 = vsel %vm553, 0.0, %v361
    %v746 = vsel %vm554, 0.0, %v362
    %v747 = vsel %vm555, 0.0, %v363
    %v748 = vsel %vm556, 0.0, %v364
    %v749 = vsel %vm557, 0.0, %v365
    %v750 = vsel %vm558, 0.0, %v366
    %v751 = vsel %vm559, 0.0, %v367
    %v752 = vsel %vm560, 0.0, %v368
    %v753 = vsel %vm561, 0.0, %v369
    %v754 = vsel %vm562, 0.0, %v370
    %v755 = vsel %vm563, 0.0, %v371
    %v756 = vsel %vm564, 0.0, %v372
    %v757 = vsel %vm565, 0.0, %v373
    %v758 = vsel %vm566, 0.0, %v374
    %v759 = vsel %vm567, 0.0, %v375
    %v760 = vsel %vm568, 0.0, %v376
    %v761 = vsel %vm569, 0.0, %v377
    %v762 = vsel %vm570, 0.0, %v378
    %v763 = vsel %vm571, 0.0, %v379
    %v764 = vsel %vm572, 0.0, %v380
    %v765 = vsel %vm573, 0.0, %v381
    %v766 = vsel %vm574, 0.0, %v382
    %v767 = vsel %vm575, 0.0, %v383
    %v768 = vsel %vm576, 0.0, %v384
    %v769 = vsel %vm577, 0.0, %v385
    %v770 = vsel %vm578, 0.0, %v386
    %v771 = vsel %vm579, 0.0, %v387
    %v772 = vsel %vm580, 0.0, %v388
    %v773 = vsel %vm581, 0.0, %v389
    %v774 = vsel %vm582, 0.0, %v390
    %v775 = vsel %vm583, 0.0, %v391
    %v776 = vsel %vm584, 0.0, %v392
    %v777 = vsel %vm585, 0.0, %v393
    %v778 = vsel %vm586, 0.0, %v394
    %v779 = vsel %vm587, 0.0, %v395
    %v780 = vsel %vm588, 0.0, %v396
    %v781 = vsel %vm589, 0.0, %v397
    %v782 = vsel %vm590, 0.0, %v398
    %v783 = vsel %vm591, 0.0, %v399
    %v784 = vsel %vm592, 0.0, %v400
    %v785 = vsel %vm593, 0.0, %v401
    %v786 = vsel %vm594, 0.0, %v402
    %v787 = vsel %vm595, 0.0, %v403
    %v788 = vsel %vm596, 0.0, %v404
    %v789 = vsel %vm597, 0.0, %v405
    %v790 = vsel %vm598, 0.0, %v406
    %v791 = vsel %vm599, 0.0, %v407
    %v792 = vsel %vm600, 0.0, %v408
    %v793 = vsel %vm601, 0.0, %v409
    %v794 = vsel %vm602, 0.0, %v410
    %v795 = vsel %vm603, 0.0, %v411
    %v796 = vsel %vm604, 0.0, %v412
    %v797 = vsel %vm605, 0.0, %v413
    %v798 = vsel %vm606, 0.0, %v414
    %v799 = vsel %vm607, 0.0, %v415
    %v800 = vsel %vm608, 0.0, %v416
    %v801 = vsel %vm609, 0.0, %v417
    %v802 = vsel %vm610, 0.0, %v418
    %v803 = vsel %vm611, 0.0, %v419
    %v804 = vsel %vm612, 0.0, %v420
    %v805 = vsel %vm613, 0.0, %v421
    %v806 = vsel %vm614, 0.0, %v422
    %v807 = vsel %vm615, 0.0, %v423
    %v808 = vsel %vm616, 0.0, %v424
    %v809 = vsel %vm617, 0.0, %v425
    %v810 = vsel %vm618, 0.0, %v426
    %v811 = vsel %vm619, 0.0, %v427
    %v812 = vsel %vm620, 0.0, %v428
    %v813 = vsel %vm621, 0.0, %v429
    %v814 = vsel %vm622, 0.0, %v430
    %v815 = vsel %vm623, 0.0, %v431
    %v816 = vsel %vm624, 0.0, %v432
    %v817 = vsel %vm625, 0.0, %v433
    %v818 = vsel %vm626, 0.0, %v434
    %v819 = vsel %vm627, 0.0, %v435
    %v820 = vsel %vm628, 0.0, %v436
    %v821 = vsel %vm629, 0.0, %v437
    %v822 = vsel %vm630, 0.0, %v438
    %v823 = vsel %vm631, 0.0, %v439
    %v824 = vsel %vm632, 0.0, %v440
    %v825 = vsel %vm633, 0.0, %v441
    %v826 = vsel %vm634, 0.0, %v442
    %v827 = vsel %vm635, 0.0, %v443
    %v828 = vsel %vm636, 0.0, %v444
    %v829 = vsel %vm637, 0.0, %v445
    %v830 = vsel %vm638, 0.0, %v446
    %v831 = vsel %vm639, 0.0, %v447
    %v832 = vsel %vm640, 0.0, %v448
    %v833 = vsel %vm641, 0.0, %v449
    %v834 = vsel %vm642, 0.0, %v450
    %v835 = vsel %vm643, 0.0, %v451
    %v836 = vsel %vm644, 0.0, %v452
    %v837 = vsel %vm645, 0.0, %v453
    %v838 = vsel %vm646, 0.0, %v454
    %v839 = vsel %vm647, 0.0, %v455
    %v840 = vsel %vm648, 0.0, %v456
    %v841 = vsel %vm649, 0.0, %v457
    %v842 = vsel %vm650, 0.0, %v458
    %v843 = vsel %vm651, 0.0, %v459
    %v844 = vsel %vm652, 0.0, %v460
    %v845 = vsel %vm653, 0.0, %v461
    %v846 = vsel %vm654, 0.0, %v462
    %v847 = vsel %vm655, 0.0, %v463
    %v848 = vsel %vm656, 0.0, %v464
    %v849 = vsel %vm657, 0.0, %v465
    %v850 = vsel %vm658, 0.0, %v466
    %v851 = vsel %vm659, 0.0, %v467
    %v852 = vsel %vm660, 0.0, %v468
    %v853 = vsel %vm661, 0.0, %v469
    %v854 = vsel %vm662, 0.0, %v470
    %v855 = vsel %vm663, 0.0, %v471
    %v856 = vsel %vm664, 0.0, %v472
    %v857 = vsel %vm665, 0.0, %v473
    %v858 = vsel %vm666, 0.0, %v474
    %v859 = vsel %vm667, 0.0, %v475
    %v860 = vsel %vm668, 0.0, %v476
    %v861 = vsel %vm669, 0.0, %v477
    %v862 = vsel %vm670, 0.0, %v478
    %v863 = vsel %vm671, 0.0, %v479
    %v864 = vsel %vm672, 0.0, %v480
    %v865 = vsel %vm673, 0.0, %v481
    %v866 = vsel %vm674, 0.0, %v482
    %v867 = vsel %vm675, 0.0, %v483
    %v868 = vsel %vm676, 0.0, %v484
    %v869 = vsel %vm677, 0.0, %v485
    %v870 = vsel %vm678, 0.0, %v486
    %v871 = vsel %vm679, 0.0, %v487
    %v872 = vsel %vm680, 0.0, %v488
    %v873 = vsel %vm681, 0.0, %v489
    %v874 = vsel %vm682, 0.0, %v490
    %v875 = vsel %vm683, 0.0, %v491
    %v876 = vsel %vm684, 0.0, %v492
    %v877 = vsel %vm685, 0.0, %v493
    %v878 = vsel %vm686, 0.0, %v494
    %v879 = vsel %vm687, 0.0, %v495
    %v880 = vsel %vm688, 0.0, %v496
    %v881 = vsel %vm689, 0.0, %v497
    %v882 = vsel %vm690, 0.0, %v498
    %v883 = vsel %vm691, 0.0, %v499
    %v884 = vsel %vm692, 0.0, %v500
    %v885 = vsel %vm693, 0.0, %v501
    %v886 = vsel %vm694, 0.0, %v502
    %v887 = vsel %vm695, 0.0, %v503
    %v888 = vsel %vm696, 0.0, %v504
    %v889 = vsel %vm697, 0.0, %v505
    %v890 = vsel %vm698, 0.0, %v506
    %v891 = vsel %vm699, 0.0, %v507
    %v892 = vsel %vm700, 0.0, %v508
    %v893 = vsel %vm701, 0.0, %v509
    %v894 = vsel %vm702, 0.0, %v510
    %v895 = vsel %vm703, 0.0, %v511
    %v896 = vsel %vm704, 0.0, %v512
    %v897 = vsel %vm705, 0.0, %v513
    %v898 = vsel %vm706, 0.0, %v514
    %v899 = vsel %vm707, 0.0, %v515
    %v900 = vsel %vm708, 0.0, %v516
    %v901 = vsel %vm709, 0.0, %v517
    %v902 = vsel %vm710, 0.0, %v518
    %v903 = vsel %vm711, 0.0, %v519
    %v904 = vsel %vm712, 0.0, %v520
    %v905 = vsel %vm713, 0.0, %v521
    %v906 = vsel %vm714, 0.0, %v522
    %v907 = vsel %vm715, 0.0, %v523
    %v908 = vsel %vm716, 0.0, %v524
    %v909 = vsel %vm717, 0.0, %v525
    %v910 = vsel %vm718, 0.0, %v526
    %v911 = vsel %vm719, 0.0, %v527
    %v912 = vsel %vm720, 0.0, %v528
    %v913 = vsel %vm721, 0.0, %v529
    %v914 = vsel %vm722, 0.0, %v530
    %v915 = vsel %vm723, 0.0, %v531
    %v916 = vsel %vm724, 0.0, %v532
    %v917 = vsel %vm725, 0.0, %v533
    %v918 = vsel %vm726, 0.0, %v534
    %v919 = vsel %vm727, 0.0, %v535
    %v920 = vsel %vm728, 0.0, %v536
    %v921 = vsel %vm729, 0.0, %v537
    %v922 = vsel %vm730, 0.0, %v538
    %v923 = vsel %vm731, 0.0, %v539
    %v924 = vsel %vm732, 0.0, %v540
    %v925 = vsel %vm733, 0.0, %v541
    %v926 = vsel %vm734, 0.0, %v542
    %v927 = vsel %vm735, 0.0, %v543
    %v928 = vsel %vm736, 0.0, %v544
    %v929 = vsel %vm737, 0.0, %v545
    %v930 = vsel %vm738, 0.0, %v546
    %v931 = vld [vmem:[#allocation8] sm:$0xff]
    %v932 = vld [vmem:[#allocation8 + $0x8] sm:$0xff]
    %v933 = vld [vmem:[#allocation8 + $0x10] sm:$0xff]
    %v934 = vld [vmem:[#allocation8 + $0x18] sm:$0xff]
    %v935 = vld [vmem:[#allocation8 + $0x20] sm:$0xff]
    %v936 = vld [vmem:[#allocation8 + $0x28] sm:$0xff]
    %v937 = vld [vmem:[#allocation8 + $0x30] sm:$0xff]
    %v938 = vld [vmem:[#allocation8 + $0x38] sm:$0xff]
    %v939 = vld [vmem:[#allocation8 + $0x40] sm:$0xff]
    %v940 = vld [vmem:[#allocation8 + $0x48] sm:$0xff]
    %v941 = vld [vmem:[#allocation8 + $0x50] sm:$0xff]
    %v942 = vld [vmem:[#allocation8 + $0x58] sm:$0xff]
    %v943 = vld [vmem:[#allocation8 + $0x60] sm:$0xff]
    %v944 = vld [vmem:[#allocation8 + $0x68] sm:$0xff]
    %v945 = vld [vmem:[#allocation8 + $0x70] sm:$0xff]
    %v946 = vld [vmem:[#allocation8 + $0x78] sm:$0xff]
    %v947 = vld [vmem:[#allocation8 + $0x80] sm:$0xff]
    %v948 = vld [vmem:[#allocation8 + $0x88] sm:$0xff]
    %v949 = vld [vmem:[#allocation8 + $0x90] sm:$0xff]
    %v950 = vld [vmem:[#allocation8 + $0x98] sm:$0xff]
    %v951 = vld [vmem:[#allocation8 + $0xa0] sm:$0xff]
    %v952 = vld [vmem:[#allocation8 + $0xa8] sm:$0xff]
    %v953 = vld [vmem:[#allocation8 + $0xb0] sm:$0xff]
    %v954 = vld [vmem:[#allocation8 + $0xb8] sm:$0xff]
    %v955 = vld [vmem:[#allocation8 + $0xc0] sm:$0xff]
    %v956 = vld [vmem:[#allocation8 + $0xc8] sm:$0xff]
    %v957 = vld [vmem:[#allocation8 + $0xd0] sm:$0xff]
    %v958 = vld [vmem:[#allocation8 + $0xd8] sm:$0xff]
    %v959 = vld [vmem:[#allocation8 + $0xe0] sm:$0xff]
    %v960 = vld [vmem:[#allocation8 + $0xe8] sm:$0xff]
    %v961 = vld [vmem:[#allocation8 + $0xf0] sm:$0xff]
    %v962 = vld [vmem:[#allocation8 + $0xf8] sm:$0xff]
    %v963 = vld [vmem:[#allocation8 + $0x100] sm:$0xff]
    %v964 = vld [vmem:[#allocation8 + $0x108] sm:$0xff]
    %v965 = vld [vmem:[#allocation8 + $0x110] sm:$0xff]
    %v966 = vld [vmem:[#allocation8 + $0x118] sm:$0xff]
    %v967 = vld [vmem:[#allocation8 + $0x120] sm:$0xff]
    %v968 = vld [vmem:[#allocation8 + $0x128] sm:$0xff]
    %v969 = vld [vmem:[#allocation8 + $0x130] sm:$0xff]
    %v970 = vld [vmem:[#allocation8 + $0x138] sm:$0xff]
    %v971 = vld [vmem:[#allocation8 + $0x140] sm:$0xff]
    %v972 = vld [vmem:[#allocation8 + $0x148] sm:$0xff]
    %v973 = vld [vmem:[#allocation8 + $0x150] sm:$0xff]
    %v974 = vld [vmem:[#allocation8 + $0x158] sm:$0xff]
    %v975 = vld [vmem:[#allocation8 + $0x160] sm:$0xff]
    %v976 = vld [vmem:[#allocation8 + $0x168] sm:$0xff]
    %v977 = vld [vmem:[#allocation8 + $0x170] sm:$0xff]
    %v978 = vld [vmem:[#allocation8 + $0x178] sm:$0xff]
    %v979 = vld [vmem:[#allocation8 + $0x180] sm:$0xff]
    %v980 = vld [vmem:[#allocation8 + $0x188] sm:$0xff]
    %v981 = vld [vmem:[#allocation8 + $0x190] sm:$0xff]
    %v982 = vld [vmem:[#allocation8 + $0x198] sm:$0xff]
    %v983 = vld [vmem:[#allocation8 + $0x1a0] sm:$0xff]
    %v984 = vld [vmem:[#allocation8 + $0x1a8] sm:$0xff]
    %v985 = vld [vmem:[#allocation8 + $0x1b0] sm:$0xff]
    %v986 = vld [vmem:[#allocation8 + $0x1b8] sm:$0xff]
    %v987 = vld [vmem:[#allocation8 + $0x1c0] sm:$0xff]
    %v988 = vld [vmem:[#allocation8 + $0x1c8] sm:$0xff]
    %v989 = vld [vmem:[#allocation8 + $0x1d0] sm:$0xff]
    %v990 = vld [vmem:[#allocation8 + $0x1d8] sm:$0xff]
    %v991 = vld [vmem:[#allocation8 + $0x1e0] sm:$0xff]
    %v992 = vld [vmem:[#allocation8 + $0x1e8] sm:$0xff]
    %v993 = vld [vmem:[#allocation8 + $0x1f0] sm:$0xff]
    %v994 = vld [vmem:[#allocation8 + $0x1f8] sm:$0xff]
    %v995 = vld [vmem:[#allocation8 + $0x200] sm:$0xff]
    %v996 = vld [vmem:[#allocation8 + $0x208] sm:$0xff]
    %v997 = vld [vmem:[#allocation8 + $0x210] sm:$0xff]
    %v998 = vld [vmem:[#allocation8 + $0x218] sm:$0xff]
    %v999 = vld [vmem:[#allocation8 + $0x220] sm:$0xff]
    %v1000 = vld [vmem:[#allocation8 + $0x228] sm:$0xff]
    %v1001 = vld [vmem:[#allocation8 + $0x230] sm:$0xff]
    %v1002 = vld [vmem:[#allocation8 + $0x238] sm:$0xff]
    %v1003 = vld [vmem:[#allocation8 + $0x240] sm:$0xff]
    %v1004 = vld [vmem:[#allocation8 + $0x248] sm:$0xff]
    %v1005 = vld [vmem:[#allocation8 + $0x250] sm:$0xff]
    %v1006 = vld [vmem:[#allocation8 + $0x258] sm:$0xff]
    %v1007 = vld [vmem:[#allocation8 + $0x260] sm:$0xff]
    %v1008 = vld [vmem:[#allocation8 + $0x268] sm:$0xff]
    %v1009 = vld [vmem:[#allocation8 + $0x270] sm:$0xff]
    %v1010 = vld [vmem:[#allocation8 + $0x278] sm:$0xff]
    %v1011 = vld [vmem:[#allocation8 + $0x280] sm:$0xff]
    %v1012 = vld [vmem:[#allocation8 + $0x288] sm:$0xff]
    %v1013 = vld [vmem:[#allocation8 + $0x290] sm:$0xff]
    %v1014 = vld [vmem:[#allocation8 + $0x298] sm:$0xff]
    %v1015 = vld [vmem:[#allocation8 + $0x2a0] sm:$0xff]
    %v1016 = vld [vmem:[#allocation8 + $0x2a8] sm:$0xff]
    %v1017 = vld [vmem:[#allocation8 + $0x2b0] sm:$0xff]
    %v1018 = vld [vmem:[#allocation8 + $0x2b8] sm:$0xff]
    %v1019 = vld [vmem:[#allocation8 + $0x2c0] sm:$0xff]
    %v1020 = vld [vmem:[#allocation8 + $0x2c8] sm:$0xff]
    %v1021 = vld [vmem:[#allocation8 + $0x2d0] sm:$0xff]
    %v1022 = vld [vmem:[#allocation8 + $0x2d8] sm:$0xff]
    %v1023 = vld [vmem:[#allocation8 + $0x2e0] sm:$0xff]
    %v1024 = vld [vmem:[#allocation8 + $0x2e8] sm:$0xff]
    %v1025 = vld [vmem:[#allocation8 + $0x2f0] sm:$0xff]
    %v1026 = vld [vmem:[#allocation8 + $0x2f8] sm:$0xff]
    %v1027 = vld [vmem:[#allocation8 + $0x300] sm:$0xff]
    %v1028 = vld [vmem:[#allocation8 + $0x308] sm:$0xff]
    %v1029 = vld [vmem:[#allocation8 + $0x310] sm:$0xff]
    %v1030 = vld [vmem:[#allocation8 + $0x318] sm:$0xff]
    %v1031 = vld [vmem:[#allocation8 + $0x320] sm:$0xff]
    %v1032 = vld [vmem:[#allocation8 + $0x328] sm:$0xff]
    %v1033 = vld [vmem:[#allocation8 + $0x330] sm:$0xff]
    %v1034 = vld [vmem:[#allocation8 + $0x338] sm:$0xff]
    %v1035 = vld [vmem:[#allocation8 + $0x340] sm:$0xff]
    %v1036 = vld [vmem:[#allocation8 + $0x348] sm:$0xff]
    %v1037 = vld [vmem:[#allocation8 + $0x350] sm:$0xff]
    %v1038 = vld [vmem:[#allocation8 + $0x358] sm:$0xff]
    %v1039 = vld [vmem:[#allocation8 + $0x360] sm:$0xff]
    %v1040 = vld [vmem:[#allocation8 + $0x368] sm:$0xff]
    %v1041 = vld [vmem:[#allocation8 + $0x370] sm:$0xff]
    %v1042 = vld [vmem:[#allocation8 + $0x378] sm:$0xff]
    %v1043 = vld [vmem:[#allocation8 + $0x380] sm:$0xff]
    %v1044 = vld [vmem:[#allocation8 + $0x388] sm:$0xff]
    %v1045 = vld [vmem:[#allocation8 + $0x390] sm:$0xff]
    %v1046 = vld [vmem:[#allocation8 + $0x398] sm:$0xff]
    %v1047 = vld [vmem:[#allocation8 + $0x3a0] sm:$0xff]
    %v1048 = vld [vmem:[#allocation8 + $0x3a8] sm:$0xff]
    %v1049 = vld [vmem:[#allocation8 + $0x3b0] sm:$0xff]
    %v1050 = vld [vmem:[#allocation8 + $0x3b8] sm:$0xff]
    %v1051 = vld [vmem:[#allocation8 + $0x3c0] sm:$0xff]
    %v1052 = vld [vmem:[#allocation8 + $0x3c8] sm:$0xff]
    %v1053 = vld [vmem:[#allocation8 + $0x3d0] sm:$0xff]
    %v1054 = vld [vmem:[#allocation8 + $0x3d8] sm:$0xff]
    %v1055 = vld [vmem:[#allocation8 + $0x3e0] sm:$0xff]
    %v1056 = vld [vmem:[#allocation8 + $0x3e8] sm:$0xff]
    %v1057 = vld [vmem:[#allocation8 + $0x3f0] sm:$0xff]
    %v1058 = vld [vmem:[#allocation8 + $0x3f8] sm:$0xff]
    %v1059 = vld [vmem:[#allocation8 + $0x400] sm:$0xff]
    %v1060 = vld [vmem:[#allocation8 + $0x408] sm:$0xff]
    %v1061 = vld [vmem:[#allocation8 + $0x410] sm:$0xff]
    %v1062 = vld [vmem:[#allocation8 + $0x418] sm:$0xff]
    %v1063 = vld [vmem:[#allocation8 + $0x420] sm:$0xff]
    %v1064 = vld [vmem:[#allocation8 + $0x428] sm:$0xff]
    %v1065 = vld [vmem:[#allocation8 + $0x430] sm:$0xff]
    %v1066 = vld [vmem:[#allocation8 + $0x438] sm:$0xff]
    %v1067 = vld [vmem:[#allocation8 + $0x440] sm:$0xff]
    %v1068 = vld [vmem:[#allocation8 + $0x448] sm:$0xff]
    %v1069 = vld [vmem:[#allocation8 + $0x450] sm:$0xff]
    %v1070 = vld [vmem:[#allocation8 + $0x458] sm:$0xff]
    %v1071 = vld [vmem:[#allocation8 + $0x460] sm:$0xff]
    %v1072 = vld [vmem:[#allocation8 + $0x468] sm:$0xff]
    %v1073 = vld [vmem:[#allocation8 + $0x470] sm:$0xff]
    %v1074 = vld [vmem:[#allocation8 + $0x478] sm:$0xff]
    %v1075 = vld [vmem:[#allocation8 + $0x480] sm:$0xff]
    %v1076 = vld [vmem:[#allocation8 + $0x488] sm:$0xff]
    %v1077 = vld [vmem:[#allocation8 + $0x490] sm:$0xff]
    %v1078 = vld [vmem:[#allocation8 + $0x498] sm:$0xff]
    %v1079 = vld [vmem:[#allocation8 + $0x4a0] sm:$0xff]
    %v1080 = vld [vmem:[#allocation8 + $0x4a8] sm:$0xff]
    %v1081 = vld [vmem:[#allocation8 + $0x4b0] sm:$0xff]
    %v1082 = vld [vmem:[#allocation8 + $0x4b8] sm:$0xff]
    %v1083 = vld [vmem:[#allocation8 + $0x4c0] sm:$0xff]
    %v1084 = vld [vmem:[#allocation8 + $0x4c8] sm:$0xff]
    %v1085 = vld [vmem:[#allocation8 + $0x4d0] sm:$0xff]
    %v1086 = vld [vmem:[#allocation8 + $0x4d8] sm:$0xff]
    %v1087 = vld [vmem:[#allocation8 + $0x4e0] sm:$0xff]
    %v1088 = vld [vmem:[#allocation8 + $0x4e8] sm:$0xff]
    %v1089 = vld [vmem:[#allocation8 + $0x4f0] sm:$0xff]
    %v1090 = vld [vmem:[#allocation8 + $0x4f8] sm:$0xff]
    %v1091 = vld [vmem:[#allocation8 + $0x500] sm:$0xff]
    %v1092 = vld [vmem:[#allocation8 + $0x508] sm:$0xff]
    %v1093 = vld [vmem:[#allocation8 + $0x510] sm:$0xff]
    %v1094 = vld [vmem:[#allocation8 + $0x518] sm:$0xff]
    %v1095 = vld [vmem:[#allocation8 + $0x520] sm:$0xff]
    %v1096 = vld [vmem:[#allocation8 + $0x528] sm:$0xff]
    %v1097 = vld [vmem:[#allocation8 + $0x530] sm:$0xff]
    %v1098 = vld [vmem:[#allocation8 + $0x538] sm:$0xff]
    %v1099 = vld [vmem:[#allocation8 + $0x540] sm:$0xff]
    %v1100 = vld [vmem:[#allocation8 + $0x548] sm:$0xff]
    %v1101 = vld [vmem:[#allocation8 + $0x550] sm:$0xff]
    %v1102 = vld [vmem:[#allocation8 + $0x558] sm:$0xff]
    %v1103 = vld [vmem:[#allocation8 + $0x560] sm:$0xff]
    %v1104 = vld [vmem:[#allocation8 + $0x568] sm:$0xff]
    %v1105 = vld [vmem:[#allocation8 + $0x570] sm:$0xff]
    %v1106 = vld [vmem:[#allocation8 + $0x578] sm:$0xff]
    %v1107 = vld [vmem:[#allocation8 + $0x580] sm:$0xff]
    %v1108 = vld [vmem:[#allocation8 + $0x588] sm:$0xff]
    %v1109 = vld [vmem:[#allocation8 + $0x590] sm:$0xff]
    %v1110 = vld [vmem:[#allocation8 + $0x598] sm:$0xff]
    %v1111 = vld [vmem:[#allocation8 + $0x5a0] sm:$0xff]
    %v1112 = vld [vmem:[#allocation8 + $0x5a8] sm:$0xff]
    %v1113 = vld [vmem:[#allocation8 + $0x5b0] sm:$0xff]
    %v1114 = vld [vmem:[#allocation8 + $0x5b8] sm:$0xff]
    %v1115 = vld [vmem:[#allocation8 + $0x5c0] sm:$0xff]
    %v1116 = vld [vmem:[#allocation8 + $0x5c8] sm:$0xff]
    %v1117 = vld [vmem:[#allocation8 + $0x5d0] sm:$0xff]
    %v1118 = vld [vmem:[#allocation8 + $0x5d8] sm:$0xff]
    %v1119 = vld [vmem:[#allocation8 + $0x5e0] sm:$0xff]
    %v1120 = vld [vmem:[#allocation8 + $0x5e8] sm:$0xff]
    %v1121 = vld [vmem:[#allocation8 + $0x5f0] sm:$0xff]
    %v1122 = vld [vmem:[#allocation8 + $0x5f8] sm:$0xff]
    %v1123 = vld [vmem:[#allocation8 + $0x600] sm:$0xff]
    %v1124 = vld [vmem:[#allocation8 + $0x608] sm:$0xff]
    %v1125 = vld [vmem:[#allocation8 + $0x610] sm:$0xff]
    %v1126 = vld [vmem:[#allocation8 + $0x618] sm:$0xff]
    %v1127 = vld [vmem:[#allocation8 + $0x620] sm:$0xff]
    %v1128 = vld [vmem:[#allocation8 + $0x628] sm:$0xff]
    %v1129 = vld [vmem:[#allocation8 + $0x630] sm:$0xff]
    %v1130 = vld [vmem:[#allocation8 + $0x638] sm:$0xff]
    %v1131 = vld [vmem:[#allocation8 + $0x640] sm:$0xff]
    %v1132 = vld [vmem:[#allocation8 + $0x648] sm:$0xff]
    %v1133 = vld [vmem:[#allocation8 + $0x650] sm:$0xff]
    %v1134 = vld [vmem:[#allocation8 + $0x658] sm:$0xff]
    %v1135 = vld [vmem:[#allocation8 + $0x660] sm:$0xff]
    %v1136 = vld [vmem:[#allocation8 + $0x668] sm:$0xff]
    %v1137 = vld [vmem:[#allocation8 + $0x670] sm:$0xff]
    %v1138 = vld [vmem:[#allocation8 + $0x678] sm:$0xff]
    %v1139 = vld [vmem:[#allocation8 + $0x680] sm:$0xff]
    %v1140 = vld [vmem:[#allocation8 + $0x688] sm:$0xff]
    %v1141 = vld [vmem:[#allocation8 + $0x690] sm:$0xff]
    %v1142 = vld [vmem:[#allocation8 + $0x698] sm:$0xff]
    %v1143 = vld [vmem:[#allocation8 + $0x6a0] sm:$0xff]
    %v1144 = vld [vmem:[#allocation8 + $0x6a8] sm:$0xff]
    %v1145 = vld [vmem:[#allocation8 + $0x6b0] sm:$0xff]
    %v1146 = vld [vmem:[#allocation8 + $0x6b8] sm:$0xff]
    %v1147 = vld [vmem:[#allocation8 + $0x6c0] sm:$0xff]
    %v1148 = vld [vmem:[#allocation8 + $0x6c8] sm:$0xff]
    %v1149 = vld [vmem:[#allocation8 + $0x6d0] sm:$0xff]
    %v1150 = vld [vmem:[#allocation8 + $0x6d8] sm:$0xff]
    %v1151 = vld [vmem:[#allocation8 + $0x6e0] sm:$0xff]
    %v1152 = vld [vmem:[#allocation8 + $0x6e8] sm:$0xff]
    %v1153 = vld [vmem:[#allocation8 + $0x6f0] sm:$0xff]
    %v1154 = vld [vmem:[#allocation8 + $0x6f8] sm:$0xff]
    %v1155 = vld [vmem:[#allocation8 + $0x700] sm:$0xff]
    %v1156 = vld [vmem:[#allocation8 + $0x708] sm:$0xff]
    %v1157 = vld [vmem:[#allocation8 + $0x710] sm:$0xff]
    %v1158 = vld [vmem:[#allocation8 + $0x718] sm:$0xff]
    %v1159 = vld [vmem:[#allocation8 + $0x720] sm:$0xff]
    %v1160 = vld [vmem:[#allocation8 + $0x728] sm:$0xff]
    %v1161 = vld [vmem:[#allocation8 + $0x730] sm:$0xff]
    %v1162 = vld [vmem:[#allocation8 + $0x738] sm:$0xff]
    %v1163 = vld [vmem:[#allocation8 + $0x740] sm:$0xff]
    %v1164 = vld [vmem:[#allocation8 + $0x748] sm:$0xff]
    %v1165 = vld [vmem:[#allocation8 + $0x750] sm:$0xff]
    %v1166 = vld [vmem:[#allocation8 + $0x758] sm:$0xff]
    %v1167 = vld [vmem:[#allocation8 + $0x760] sm:$0xff]
    %v1168 = vld [vmem:[#allocation8 + $0x768] sm:$0xff]
    %v1169 = vld [vmem:[#allocation8 + $0x770] sm:$0xff]
    %v1170 = vld [vmem:[#allocation8 + $0x778] sm:$0xff]
    %v1171 = vld [vmem:[#allocation8 + $0x780] sm:$0xff]
    %v1172 = vld [vmem:[#allocation8 + $0x788] sm:$0xff]
    %v1173 = vld [vmem:[#allocation8 + $0x790] sm:$0xff]
    %v1174 = vld [vmem:[#allocation8 + $0x798] sm:$0xff]
    %v1175 = vld [vmem:[#allocation8 + $0x7a0] sm:$0xff]
    %v1176 = vld [vmem:[#allocation8 + $0x7a8] sm:$0xff]
    %v1177 = vld [vmem:[#allocation8 + $0x7b0] sm:$0xff]
    %v1178 = vld [vmem:[#allocation8 + $0x7b8] sm:$0xff]
    %v1179 = vld [vmem:[#allocation8 + $0x7c0] sm:$0xff]
    %v1180 = vld [vmem:[#allocation8 + $0x7c8] sm:$0xff]
    %v1181 = vld [vmem:[#allocation8 + $0x7d0] sm:$0xff]
    %v1182 = vld [vmem:[#allocation8 + $0x7d8] sm:$0xff]
    %v1183 = vld [vmem:[#allocation8 + $0x7e0] sm:$0xff]
    %v1184 = vld [vmem:[#allocation8 + $0x7e8] sm:$0xff]
    %v1185 = vld [vmem:[#allocation8 + $0x7f0] sm:$0xff]
    %v1186 = vld [vmem:[#allocation8 + $0x7f8] sm:$0xff]
    %v1187 = vld [vmem:[#allocation8 + $0x800] sm:$0xff]
    %v1188 = vld [vmem:[#allocation8 + $0x808] sm:$0xff]
    %v1189 = vld [vmem:[#allocation8 + $0x810] sm:$0xff]
    %v1190 = vld [vmem:[#allocation8 + $0x818] sm:$0xff]
    %v1191 = vld [vmem:[#allocation8 + $0x820] sm:$0xff]
    %v1192 = vld [vmem:[#allocation8 + $0x828] sm:$0xff]
    %v1193 = vld [vmem:[#allocation8 + $0x830] sm:$0xff]
    %v1194 = vld [vmem:[#allocation8 + $0x838] sm:$0xff]
    %v1195 = vld [vmem:[#allocation8 + $0x840] sm:$0xff]
    %v1196 = vld [vmem:[#allocation8 + $0x848] sm:$0xff]
    %v1197 = vld [vmem:[#allocation8 + $0x850] sm:$0xff]
    %v1198 = vld [vmem:[#allocation8 + $0x858] sm:$0xff]
    %v1199 = vld [vmem:[#allocation8 + $0x860] sm:$0xff]
    %v1200 = vld [vmem:[#allocation8 + $0x868] sm:$0xff]
    %v1201 = vld [vmem:[#allocation8 + $0x870] sm:$0xff]
    %v1202 = vld [vmem:[#allocation8 + $0x878] sm:$0xff]
    %v1203 = vld [vmem:[#allocation8 + $0x880] sm:$0xff]
    %v1204 = vld [vmem:[#allocation8 + $0x888] sm:$0xff]
    %v1205 = vld [vmem:[#allocation8 + $0x890] sm:$0xff]
    %v1206 = vld [vmem:[#allocation8 + $0x898] sm:$0xff]
    %v1207 = vld [vmem:[#allocation8 + $0x8a0] sm:$0xff]
    %v1208 = vld [vmem:[#allocation8 + $0x8a8] sm:$0xff]
    %v1209 = vld [vmem:[#allocation8 + $0x8b0] sm:$0xff]
    %v1210 = vld [vmem:[#allocation8 + $0x8b8] sm:$0xff]
    %v1211 = vld [vmem:[#allocation8 + $0x8c0] sm:$0xff]
    %v1212 = vld [vmem:[#allocation8 + $0x8c8] sm:$0xff]
    %v1213 = vld [vmem:[#allocation8 + $0x8d0] sm:$0xff]
    %v1214 = vld [vmem:[#allocation8 + $0x8d8] sm:$0xff]
    %v1215 = vld [vmem:[#allocation8 + $0x8e0] sm:$0xff]
    %v1216 = vld [vmem:[#allocation8 + $0x8e8] sm:$0xff]
    %v1217 = vld [vmem:[#allocation8 + $0x8f0] sm:$0xff]
    %v1218 = vld [vmem:[#allocation8 + $0x8f8] sm:$0xff]
    %v1219 = vld [vmem:[#allocation8 + $0x900] sm:$0xff]
    %v1220 = vld [vmem:[#allocation8 + $0x908] sm:$0xff]
    %v1221 = vld [vmem:[#allocation8 + $0x910] sm:$0xff]
    %v1222 = vld [vmem:[#allocation8 + $0x918] sm:$0xff]
    %v1223 = vld [vmem:[#allocation8 + $0x920] sm:$0xff]
    %v1224 = vld [vmem:[#allocation8 + $0x928] sm:$0xff]
    %v1225 = vld [vmem:[#allocation8 + $0x930] sm:$0xff]
    %v1226 = vld [vmem:[#allocation8 + $0x938] sm:$0xff]
    %v1227 = vld [vmem:[#allocation8 + $0x940] sm:$0xff]
    %v1228 = vld [vmem:[#allocation8 + $0x948] sm:$0xff]
    %v1229 = vld [vmem:[#allocation8 + $0x950] sm:$0xff]
    %v1230 = vld [vmem:[#allocation8 + $0x958] sm:$0xff]
    %v1231 = vld [vmem:[#allocation8 + $0x960] sm:$0xff]
    %v1232 = vld [vmem:[#allocation8 + $0x968] sm:$0xff]
    %v1233 = vld [vmem:[#allocation8 + $0x970] sm:$0xff]
    %v1234 = vld [vmem:[#allocation8 + $0x978] sm:$0xff]
    %v1235 = vld [vmem:[#allocation8 + $0x980] sm:$0xff]
    %v1236 = vld [vmem:[#allocation8 + $0x988] sm:$0xff]
    %v1237 = vld [vmem:[#allocation8 + $0x990] sm:$0xff]
    %v1238 = vld [vmem:[#allocation8 + $0x998] sm:$0xff]
    %v1239 = vld [vmem:[#allocation8 + $0x9a0] sm:$0xff]
    %v1240 = vld [vmem:[#allocation8 + $0x9a8] sm:$0xff]
    %v1241 = vld [vmem:[#allocation8 + $0x9b0] sm:$0xff]
    %v1242 = vld [vmem:[#allocation8 + $0x9b8] sm:$0xff]
    %v1243 = vld [vmem:[#allocation8 + $0x9c0] sm:$0xff]
    %v1244 = vld [vmem:[#allocation8 + $0x9c8] sm:$0xff]
    %v1245 = vld [vmem:[#allocation8 + $0x9d0] sm:$0xff]
    %v1246 = vld [vmem:[#allocation8 + $0x9d8] sm:$0xff]
    %v1247 = vld [vmem:[#allocation8 + $0x9e0] sm:$0xff]
    %v1248 = vld [vmem:[#allocation8 + $0x9e8] sm:$0xff]
    %v1249 = vld [vmem:[#allocation8 + $0x9f0] sm:$0xff]
    %v1250 = vld [vmem:[#allocation8 + $0x9f8] sm:$0xff]
    %v1251 = vld [vmem:[#allocation8 + $0xa00] sm:$0xff]
    %v1252 = vld [vmem:[#allocation8 + $0xa08] sm:$0xff]
    %v1253 = vld [vmem:[#allocation8 + $0xa10] sm:$0xff]
    %v1254 = vld [vmem:[#allocation8 + $0xa18] sm:$0xff]
    %v1255 = vld [vmem:[#allocation8 + $0xa20] sm:$0xff]
    %v1256 = vld [vmem:[#allocation8 + $0xa28] sm:$0xff]
    %v1257 = vld [vmem:[#allocation8 + $0xa30] sm:$0xff]
    %v1258 = vld [vmem:[#allocation8 + $0xa38] sm:$0xff]
    %v1259 = vld [vmem:[#allocation8 + $0xa40] sm:$0xff]
    %v1260 = vld [vmem:[#allocation8 + $0xa48] sm:$0xff]
    %v1261 = vld [vmem:[#allocation8 + $0xa50] sm:$0xff]
    %v1262 = vld [vmem:[#allocation8 + $0xa58] sm:$0xff]
    %v1263 = vld [vmem:[#allocation8 + $0xa60] sm:$0xff]
    %v1264 = vld [vmem:[#allocation8 + $0xa68] sm:$0xff]
    %v1265 = vld [vmem:[#allocation8 + $0xa70] sm:$0xff]
    %v1266 = vld [vmem:[#allocation8 + $0xa78] sm:$0xff]
    %v1267 = vld [vmem:[#allocation8 + $0xa80] sm:$0xff]
    %v1268 = vld [vmem:[#allocation8 + $0xa88] sm:$0xff]
    %v1269 = vld [vmem:[#allocation8 + $0xa90] sm:$0xff]
    %v1270 = vld [vmem:[#allocation8 + $0xa98] sm:$0xff]
    %v1271 = vld [vmem:[#allocation8 + $0xaa0] sm:$0xff]
    %v1272 = vld [vmem:[#allocation8 + $0xaa8] sm:$0xff]
    %v1273 = vld [vmem:[#allocation8 + $0xab0] sm:$0xff]
    %v1274 = vld [vmem:[#allocation8 + $0xab8] sm:$0xff]
    %v1275 = vld [vmem:[#allocation8 + $0xac0] sm:$0xff]
    %v1276 = vld [vmem:[#allocation8 + $0xac8] sm:$0xff]
    %v1277 = vld [vmem:[#allocation8 + $0xad0] sm:$0xff]
    %v1278 = vld [vmem:[#allocation8 + $0xad8] sm:$0xff]
    %v1279 = vld [vmem:[#allocation8 + $0xae0] sm:$0xff]
    %v1280 = vld [vmem:[#allocation8 + $0xae8] sm:$0xff]
    %v1281 = vld [vmem:[#allocation8 + $0xaf0] sm:$0xff]
    %v1282 = vld [vmem:[#allocation8 + $0xaf8] sm:$0xff]
    %v1283 = vld [vmem:[#allocation8 + $0xb00] sm:$0xff]
    %v1284 = vld [vmem:[#allocation8 + $0xb08] sm:$0xff]
    %v1285 = vld [vmem:[#allocation8 + $0xb10] sm:$0xff]
    %v1286 = vld [vmem:[#allocation8 + $0xb18] sm:$0xff]
    %v1287 = vld [vmem:[#allocation8 + $0xb20] sm:$0xff]
    %v1288 = vld [vmem:[#allocation8 + $0xb28] sm:$0xff]
    %v1289 = vld [vmem:[#allocation8 + $0xb30] sm:$0xff]
    %v1290 = vld [vmem:[#allocation8 + $0xb38] sm:$0xff]
    %v1291 = vld [vmem:[#allocation8 + $0xb40] sm:$0xff]
    %v1292 = vld [vmem:[#allocation8 + $0xb48] sm:$0xff]
    %v1293 = vld [vmem:[#allocation8 + $0xb50] sm:$0xff]
    %v1294 = vld [vmem:[#allocation8 + $0xb58] sm:$0xff]
    %v1295 = vld [vmem:[#allocation8 + $0xb60] sm:$0xff]
    %v1296 = vld [vmem:[#allocation8 + $0xb68] sm:$0xff]
    %v1297 = vld [vmem:[#allocation8 + $0xb70] sm:$0xff]
    %v1298 = vld [vmem:[#allocation8 + $0xb78] sm:$0xff]
    %v1299 = vld [vmem:[#allocation8 + $0xb80] sm:$0xff]
    %v1300 = vld [vmem:[#allocation8 + $0xb88] sm:$0xff]
    %v1301 = vld [vmem:[#allocation8 + $0xb90] sm:$0xff]
    %v1302 = vld [vmem:[#allocation8 + $0xb98] sm:$0xff]
    %v1303 = vld [vmem:[#allocation8 + $0xba0] sm:$0xff]
    %v1304 = vld [vmem:[#allocation8 + $0xba8] sm:$0xff]
    %v1305 = vld [vmem:[#allocation8 + $0xbb0] sm:$0xff]
    %v1306 = vld [vmem:[#allocation8 + $0xbb8] sm:$0xff]
    %v1307 = vld [vmem:[#allocation8 + $0xbc0] sm:$0xff]
    %v1308 = vld [vmem:[#allocation8 + $0xbc8] sm:$0xff]
    %v1309 = vld [vmem:[#allocation8 + $0xbd0] sm:$0xff]
    %v1310 = vld [vmem:[#allocation8 + $0xbd8] sm:$0xff]
    %v1311 = vld [vmem:[#allocation8 + $0xbe0] sm:$0xff]
    %v1312 = vld [vmem:[#allocation8 + $0xbe8] sm:$0xff]
    %v1313 = vld [vmem:[#allocation8 + $0xbf0] sm:$0xff]
    %v1314 = vld [vmem:[#allocation8 + $0xbf8] sm:$0xff]
    %v1315 = vld [vmem:[#allocation8 + $0xc00] sm:$0xff]
    %v1316 = vld [vmem:[#allocation8 + $0xc08] sm:$0xff]
    %v1317 = vld [vmem:[#allocation8 + $0xc10] sm:$0xff]
    %v1318 = vld [vmem:[#allocation8 + $0xc18] sm:$0xff]
    %v1319 = vld [vmem:[#allocation8 + $0xc20] sm:$0xff]
    %v1320 = vld [vmem:[#allocation8 + $0xc28] sm:$0xff]
    %v1321 = vld [vmem:[#allocation8 + $0xc30] sm:$0xff]
    %v1322 = vld [vmem:[#allocation8 + $0xc38] sm:$0xff]
    %v1323 = vld [vmem:[#allocation8 + $0xc40] sm:$0xff]
    %v1324 = vld [vmem:[#allocation8 + $0xc48] sm:$0xff]
    %v1325 = vld [vmem:[#allocation8 + $0xc50] sm:$0xff]
    %v1326 = vld [vmem:[#allocation8 + $0xc58] sm:$0xff]
    %v1327 = vld [vmem:[#allocation8 + $0xc60] sm:$0xff]
    %v1328 = vld [vmem:[#allocation8 + $0xc68] sm:$0xff]
    %v1329 = vld [vmem:[#allocation8 + $0xc70] sm:$0xff]
    %v1330 = vld [vmem:[#allocation8 + $0xc78] sm:$0xff]
    %v1331 = vld [vmem:[#allocation8 + $0xc80] sm:$0xff]
    %v1332 = vld [vmem:[#allocation8 + $0xc88] sm:$0xff]
    %v1333 = vld [vmem:[#allocation8 + $0xc90] sm:$0xff]
    %v1334 = vld [vmem:[#allocation8 + $0xc98] sm:$0xff]
    %v1335 = vld [vmem:[#allocation8 + $0xca0] sm:$0xff]
    %v1336 = vld [vmem:[#allocation8 + $0xca8] sm:$0xff]
    %v1337 = vld [vmem:[#allocation8 + $0xcb0] sm:$0xff]
    %v1338 = vld [vmem:[#allocation8 + $0xcb8] sm:$0xff]
    %v1339 = vld [vmem:[#allocation8 + $0xcc0] sm:$0xff]
    %v1340 = vld [vmem:[#allocation8 + $0xcc8] sm:$0xff]
    %v1341 = vld [vmem:[#allocation8 + $0xcd0] sm:$0xff]
    %v1342 = vld [vmem:[#allocation8 + $0xcd8] sm:$0xff]
    %v1343 = vld [vmem:[#allocation8 + $0xce0] sm:$0xff]
    %v1344 = vld [vmem:[#allocation8 + $0xce8] sm:$0xff]
    %v1345 = vld [vmem:[#allocation8 + $0xcf0] sm:$0xff]
    %v1346 = vld [vmem:[#allocation8 + $0xcf8] sm:$0xff]
    %v1347 = vld [vmem:[#allocation8 + $0xd00] sm:$0xff]
    %v1348 = vld [vmem:[#allocation8 + $0xd08] sm:$0xff]
    %v1349 = vld [vmem:[#allocation8 + $0xd10] sm:$0xff]
    %v1350 = vld [vmem:[#allocation8 + $0xd18] sm:$0xff]
    %v1351 = vld [vmem:[#allocation8 + $0xd20] sm:$0xff]
    %v1352 = vld [vmem:[#allocation8 + $0xd28] sm:$0xff]
    %v1353 = vld [vmem:[#allocation8 + $0xd30] sm:$0xff]
    %v1354 = vld [vmem:[#allocation8 + $0xd38] sm:$0xff]
    %v1355 = vld [vmem:[#allocation8 + $0xd40] sm:$0xff]
    %v1356 = vld [vmem:[#allocation8 + $0xd48] sm:$0xff]
    %v1357 = vld [vmem:[#allocation8 + $0xd50] sm:$0xff]
    %v1358 = vld [vmem:[#allocation8 + $0xd58] sm:$0xff]
    %v1359 = vld [vmem:[#allocation8 + $0xd60] sm:$0xff]
    %v1360 = vld [vmem:[#allocation8 + $0xd68] sm:$0xff]
    %v1361 = vld [vmem:[#allocation8 + $0xd70] sm:$0xff]
    %v1362 = vld [vmem:[#allocation8 + $0xd78] sm:$0xff]
    %v1363 = vld [vmem:[#allocation8 + $0xd80] sm:$0xff]
    %v1364 = vld [vmem:[#allocation8 + $0xd88] sm:$0xff]
    %v1365 = vld [vmem:[#allocation8 + $0xd90] sm:$0xff]
    %v1366 = vld [vmem:[#allocation8 + $0xd98] sm:$0xff]
    %v1367 = vld [vmem:[#allocation8 + $0xda0] sm:$0xff]
    %v1368 = vld [vmem:[#allocation8 + $0xda8] sm:$0xff]
    %v1369 = vld [vmem:[#allocation8 + $0xdb0] sm:$0xff]
    %v1370 = vld [vmem:[#allocation8 + $0xdb8] sm:$0xff]
    %v1371 = vld [vmem:[#allocation8 + $0xdc0] sm:$0xff]
    %v1372 = vld [vmem:[#allocation8 + $0xdc8] sm:$0xff]
    %v1373 = vld [vmem:[#allocation8 + $0xdd0] sm:$0xff]
    %v1374 = vld [vmem:[#allocation8 + $0xdd8] sm:$0xff]
    %v1375 = vld [vmem:[#allocation8 + $0xde0] sm:$0xff]
    %v1376 = vld [vmem:[#allocation8 + $0xde8] sm:$0xff]
    %v1377 = vld [vmem:[#allocation8 + $0xdf0] sm:$0xff]
    %v1378 = vld [vmem:[#allocation8 + $0xdf8] sm:$0xff]
    %v1379 = vld [vmem:[#allocation8 + $0xe00] sm:$0xff]
    %v1380 = vld [vmem:[#allocation8 + $0xe08] sm:$0xff]
    %v1381 = vld [vmem:[#allocation8 + $0xe10] sm:$0xff]
    %v1382 = vld [vmem:[#allocation8 + $0xe18] sm:$0xff]
    %v1383 = vld [vmem:[#allocation8 + $0xe20] sm:$0xff]
    %v1384 = vld [vmem:[#allocation8 + $0xe28] sm:$0xff]
    %v1385 = vld [vmem:[#allocation8 + $0xe30] sm:$0xff]
    %v1386 = vld [vmem:[#allocation8 + $0xe38] sm:$0xff]
    %v1387 = vld [vmem:[#allocation8 + $0xe40] sm:$0xff]
    %v1388 = vld [vmem:[#allocation8 + $0xe48] sm:$0xff]
    %v1389 = vld [vmem:[#allocation8 + $0xe50] sm:$0xff]
    %v1390 = vld [vmem:[#allocation8 + $0xe58] sm:$0xff]
    %v1391 = vld [vmem:[#allocation8 + $0xe60] sm:$0xff]
    %v1392 = vld [vmem:[#allocation8 + $0xe68] sm:$0xff]
    %v1393 = vld [vmem:[#allocation8 + $0xe70] sm:$0xff]
    %v1394 = vld [vmem:[#allocation8 + $0xe78] sm:$0xff]
    %v1395 = vld [vmem:[#allocation8 + $0xe80] sm:$0xff]
    %v1396 = vld [vmem:[#allocation8 + $0xe88] sm:$0xff]
    %v1397 = vld [vmem:[#allocation8 + $0xe90] sm:$0xff]
    %v1398 = vld [vmem:[#allocation8 + $0xe98] sm:$0xff]
    %v1399 = vld [vmem:[#allocation8 + $0xea0] sm:$0xff]
    %v1400 = vld [vmem:[#allocation8 + $0xea8] sm:$0xff]
    %v1401 = vld [vmem:[#allocation8 + $0xeb0] sm:$0xff]
    %v1402 = vld [vmem:[#allocation8 + $0xeb8] sm:$0xff]
    %v1403 = vld [vmem:[#allocation8 + $0xec0] sm:$0xff]
    %v1404 = vld [vmem:[#allocation8 + $0xec8] sm:$0xff]
    %v1405 = vld [vmem:[#allocation8 + $0xed0] sm:$0xff]
    %v1406 = vld [vmem:[#allocation8 + $0xed8] sm:$0xff]
    %v1407 = vld [vmem:[#allocation8 + $0xee0] sm:$0xff]
    %v1408 = vld [vmem:[#allocation8 + $0xee8] sm:$0xff]
    %v1409 = vld [vmem:[#allocation8 + $0xef0] sm:$0xff]
    %v1410 = vld [vmem:[#allocation8 + $0xef8] sm:$0xff]
    %v1411 = vld [vmem:[#allocation8 + $0xf00] sm:$0xff]
    %v1412 = vld [vmem:[#allocation8 + $0xf08] sm:$0xff]
    %v1413 = vld [vmem:[#allocation8 + $0xf10] sm:$0xff]
    %v1414 = vld [vmem:[#allocation8 + $0xf18] sm:$0xff]
    %v1415 = vld [vmem:[#allocation8 + $0xf20] sm:$0xff]
    %v1416 = vld [vmem:[#allocation8 + $0xf28] sm:$0xff]
    %v1417 = vld [vmem:[#allocation8 + $0xf30] sm:$0xff]
    %v1418 = vld [vmem:[#allocation8 + $0xf38] sm:$0xff]
    %v1419 = vld [vmem:[#allocation8 + $0xf40] sm:$0xff]
    %v1420 = vld [vmem:[#allocation8 + $0xf48] sm:$0xff]
    %v1421 = vld [vmem:[#allocation8 + $0xf50] sm:$0xff]
    %v1422 = vld [vmem:[#allocation8 + $0xf58] sm:$0xff]
    %v1423 = vld [vmem:[#allocation8 + $0xf60] sm:$0xff]
    %v1424 = vld [vmem:[#allocation8 + $0xf68] sm:$0xff]
    %v1425 = vld [vmem:[#allocation8 + $0xf70] sm:$0xff]
    %v1426 = vld [vmem:[#allocation8 + $0xf78] sm:$0xff]
    %v1427 = vld [vmem:[#allocation8 + $0xf80] sm:$0xff]
    %v1428 = vld [vmem:[#allocation8 + $0xf88] sm:$0xff]
    %v1429 = vld [vmem:[#allocation8 + $0xf90] sm:$0xff]
    %v1430 = vld [vmem:[#allocation8 + $0xf98] sm:$0xff]
    %v1431 = vld [vmem:[#allocation8 + $0xfa0] sm:$0xff]
    %v1432 = vld [vmem:[#allocation8 + $0xfa8] sm:$0xff]
    %v1433 = vld [vmem:[#allocation8 + $0xfb0] sm:$0xff]
    %v1434 = vld [vmem:[#allocation8 + $0xfb8] sm:$0xff]
    %v1435 = vld [vmem:[#allocation8 + $0xfc0] sm:$0xff]
    %v1436 = vld [vmem:[#allocation8 + $0xfc8] sm:$0xff]
    %v1437 = vld [vmem:[#allocation8 + $0xfd0] sm:$0xff]
    %v1438 = vld [vmem:[#allocation8 + $0xfd8] sm:$0xff]
    %v1439 = vld [vmem:[#allocation8 + $0xfe0] sm:$0xff]
    %v1440 = vld [vmem:[#allocation8 + $0xfe8] sm:$0xff]
    %v1441 = vld [vmem:[#allocation8 + $0xff0] sm:$0xff]
    %v1442 = vld [vmem:[#allocation8 + $0xff8] sm:$0xff]
    %v1443 = vld [vmem:[#allocation8 + $0x1000] sm:$0xff]
    %v1444 = vld [vmem:[#allocation8 + $0x1008] sm:$0xff]
    %v1445 = vld [vmem:[#allocation8 + $0x1010] sm:$0xff]
    %v1446 = vld [vmem:[#allocation8 + $0x1018] sm:$0xff]
    %v1447 = vld [vmem:[#allocation8 + $0x1020] sm:$0xff]
    %v1448 = vld [vmem:[#allocation8 + $0x1028] sm:$0xff]
    %v1449 = vld [vmem:[#allocation8 + $0x1030] sm:$0xff]
    %v1450 = vld [vmem:[#allocation8 + $0x1038] sm:$0xff]
    %v1451 = vld [vmem:[#allocation8 + $0x1040] sm:$0xff]
    %v1452 = vld [vmem:[#allocation8 + $0x1048] sm:$0xff]
    %v1453 = vld [vmem:[#allocation8 + $0x1050] sm:$0xff]
    %v1454 = vld [vmem:[#allocation8 + $0x1058] sm:$0xff]
    %v1455 = vld [vmem:[#allocation8 + $0x1060] sm:$0xff]
    %v1456 = vld [vmem:[#allocation8 + $0x1068] sm:$0xff]
    %v1457 = vld [vmem:[#allocation8 + $0x1070] sm:$0xff]
    %v1458 = vld [vmem:[#allocation8 + $0x1078] sm:$0xff]
    %v1459 = vld [vmem:[#allocation8 + $0x1080] sm:$0xff]
    %v1460 = vld [vmem:[#allocation8 + $0x1088] sm:$0xff]
    %v1461 = vld [vmem:[#allocation8 + $0x1090] sm:$0xff]
    %v1462 = vld [vmem:[#allocation8 + $0x1098] sm:$0xff]
    %v1463 = vld [vmem:[#allocation8 + $0x10a0] sm:$0xff]
    %v1464 = vld [vmem:[#allocation8 + $0x10a8] sm:$0xff]
    %v1465 = vld [vmem:[#allocation8 + $0x10b0] sm:$0xff]
    %v1466 = vld [vmem:[#allocation8 + $0x10b8] sm:$0xff]
    %v1467 = vld [vmem:[#allocation8 + $0x10c0] sm:$0xff]
    %v1468 = vld [vmem:[#allocation8 + $0x10c8] sm:$0xff]
    %v1469 = vld [vmem:[#allocation8 + $0x10d0] sm:$0xff]
    %v1470 = vld [vmem:[#allocation8 + $0x10d8] sm:$0xff]
    %v1471 = vld [vmem:[#allocation8 + $0x10e0] sm:$0xff]
    %v1472 = vld [vmem:[#allocation8 + $0x10e8] sm:$0xff]
    %v1473 = vld [vmem:[#allocation8 + $0x10f0] sm:$0xff]
    %v1474 = vld [vmem:[#allocation8 + $0x10f8] sm:$0xff]
    %v1475 = vld [vmem:[#allocation8 + $0x1100] sm:$0xff]
    %v1476 = vld [vmem:[#allocation8 + $0x1108] sm:$0xff]
    %v1477 = vld [vmem:[#allocation8 + $0x1110] sm:$0xff]
    %v1478 = vld [vmem:[#allocation8 + $0x1118] sm:$0xff]
    %v1479 = vld [vmem:[#allocation8 + $0x1120] sm:$0xff]
    %v1480 = vld [vmem:[#allocation8 + $0x1128] sm:$0xff]
    %v1481 = vld [vmem:[#allocation8 + $0x1130] sm:$0xff]
    %v1482 = vld [vmem:[#allocation8 + $0x1138] sm:$0xff]
    %v1483 = vld [vmem:[#allocation8 + $0x1140] sm:$0xff]
    %v1484 = vld [vmem:[#allocation8 + $0x1148] sm:$0xff]
    %v1485 = vld [vmem:[#allocation8 + $0x1150] sm:$0xff]
    %v1486 = vld [vmem:[#allocation8 + $0x1158] sm:$0xff]
    %v1487 = vld [vmem:[#allocation8 + $0x1160] sm:$0xff]
    %v1488 = vld [vmem:[#allocation8 + $0x1168] sm:$0xff]
    %v1489 = vld [vmem:[#allocation8 + $0x1170] sm:$0xff]
    %v1490 = vld [vmem:[#allocation8 + $0x1178] sm:$0xff]
    %v1491 = vld [vmem:[#allocation8 + $0x1180] sm:$0xff]
    %v1492 = vld [vmem:[#allocation8 + $0x1188] sm:$0xff]
    %v1493 = vld [vmem:[#allocation8 + $0x1190] sm:$0xff]
    %v1494 = vld [vmem:[#allocation8 + $0x1198] sm:$0xff]
    %v1495 = vld [vmem:[#allocation8 + $0x11a0] sm:$0xff]
    %v1496 = vld [vmem:[#allocation8 + $0x11a8] sm:$0xff]
    %v1497 = vld [vmem:[#allocation8 + $0x11b0] sm:$0xff]
    %v1498 = vld [vmem:[#allocation8 + $0x11b8] sm:$0xff]
    %v1499 = vld [vmem:[#allocation8 + $0x11c0] sm:$0xff]
    %v1500 = vld [vmem:[#allocation8 + $0x11c8] sm:$0xff]
    %v1501 = vld [vmem:[#allocation8 + $0x11d0] sm:$0xff]
    %v1502 = vld [vmem:[#allocation8 + $0x11d8] sm:$0xff]
    %v1503 = vld [vmem:[#allocation8 + $0x11e0] sm:$0xff]
    %v1504 = vld [vmem:[#allocation8 + $0x11e8] sm:$0xff]
    %v1505 = vld [vmem:[#allocation8 + $0x11f0] sm:$0xff]
    %v1506 = vld [vmem:[#allocation8 + $0x11f8] sm:$0xff]
    %v1507 = vld [vmem:[#allocation10] sm:$0x3f]
    %v1509 = vlaneseq
    %v1510 = vshrl.u32 %v1509, 7
    %v1511 = vsub.s32 0, %v1510
    %v1512 = vrot.slane %v1507, %v1511
    %v1513 = vlaneseq
    %v1514 = vshrl.u32 %v1513, 7
    %v1515 = vsub.s32 1, %v1514
    %v1516 = vrot.slane %v1507, %v1515
    %v1517 = vlaneseq
    %v1518 = vshrl.u32 %v1517, 7
    %v1519 = vsub.s32 2, %v1518
    %v1520 = vrot.slane %v1507, %v1519
    %v1521 = vlaneseq
    %v1522 = vshrl.u32 %v1521, 7
    %v1523 = vsub.s32 3, %v1522
    %v1524 = vrot.slane %v1507, %v1523
    %v1525 = vlaneseq
    %v1526 = vshrl.u32 %v1525, 7
    %v1527 = vsub.s32 4, %v1526
    %v1528 = vrot.slane %v1507, %v1527
    %v1529 = vlaneseq
    %v1530 = vshrl.u32 %v1529, 7
    %v1531 = vsub.s32 5, %v1530
    %v1532 = vrot.slane %v1507, %v1531
    %1539 = vmatprep.subr.mxu0 %v1022
    %1540 = vmatpush1.msra.mxu0 %v1021
    %1541 = vmatprep.subr.mxu0 %v1016
    %1542 = vmatpush1.msra.mxu0 %v1015
    %1543 = vmatprep.subr.mxu0 %v1010
    %1544 = vmatpush1.msra.mxu0 %v1009
    %1545 = vmatprep.subr.mxu0 %v1004
    %1546 = vmatpush1.msra.mxu0 %v1003
    %1547 = vmatprep.subr.mxu0 %v998
    %1548 = vmatpush1.msra.mxu0 %v997
    %1549 = vmatprep.subr.mxu0 %v992
    %1550 = vmatpush1.msra.mxu0 %v991
    %1551 = vmatprep.subr.mxu0 %v986
    %1552 = vmatpush1.msra.mxu0 %v985
    %1553 = vmatprep.subr.mxu0 %v980
    %1554 = vmatpush1.msra.mxu0 %v979
    %1555 = vmatprep.subr.mxu0 %v974
    %1556 = vmatpush1.msra.mxu0 %v973
    %1557 = vmatprep.subr.mxu0 %v968
    %1558 = vmatpush1.msra.mxu0 %v967
    %1559 = vmatprep.subr.mxu0 %v962
    %1560 = vmatpush1.msra.mxu0 %v961
    %1561 = vmatprep.subr.mxu0 %v956
    %1562 = vmatpush1.msra.mxu0 %v955
    %1563 = vmatprep.subr.mxu0 %v950
    %1564 = vmatpush1.msra.mxu0 %v949
    %1565 = vmatprep.subr.mxu0 %v944
    %1566 = vmatpush1.msra.mxu0 %v943
    %1567 = vmatprep.subr.mxu0 %v938
    %1568 = vmatpush1.msra.mxu0 %v937
    %1569 = vmatprep.subr.mxu0 %v932
    %1570 = vmatpush1.msra.mxu0 %v931
    %1571 = vmatprep.subr.mxu0 %v1118
    %1572 = vmatpush2.msra.mxu0 %v1117
    %1573 = vmatprep.subr.mxu0 %v1112
    %1574 = vmatpush2.msra.mxu0 %v1111
    %1575 = vmatprep.subr.mxu0 %v1106
    %1576 = vmatpush2.msra.mxu0 %v1105
    %1577 = vmatprep.subr.mxu0 %v1100
    %1578 = vmatpush2.msra.mxu0 %v1099
    %1579 = vmatprep.subr.mxu0 %v1094
    %1580 = vmatpush2.msra.mxu0 %v1093
    %1581 = vmatprep.subr.mxu0 %v1088
    %1582 = vmatpush2.msra.mxu0 %v1087
    %1583 = vmatprep.subr.mxu0 %v1082
    %1584 = vmatpush2.msra.mxu0 %v1081
    %1585 = vmatprep.subr.mxu0 %v1076
    %1586 = vmatpush2.msra.mxu0 %v1075
    %1587 = vmatprep.subr.mxu0 %v1070
    %1588 = vmatpush2.msra.mxu0 %v1069
    %1589 = vmatprep.subr.mxu0 %v1064
    %1590 = vmatpush2.msra.mxu0 %v1063
    %1591 = vmatprep.subr.mxu0 %v1058
    %1592 = vmatpush2.msra.mxu0 %v1057
    %1593 = vmatprep.subr.mxu0 %v1052
    %1594 = vmatpush2.msra.mxu0 %v1051
    %1595 = vmatprep.subr.mxu0 %v1046
    %1596 = vmatpush2.msra.mxu0 %v1045
    %1597 = vmatprep.subr.mxu0 %v1040
    %1598 = vmatpush2.msra.mxu0 %v1039
    %1599 = vmatprep.subr.mxu0 %v1034
    %1600 = vmatpush2.msra.mxu0 %v1033
    %1601 = vmatprep.subr.mxu0 %v1028
    %1602 = vmatpush2.msra.mxu0 %v1027
    %1603 = vmatprep.mubr.f32.mxu0 %v740
    %1604 = vmatmul.mubr.f32.gmra.mxu0 %v739
    %v1605 = vpop.f32.mrf.mxu0
    %v1606 = vadd.f32 %v1512, %v1605
    %v1607 = vpop.f32.mrf.mxu0
    %v1608 = vadd.f32 %v1516, %v1607
    %1609 = vmatprep.mubr.f32.mxu0 %v746
    %1610 = vmatmul.mubr.f32.gmra.mxu0 %v745
    %v1611 = vpop.f32.mrf.mxu0
    %v1612 = vadd.f32 %v1512, %v1611
    %v1613 = vpop.f32.mrf.mxu0
    %v1614 = vadd.f32 %v1516, %v1613
    %1615 = vmatprep.mubr.f32.mxu0 %v752
    %1616 = vmatmul.mubr.f32.gmra.mxu0 %v751
    %v1617 = vpop.f32.mrf.mxu0
    %v1618 = vadd.f32 %v1512, %v1617
    %v1619 = vpop.f32.mrf.mxu0
    %v1620 = vadd.f32 %v1516, %v1619
    %1621 = vmatprep.mubr.f32.mxu0 %v758
    %1622 = vmatmul.mubr.f32.gmra.mxu0 %v757
    %v1623 = vpop.f32.mrf.mxu0
    %v1624 = vadd.f32 %v1512, %v1623
    %v1625 = vpop.f32.mrf.mxu0
    %v1626 = vadd.f32 %v1516, %v1625
    %1627 = vmatprep.mubr.f32.mxu0 %v764
    %1628 = vmatmul.mubr.f32.gmra.mxu0 %v763
    %v1629 = vpop.f32.mrf.mxu0
    %v1630 = vadd.f32 %v1512, %v1629
    %v1631 = vpop.f32.mrf.mxu0
    %v1632 = vadd.f32 %v1516, %v1631
    %1633 = vmatprep.mubr.f32.mxu0 %v770
    %1634 = vmatmul.mubr.f32.gmra.mxu0 %v769
    %v1635 = vpop.f32.mrf.mxu0
    %v1636 = vadd.f32 %v1512, %v1635
    %v1637 = vpop.f32.mrf.mxu0
    %v1638 = vadd.f32 %v1516, %v1637
    %1639 = vmatprep.mubr.f32.mxu0 %v776
    %1640 = vmatmul.mubr.f32.gmra.mxu0 %v775
    %v1641 = vpop.f32.mrf.mxu0
    %v1642 = vadd.f32 %v1512, %v1641
    %v1643 = vpop.f32.mrf.mxu0
    %v1644 = vadd.f32 %v1516, %v1643
    %1645 = vmatprep.mubr.f32.mxu0 %v782
    %1646 = vmatmul.mubr.f32.gmra.mxu0 %v781
    %v1647 = vpop.f32.mrf.mxu0
    %v1648 = vadd.f32 %v1512, %v1647
    %v1649 = vpop.f32.mrf.mxu0
    %v1650 = vadd.f32 %v1516, %v1649
    %1651 = vmatprep.mubr.f32.mxu0 %v788
    %1652 = vmatmul.mubr.f32.gmra.mxu0 %v787
    %v1653 = vpop.f32.mrf.mxu0
    %v1654 = vadd.f32 %v1512, %v1653
    %v1655 = vpop.f32.mrf.mxu0
    %v1656 = vadd.f32 %v1516, %v1655
    %1657 = vmatprep.mubr.f32.mxu0 %v794
    %1658 = vmatmul.mubr.f32.gmra.mxu0 %v793
    %v1659 = vpop.f32.mrf.mxu0
    %v1660 = vadd.f32 %v1512, %v1659
    %v1661 = vpop.f32.mrf.mxu0
    %v1662 = vadd.f32 %v1516, %v1661
    %1663 = vmatprep.mubr.f32.mxu0 %v800
    %1664 = vmatmul.mubr.f32.gmra.mxu0 %v799
    %v1665 = vpop.f32.mrf.mxu0
    %v1666 = vadd.f32 %v1512, %v1665
    %v1667 = vpop.f32.mrf.mxu0
    %v1668 = vadd.f32 %v1516, %v1667
    %1669 = vmatprep.mubr.f32.mxu0 %v806
    %1670 = vmatmul.mubr.f32.gmra.mxu0 %v805
    %v1671 = vpop.f32.mrf.mxu0
    %v1672 = vadd.f32 %v1512, %v1671
    %v1673 = vpop.f32.mrf.mxu0
    %v1674 = vadd.f32 %v1516, %v1673
    %1675 = vmatprep.mubr.f32.mxu0 %v812
    %1676 = vmatmul.mubr.f32.gmra.mxu0 %v811
    %v1677 = vpop.f32.mrf.mxu0
    %v1678 = vadd.f32 %v1512, %v1677
    %v1679 = vpop.f32.mrf.mxu0
    %v1680 = vadd.f32 %v1516, %v1679
    %1681 = vmatprep.mubr.f32.mxu0 %v818
    %1682 = vmatmul.mubr.f32.gmra.mxu0 %v817
    %v1683 = vpop.f32.mrf.mxu0
    %v1684 = vadd.f32 %v1512, %v1683
    %v1685 = vpop.f32.mrf.mxu0
    %v1686 = vadd.f32 %v1516, %v1685
    %1687 = vmatprep.mubr.f32.mxu0 %v824
    %1688 = vmatmul.mubr.f32.gmra.mxu0 %v823
    %v1689 = vpop.f32.mrf.mxu0
    %v1690 = vadd.f32 %v1512, %v1689
    %v1691 = vpop.f32.mrf.mxu0
    %v1692 = vadd.f32 %v1516, %v1691
    %1693 = vmatprep.mubr.f32.mxu0 %v830
    %1694 = vmatmul.mubr.f32.gmra.mxu0 %v829
    %v1695 = vpop.f32.mrf.mxu0
    %v1696 = vadd.f32 %v1512, %v1695
    %v1697 = vpop.f32.mrf.mxu0
    %v1698 = vadd.f32 %v1516, %v1697
    %1699 = vmatprep.mubr.f32.mxu0 %v836
    %1700 = vmatmul.mubr.f32.gmra.mxu0 %v835
    %v1701 = vpop.f32.mrf.mxu0
    %v1702 = vadd.f32 %v1512, %v1701
    %v1703 = vpop.f32.mrf.mxu0
    %v1704 = vadd.f32 %v1516, %v1703
    %1705 = vmatprep.mubr.f32.mxu0 %v842
    %1706 = vmatmul.mubr.f32.gmra.mxu0 %v841
    %v1707 = vpop.f32.mrf.mxu0
    %v1708 = vadd.f32 %v1512, %v1707
    %v1709 = vpop.f32.mrf.mxu0
    %v1710 = vadd.f32 %v1516, %v1709
    %1711 = vmatprep.mubr.f32.mxu0 %v848
    %1712 = vmatmul.mubr.f32.gmra.mxu0 %v847
    %v1713 = vpop.f32.mrf.mxu0
    %v1714 = vadd.f32 %v1512, %v1713
    %v1715 = vpop.f32.mrf.mxu0
    %v1716 = vadd.f32 %v1516, %v1715
    %1717 = vmatprep.mubr.f32.mxu0 %v854
    %1718 = vmatmul.mubr.f32.gmra.mxu0 %v853
    %v1719 = vpop.f32.mrf.mxu0
    %v1720 = vadd.f32 %v1512, %v1719
    %v1721 = vpop.f32.mrf.mxu0
    %v1722 = vadd.f32 %v1516, %v1721
    %1723 = vmatprep.mubr.f32.mxu0 %v860
    %1724 = vmatmul.mubr.f32.gmra.mxu0 %v859
    %v1725 = vpop.f32.mrf.mxu0
    %v1726 = vadd.f32 %v1512, %v1725
    %v1727 = vpop.f32.mrf.mxu0
    %v1728 = vadd.f32 %v1516, %v1727
    %1729 = vmatprep.mubr.f32.mxu0 %v866
    %1730 = vmatmul.mubr.f32.gmra.mxu0 %v865
    %v1731 = vpop.f32.mrf.mxu0
    %v1732 = vadd.f32 %v1512, %v1731
    %v1733 = vpop.f32.mrf.mxu0
    %v1734 = vadd.f32 %v1516, %v1733
    %1735 = vmatprep.mubr.f32.mxu0 %v872
    %1736 = vmatmul.mubr.f32.gmra.mxu0 %v871
    %v1737 = vpop.f32.mrf.mxu0
    %v1738 = vadd.f32 %v1512, %v1737
    %v1739 = vpop.f32.mrf.mxu0
    %v1740 = vadd.f32 %v1516, %v1739
    %1741 = vmatprep.mubr.f32.mxu0 %v878
    %1742 = vmatmul.mubr.f32.gmra.mxu0 %v877
    %v1743 = vpop.f32.mrf.mxu0
    %v1744 = vadd.f32 %v1512, %v1743
    %v1745 = vpop.f32.mrf.mxu0
    %v1746 = vadd.f32 %v1516, %v1745
    %1747 = vmatprep.mubr.f32.mxu0 %v884
    %1748 = vmatmul.mubr.f32.gmra.mxu0 %v883
    %v1749 = vpop.f32.mrf.mxu0
    %v1750 = vadd.f32 %v1512, %v1749
    %v1751 = vpop.f32.mrf.mxu0
    %v1752 = vadd.f32 %v1516, %v1751
    %1753 = vmatprep.mubr.f32.mxu0 %v890
    %1754 = vmatmul.mubr.f32.gmra.mxu0 %v889
    %v1755 = vpop.f32.mrf.mxu0
    %v1756 = vadd.f32 %v1512, %v1755
    %v1757 = vpop.f32.mrf.mxu0
    %v1758 = vadd.f32 %v1516, %v1757
    %1759 = vmatprep.mubr.f32.mxu0 %v896
    %1760 = vmatmul.mubr.f32.gmra.mxu0 %v895
    %v1761 = vpop.f32.mrf.mxu0
    %v1762 = vadd.f32 %v1512, %v1761
    %v1763 = vpop.f32.mrf.mxu0
    %v1764 = vadd.f32 %v1516, %v1763
    %1765 = vmatprep.mubr.f32.mxu0 %v902
    %1766 = vmatmul.mubr.f32.gmra.mxu0 %v901
    %v1767 = vpop.f32.mrf.mxu0
    %v1768 = vadd.f32 %v1512, %v1767
    %v1769 = vpop.f32.mrf.mxu0
    %v1770 = vadd.f32 %v1516, %v1769
    %1771 = vmatprep.mubr.f32.mxu0 %v908
    %1772 = vmatmul.mubr.f32.gmra.mxu0 %v907
    %v1773 = vpop.f32.mrf.mxu0
    %v1774 = vadd.f32 %v1512, %v1773
    %v1775 = vpop.f32.mrf.mxu0
    %v1776 = vadd.f32 %v1516, %v1775
    %1777 = vmatprep.mubr.f32.mxu0 %v914
    %1778 = vmatmul.mubr.f32.gmra.mxu0 %v913
    %v1779 = vpop.f32.mrf.mxu0
    %v1780 = vadd.f32 %v1512, %v1779
    %v1781 = vpop.f32.mrf.mxu0
    %v1782 = vadd.f32 %v1516, %v1781
    %1783 = vmatprep.mubr.f32.mxu0 %v920
    %1784 = vmatmul.mubr.f32.gmra.mxu0 %v919
    %v1785 = vpop.f32.mrf.mxu0
    %v1786 = vadd.f32 %v1512, %v1785
    %v1787 = vpop.f32.mrf.mxu0
    %v1788 = vadd.f32 %v1516, %v1787
    %1789 = vmatprep.mubr.f32.mxu0 %v926
    %1790 = vmatmul.mubr.f32.gmra.mxu0 %v925
    %v1791 = vpop.f32.mrf.mxu0
    %v1792 = vadd.f32 %v1512, %v1791
    %v1793 = vpop.f32.mrf.mxu0
    %v1794 = vadd.f32 %v1516, %v1793
    %1795 = vdwg.mxu0
    %1796 = vmatprep.subr.mxu0 %v1214
    %1797 = vmatpush1.msra.mxu0 %v1213
    %1798 = vmatprep.subr.mxu0 %v1208
    %1799 = vmatpush1.msra.mxu0 %v1207
    %1800 = vmatprep.subr.mxu0 %v1202
    %1801 = vmatpush1.msra.mxu0 %v1201
    %1802 = vmatprep.subr.mxu0 %v1196
    %1803 = vmatpush1.msra.mxu0 %v1195
    %1804 = vmatprep.subr.mxu0 %v1190
    %1805 = vmatpush1.msra.mxu0 %v1189
    %1806 = vmatprep.subr.mxu0 %v1184
    %1807 = vmatpush1.msra.mxu0 %v1183
    %1808 = vmatprep.subr.mxu0 %v1178
    %1809 = vmatpush1.msra.mxu0 %v1177
    %1810 = vmatprep.subr.mxu0 %v1172
    %1811 = vmatpush1.msra.mxu0 %v1171
    %1812 = vmatprep.subr.mxu0 %v1166
    %1813 = vmatpush1.msra.mxu0 %v1165
    %1814 = vmatprep.subr.mxu0 %v1160
    %1815 = vmatpush1.msra.mxu0 %v1159
    %1816 = vmatprep.subr.mxu0 %v1154
    %1817 = vmatpush1.msra.mxu0 %v1153
    %1818 = vmatprep.subr.mxu0 %v1148
    %1819 = vmatpush1.msra.mxu0 %v1147
    %1820 = vmatprep.subr.mxu0 %v1142
    %1821 = vmatpush1.msra.mxu0 %v1141
    %1822 = vmatprep.subr.mxu0 %v1136
    %1823 = vmatpush1.msra.mxu0 %v1135
    %1824 = vmatprep.subr.mxu0 %v1130
    %1825 = vmatpush1.msra.mxu0 %v1129
    %1826 = vmatprep.subr.mxu0 %v1124
    %1827 = vmatpush1.msra.mxu0 %v1123
    %1828 = vmatprep.subr.mxu0 %v1310
    %1829 = vmatpush2.msra.mxu0 %v1309
    %1830 = vmatprep.subr.mxu0 %v1304
    %1831 = vmatpush2.msra.mxu0 %v1303
    %1832 = vmatprep.subr.mxu0 %v1298
    %1833 = vmatpush2.msra.mxu0 %v1297
    %1834 = vmatprep.subr.mxu0 %v1292
    %1835 = vmatpush2.msra.mxu0 %v1291
    %1836 = vmatprep.subr.mxu0 %v1286
    %1837 = vmatpush2.msra.mxu0 %v1285
    %1838 = vmatprep.subr.mxu0 %v1280
    %1839 = vmatpush2.msra.mxu0 %v1279
    %1840 = vmatprep.subr.mxu0 %v1274
    %1841 = vmatpush2.msra.mxu0 %v1273
    %1842 = vmatprep.subr.mxu0 %v1268
    %1843 = vmatpush2.msra.mxu0 %v1267
    %1844 = vmatprep.subr.mxu0 %v1262
    %1845 = vmatpush2.msra.mxu0 %v1261
    %1846 = vmatprep.subr.mxu0 %v1256
    %1847 = vmatpush2.msra.mxu0 %v1255
    %1848 = vmatprep.subr.mxu0 %v1250
    %1849 = vmatpush2.msra.mxu0 %v1249
    %1850 = vmatprep.subr.mxu0 %v1244
    %1851 = vmatpush2.msra.mxu0 %v1243
    %1852 = vmatprep.subr.mxu0 %v1238
    %1853 = vmatpush2.msra.mxu0 %v1237
    %1854 = vmatprep.subr.mxu0 %v1232
    %1855 = vmatpush2.msra.mxu0 %v1231
    %1856 = vmatprep.subr.mxu0 %v1226
    %1857 = vmatpush2.msra.mxu0 %v1225
    %1858 = vmatprep.subr.mxu0 %v1220
    %1859 = vmatpush2.msra.mxu0 %v1219
    %1860 = vmatprep.mubr.f32.mxu0 %v742
    %1861 = vmatmul.mubr.f32.gmra.mxu0 %v741
    %v1862 = vpop.f32.mrf.mxu0
    %v1863 = vadd.f32 %v1606, %v1862
    %v1864 = vpop.f32.mrf.mxu0
    %v1865 = vadd.f32 %v1608, %v1864
    %1866 = vmatprep.mubr.f32.mxu0 %v748
    %1867 = vmatmul.mubr.f32.gmra.mxu0 %v747
    %v1868 = vpop.f32.mrf.mxu0
    %v1869 = vadd.f32 %v1612, %v1868
    %v1870 = vpop.f32.mrf.mxu0
    %v1871 = vadd.f32 %v1614, %v1870
    %1872 = vmatprep.mubr.f32.mxu0 %v754
    %1873 = vmatmul.mubr.f32.gmra.mxu0 %v753
    %v1874 = vpop.f32.mrf.mxu0
    %v1875 = vadd.f32 %v1618, %v1874
    %v1876 = vpop.f32.mrf.mxu0
    %v1877 = vadd.f32 %v1620, %v1876
    %1878 = vmatprep.mubr.f32.mxu0 %v760
    %1879 = vmatmul.mubr.f32.gmra.mxu0 %v759
    %v1880 = vpop.f32.mrf.mxu0
    %v1881 = vadd.f32 %v1624, %v1880
    %v1882 = vpop.f32.mrf.mxu0
    %v1883 = vadd.f32 %v1626, %v1882
    %1884 = vmatprep.mubr.f32.mxu0 %v766
    %1885 = vmatmul.mubr.f32.gmra.mxu0 %v765
    %v1886 = vpop.f32.mrf.mxu0
    %v1887 = vadd.f32 %v1630, %v1886
    %v1888 = vpop.f32.mrf.mxu0
    %v1889 = vadd.f32 %v1632, %v1888
    %1890 = vmatprep.mubr.f32.mxu0 %v772
    %1891 = vmatmul.mubr.f32.gmra.mxu0 %v771
    %v1892 = vpop.f32.mrf.mxu0
    %v1893 = vadd.f32 %v1636, %v1892
    %v1894 = vpop.f32.mrf.mxu0
    %v1895 = vadd.f32 %v1638, %v1894
    %1896 = vmatprep.mubr.f32.mxu0 %v778
    %1897 = vmatmul.mubr.f32.gmra.mxu0 %v777
    %v1898 = vpop.f32.mrf.mxu0
    %v1899 = vadd.f32 %v1642, %v1898
    %v1900 = vpop.f32.mrf.mxu0
    %v1901 = vadd.f32 %v1644, %v1900
    %1902 = vmatprep.mubr.f32.mxu0 %v784
    %1903 = vmatmul.mubr.f32.gmra.mxu0 %v783
    %v1904 = vpop.f32.mrf.mxu0
    %v1905 = vadd.f32 %v1648, %v1904
    %v1906 = vpop.f32.mrf.mxu0
    %v1907 = vadd.f32 %v1650, %v1906
    %1908 = vmatprep.mubr.f32.mxu0 %v790
    %1909 = vmatmul.mubr.f32.gmra.mxu0 %v789
    %v1910 = vpop.f32.mrf.mxu0
    %v1911 = vadd.f32 %v1654, %v1910
    %v1912 = vpop.f32.mrf.mxu0
    %v1913 = vadd.f32 %v1656, %v1912
    %1914 = vmatprep.mubr.f32.mxu0 %v796
    %1915 = vmatmul.mubr.f32.gmra.mxu0 %v795
    %v1916 = vpop.f32.mrf.mxu0
    %v1917 = vadd.f32 %v1660, %v1916
    %v1918 = vpop.f32.mrf.mxu0
    %v1919 = vadd.f32 %v1662, %v1918
    %1920 = vmatprep.mubr.f32.mxu0 %v802
    %1921 = vmatmul.mubr.f32.gmra.mxu0 %v801
    %v1922 = vpop.f32.mrf.mxu0
    %v1923 = vadd.f32 %v1666, %v1922
    %v1924 = vpop.f32.mrf.mxu0
    %v1925 = vadd.f32 %v1668, %v1924
    %1926 = vmatprep.mubr.f32.mxu0 %v808
    %1927 = vmatmul.mubr.f32.gmra.mxu0 %v807
    %v1928 = vpop.f32.mrf.mxu0
    %v1929 = vadd.f32 %v1672, %v1928
    %v1930 = vpop.f32.mrf.mxu0
    %v1931 = vadd.f32 %v1674, %v1930
    %1932 = vmatprep.mubr.f32.mxu0 %v814
    %1933 = vmatmul.mubr.f32.gmra.mxu0 %v813
    %v1934 = vpop.f32.mrf.mxu0
    %v1935 = vadd.f32 %v1678, %v1934
    %v1936 = vpop.f32.mrf.mxu0
    %v1937 = vadd.f32 %v1680, %v1936
    %1938 = vmatprep.mubr.f32.mxu0 %v820
    %1939 = vmatmul.mubr.f32.gmra.mxu0 %v819
    %v1940 = vpop.f32.mrf.mxu0
    %v1941 = vadd.f32 %v1684, %v1940
    %v1942 = vpop.f32.mrf.mxu0
    %v1943 = vadd.f32 %v1686, %v1942
    %1944 = vmatprep.mubr.f32.mxu0 %v826
    %1945 = vmatmul.mubr.f32.gmra.mxu0 %v825
    %v1946 = vpop.f32.mrf.mxu0
    %v1947 = vadd.f32 %v1690, %v1946
    %v1948 = vpop.f32.mrf.mxu0
    %v1949 = vadd.f32 %v1692, %v1948
    %1950 = vmatprep.mubr.f32.mxu0 %v832
    %1951 = vmatmul.mubr.f32.gmra.mxu0 %v831
    %v1952 = vpop.f32.mrf.mxu0
    %v1953 = vadd.f32 %v1696, %v1952
    %v1954 = vpop.f32.mrf.mxu0
    %v1955 = vadd.f32 %v1698, %v1954
    %1956 = vmatprep.mubr.f32.mxu0 %v838
    %1957 = vmatmul.mubr.f32.gmra.mxu0 %v837
    %v1958 = vpop.f32.mrf.mxu0
    %v1959 = vadd.f32 %v1702, %v1958
    %v1960 = vpop.f32.mrf.mxu0
    %v1961 = vadd.f32 %v1704, %v1960
    %1962 = vmatprep.mubr.f32.mxu0 %v844
    %1963 = vmatmul.mubr.f32.gmra.mxu0 %v843
    %v1964 = vpop.f32.mrf.mxu0
    %v1965 = vadd.f32 %v1708, %v1964
    %v1966 = vpop.f32.mrf.mxu0
    %v1967 = vadd.f32 %v1710, %v1966
    %1968 = vmatprep.mubr.f32.mxu0 %v850
    %1969 = vmatmul.mubr.f32.gmra.mxu0 %v849
    %v1970 = vpop.f32.mrf.mxu0
    %v1971 = vadd.f32 %v1714, %v1970
    %v1972 = vpop.f32.mrf.mxu0
    %v1973 = vadd.f32 %v1716, %v1972
    %1974 = vmatprep.mubr.f32.mxu0 %v856
    %1975 = vmatmul.mubr.f32.gmra.mxu0 %v855
    %v1976 = vpop.f32.mrf.mxu0
    %v1977 = vadd.f32 %v1720, %v1976
    %v1978 = vpop.f32.mrf.mxu0
    %v1979 = vadd.f32 %v1722, %v1978
    %1980 = vmatprep.mubr.f32.mxu0 %v862
    %1981 = vmatmul.mubr.f32.gmra.mxu0 %v861
    %v1982 = vpop.f32.mrf.mxu0
    %v1983 = vadd.f32 %v1726, %v1982
    %v1984 = vpop.f32.mrf.mxu0
    %v1985 = vadd.f32 %v1728, %v1984
    %1986 = vmatprep.mubr.f32.mxu0 %v868
    %1987 = vmatmul.mubr.f32.gmra.mxu0 %v867
    %v1988 = vpop.f32.mrf.mxu0
    %v1989 = vadd.f32 %v1732, %v1988
    %v1990 = vpop.f32.mrf.mxu0
    %v1991 = vadd.f32 %v1734, %v1990
    %1992 = vmatprep.mubr.f32.mxu0 %v874
    %1993 = vmatmul.mubr.f32.gmra.mxu0 %v873
    %v1994 = vpop.f32.mrf.mxu0
    %v1995 = vadd.f32 %v1738, %v1994
    %v1996 = vpop.f32.mrf.mxu0
    %v1997 = vadd.f32 %v1740, %v1996
    %1998 = vmatprep.mubr.f32.mxu0 %v880
    %1999 = vmatmul.mubr.f32.gmra.mxu0 %v879
    %v2000 = vpop.f32.mrf.mxu0
    %v2001 = vadd.f32 %v1744, %v2000
    %v2002 = vpop.f32.mrf.mxu0
    %v2003 = vadd.f32 %v1746, %v2002
    %2004 = vmatprep.mubr.f32.mxu0 %v886
    %2005 = vmatmul.mubr.f32.gmra.mxu0 %v885
    %v2006 = vpop.f32.mrf.mxu0
    %v2007 = vadd.f32 %v1750, %v2006
    %v2008 = vpop.f32.mrf.mxu0
    %v2009 = vadd.f32 %v1752, %v2008
    %2010 = vmatprep.mubr.f32.mxu0 %v892
    %2011 = vmatmul.mubr.f32.gmra.mxu0 %v891
    %v2012 = vpop.f32.mrf.mxu0
    %v2013 = vadd.f32 %v1756, %v2012
    %v2014 = vpop.f32.mrf.mxu0
    %v2015 = vadd.f32 %v1758, %v2014
    %2016 = vmatprep.mubr.f32.mxu0 %v898
    %2017 = vmatmul.mubr.f32.gmra.mxu0 %v897
    %v2018 = vpop.f32.mrf.mxu0
    %v2019 = vadd.f32 %v1762, %v2018
    %v2020 = vpop.f32.mrf.mxu0
    %v2021 = vadd.f32 %v1764, %v2020
    %2022 = vmatprep.mubr.f32.mxu0 %v904
    %2023 = vmatmul.mubr.f32.gmra.mxu0 %v903
    %v2024 = vpop.f32.mrf.mxu0
    %v2025 = vadd.f32 %v1768, %v2024
    %v2026 = vpop.f32.mrf.mxu0
    %v2027 = vadd.f32 %v1770, %v2026
    %2028 = vmatprep.mubr.f32.mxu0 %v910
    %2029 = vmatmul.mubr.f32.gmra.mxu0 %v909
    %v2030 = vpop.f32.mrf.mxu0
    %v2031 = vadd.f32 %v1774, %v2030
    %v2032 = vpop.f32.mrf.mxu0
    %v2033 = vadd.f32 %v1776, %v2032
    %2034 = vmatprep.mubr.f32.mxu0 %v916
    %2035 = vmatmul.mubr.f32.gmra.mxu0 %v915
    %v2036 = vpop.f32.mrf.mxu0
    %v2037 = vadd.f32 %v1780, %v2036
    %v2038 = vpop.f32.mrf.mxu0
    %v2039 = vadd.f32 %v1782, %v2038
    %2040 = vmatprep.mubr.f32.mxu0 %v922
    %2041 = vmatmul.mubr.f32.gmra.mxu0 %v921
    %v2042 = vpop.f32.mrf.mxu0
    %v2043 = vadd.f32 %v1786, %v2042
    %v2044 = vpop.f32.mrf.mxu0
    %v2045 = vadd.f32 %v1788, %v2044
    %2046 = vmatprep.mubr.f32.mxu0 %v928
    %2047 = vmatmul.mubr.f32.gmra.mxu0 %v927
    %v2048 = vpop.f32.mrf.mxu0
    %v2049 = vadd.f32 %v1792, %v2048
    %v2050 = vpop.f32.mrf.mxu0
    %v2051 = vadd.f32 %v1794, %v2050
    %2052 = vdwg.mxu0
    %2053 = vmatprep.subr.mxu0 %v1406
    %2054 = vmatpush1.msra.mxu0 %v1405
    %2055 = vmatprep.subr.mxu0 %v1400
    %2056 = vmatpush1.msra.mxu0 %v1399
    %2057 = vmatprep.subr.mxu0 %v1394
    %2058 = vmatpush1.msra.mxu0 %v1393
    %2059 = vmatprep.subr.mxu0 %v1388
    %2060 = vmatpush1.msra.mxu0 %v1387
    %2061 = vmatprep.subr.mxu0 %v1382
    %2062 = vmatpush1.msra.mxu0 %v1381
    %2063 = vmatprep.subr.mxu0 %v1376
    %2064 = vmatpush1.msra.mxu0 %v1375
    %2065 = vmatprep.subr.mxu0 %v1370
    %2066 = vmatpush1.msra.mxu0 %v1369
    %2067 = vmatprep.subr.mxu0 %v1364
    %2068 = vmatpush1.msra.mxu0 %v1363
    %2069 = vmatprep.subr.mxu0 %v1358
    %2070 = vmatpush1.msra.mxu0 %v1357
    %2071 = vmatprep.subr.mxu0 %v1352
    %2072 = vmatpush1.msra.mxu0 %v1351
    %2073 = vmatprep.subr.mxu0 %v1346
    %2074 = vmatpush1.msra.mxu0 %v1345
    %2075 = vmatprep.subr.mxu0 %v1340
    %2076 = vmatpush1.msra.mxu0 %v1339
    %2077 = vmatprep.subr.mxu0 %v1334
    %2078 = vmatpush1.msra.mxu0 %v1333
    %2079 = vmatprep.subr.mxu0 %v1328
    %2080 = vmatpush1.msra.mxu0 %v1327
    %2081 = vmatprep.subr.mxu0 %v1322
    %2082 = vmatpush1.msra.mxu0 %v1321
    %2083 = vmatprep.subr.mxu0 %v1316
    %2084 = vmatpush1.msra.mxu0 %v1315
    %2085 = vmatprep.subr.mxu0 %v1502
    %2086 = vmatpush2.msra.mxu0 %v1501
    %2087 = vmatprep.subr.mxu0 %v1496
    %2088 = vmatpush2.msra.mxu0 %v1495
    %2089 = vmatprep.subr.mxu0 %v1490
    %2090 = vmatpush2.msra.mxu0 %v1489
    %2091 = vmatprep.subr.mxu0 %v1484
    %2092 = vmatpush2.msra.mxu0 %v1483
    %2093 = vmatprep.subr.mxu0 %v1478
    %2094 = vmatpush2.msra.mxu0 %v1477
    %2095 = vmatprep.subr.mxu0 %v1472
    %2096 = vmatpush2.msra.mxu0 %v1471
    %2097 = vmatprep.subr.mxu0 %v1466
    %2098 = vmatpush2.msra.mxu0 %v1465
    %2099 = vmatprep.subr.mxu0 %v1460
    %2100 = vmatpush2.msra.mxu0 %v1459
    %2101 = vmatprep.subr.mxu0 %v1454
    %2102 = vmatpush2.msra.mxu0 %v1453
    %2103 = vmatprep.subr.mxu0 %v1448
    %2104 = vmatpush2.msra.mxu0 %v1447
    %2105 = vmatprep.subr.mxu0 %v1442
    %2106 = vmatpush2.msra.mxu0 %v1441
    %2107 = vmatprep.subr.mxu0 %v1436
    %2108 = vmatpush2.msra.mxu0 %v1435
    %2109 = vmatprep.subr.mxu0 %v1430
    %2110 = vmatpush2.msra.mxu0 %v1429
    %2111 = vmatprep.subr.mxu0 %v1424
    %2112 = vmatpush2.msra.mxu0 %v1423
    %2113 = vmatprep.subr.mxu0 %v1418
    %2114 = vmatpush2.msra.mxu0 %v1417
    %2115 = vmatprep.subr.mxu0 %v1412
    %2116 = vmatpush2.msra.mxu0 %v1411
    %2117 = vmatprep.mubr.f32.mxu0 %v744
    %2118 = vmatmul.mubr.f32.gmra.mxu0 %v743
    %v2119 = vpop.f32.mrf.mxu0
    %v2120 = vadd.f32 %v1863, %v2119
    %v2121 = vpop.f32.mrf.mxu0
    %v2122 = vadd.f32 %v1865, %v2121
    %2123 = vmatprep.mubr.f32.mxu0 %v750
    %2124 = vmatmul.mubr.f32.gmra.mxu0 %v749
    %v2125 = vpop.f32.mrf.mxu0
    %v2126 = vadd.f32 %v1869, %v2125
    %v2127 = vpop.f32.mrf.mxu0
    %v2128 = vadd.f32 %v1871, %v2127
    %2129 = vmatprep.mubr.f32.mxu0 %v756
    %2130 = vmatmul.mubr.f32.gmra.mxu0 %v755
    %v2131 = vpop.f32.mrf.mxu0
    %v2132 = vadd.f32 %v1875, %v2131
    %v2133 = vpop.f32.mrf.mxu0
    %v2134 = vadd.f32 %v1877, %v2133
    %2135 = vmatprep.mubr.f32.mxu0 %v762
    %2136 = vmatmul.mubr.f32.gmra.mxu0 %v761
    %v2137 = vpop.f32.mrf.mxu0
    %v2138 = vadd.f32 %v1881, %v2137
    %v2139 = vpop.f32.mrf.mxu0
    %v2140 = vadd.f32 %v1883, %v2139
    %2141 = vmatprep.mubr.f32.mxu0 %v768
    %2142 = vmatmul.mubr.f32.gmra.mxu0 %v767
    %v2143 = vpop.f32.mrf.mxu0
    %v2144 = vadd.f32 %v1887, %v2143
    %v2145 = vpop.f32.mrf.mxu0
    %v2146 = vadd.f32 %v1889, %v2145
    %2147 = vmatprep.mubr.f32.mxu0 %v774
    %2148 = vmatmul.mubr.f32.gmra.mxu0 %v773
    %v2149 = vpop.f32.mrf.mxu0
    %v2150 = vadd.f32 %v1893, %v2149
    %v2151 = vpop.f32.mrf.mxu0
    %v2152 = vadd.f32 %v1895, %v2151
    %2153 = vmatprep.mubr.f32.mxu0 %v780
    %2154 = vmatmul.mubr.f32.gmra.mxu0 %v779
    %v2155 = vpop.f32.mrf.mxu0
    %v2156 = vadd.f32 %v1899, %v2155
    %v2157 = vpop.f32.mrf.mxu0
    %v2158 = vadd.f32 %v1901, %v2157
    %2159 = vmatprep.mubr.f32.mxu0 %v786
    %2160 = vmatmul.mubr.f32.gmra.mxu0 %v785
    %v2161 = vpop.f32.mrf.mxu0
    %v2162 = vadd.f32 %v1905, %v2161
    %v2163 = vpop.f32.mrf.mxu0
    %v2164 = vadd.f32 %v1907, %v2163
    %2165 = vmatprep.mubr.f32.mxu0 %v792
    %2166 = vmatmul.mubr.f32.gmra.mxu0 %v791
    %v2167 = vpop.f32.mrf.mxu0
    %v2168 = vadd.f32 %v1911, %v2167
    %v2169 = vpop.f32.mrf.mxu0
    %v2170 = vadd.f32 %v1913, %v2169
    %2171 = vmatprep.mubr.f32.mxu0 %v798
    %2172 = vmatmul.mubr.f32.gmra.mxu0 %v797
    %v2173 = vpop.f32.mrf.mxu0
    %v2174 = vadd.f32 %v1917, %v2173
    %v2175 = vpop.f32.mrf.mxu0
    %v2176 = vadd.f32 %v1919, %v2175
    %2177 = vmatprep.mubr.f32.mxu0 %v804
    %2178 = vmatmul.mubr.f32.gmra.mxu0 %v803
    %v2179 = vpop.f32.mrf.mxu0
    %v2180 = vadd.f32 %v1923, %v2179
    %v2181 = vpop.f32.mrf.mxu0
    %v2182 = vadd.f32 %v1925, %v2181
    %2183 = vmatprep.mubr.f32.mxu0 %v810
    %2184 = vmatmul.mubr.f32.gmra.mxu0 %v809
    %v2185 = vpop.f32.mrf.mxu0
    %v2186 = vadd.f32 %v1929, %v2185
    %v2187 = vpop.f32.mrf.mxu0
    %v2188 = vadd.f32 %v1931, %v2187
    %2189 = vmatprep.mubr.f32.mxu0 %v816
    %2190 = vmatmul.mubr.f32.gmra.mxu0 %v815
    %v2191 = vpop.f32.mrf.mxu0
    %v2192 = vadd.f32 %v1935, %v2191
    %v2193 = vpop.f32.mrf.mxu0
    %v2194 = vadd.f32 %v1937, %v2193
    %2195 = vmatprep.mubr.f32.mxu0 %v822
    %2196 = vmatmul.mubr.f32.gmra.mxu0 %v821
    %v2197 = vpop.f32.mrf.mxu0
    %v2198 = vadd.f32 %v1941, %v2197
    %v2199 = vpop.f32.mrf.mxu0
    %v2200 = vadd.f32 %v1943, %v2199
    %2201 = vmatprep.mubr.f32.mxu0 %v828
    %2202 = vmatmul.mubr.f32.gmra.mxu0 %v827
    %v2203 = vpop.f32.mrf.mxu0
    %v2204 = vadd.f32 %v1947, %v2203
    %v2205 = vpop.f32.mrf.mxu0
    %v2206 = vadd.f32 %v1949, %v2205
    %2207 = vmatprep.mubr.f32.mxu0 %v834
    %2208 = vmatmul.mubr.f32.gmra.mxu0 %v833
    %v2209 = vpop.f32.mrf.mxu0
    %v2210 = vadd.f32 %v1953, %v2209
    %v2211 = vpop.f32.mrf.mxu0
    %v2212 = vadd.f32 %v1955, %v2211
    %2213 = vmatprep.mubr.f32.mxu0 %v840
    %2214 = vmatmul.mubr.f32.gmra.mxu0 %v839
    %v2215 = vpop.f32.mrf.mxu0
    %v2216 = vadd.f32 %v1959, %v2215
    %v2217 = vpop.f32.mrf.mxu0
    %v2218 = vadd.f32 %v1961, %v2217
    %2219 = vmatprep.mubr.f32.mxu0 %v846
    %2220 = vmatmul.mubr.f32.gmra.mxu0 %v845
    %v2221 = vpop.f32.mrf.mxu0
    %v2222 = vadd.f32 %v1965, %v2221
    %v2223 = vpop.f32.mrf.mxu0
    %v2224 = vadd.f32 %v1967, %v2223
    %2225 = vmatprep.mubr.f32.mxu0 %v852
    %2226 = vmatmul.mubr.f32.gmra.mxu0 %v851
    %v2227 = vpop.f32.mrf.mxu0
    %v2228 = vadd.f32 %v1971, %v2227
    %v2229 = vpop.f32.mrf.mxu0
    %v2230 = vadd.f32 %v1973, %v2229
    %2231 = vmatprep.mubr.f32.mxu0 %v858
    %2232 = vmatmul.mubr.f32.gmra.mxu0 %v857
    %v2233 = vpop.f32.mrf.mxu0
    %v2234 = vadd.f32 %v1977, %v2233
    %v2235 = vpop.f32.mrf.mxu0
    %v2236 = vadd.f32 %v1979, %v2235
    %2237 = vmatprep.mubr.f32.mxu0 %v864
    %2238 = vmatmul.mubr.f32.gmra.mxu0 %v863
    %v2239 = vpop.f32.mrf.mxu0
    %v2240 = vadd.f32 %v1983, %v2239
    %v2241 = vpop.f32.mrf.mxu0
    %v2242 = vadd.f32 %v1985, %v2241
    %2243 = vmatprep.mubr.f32.mxu0 %v870
    %2244 = vmatmul.mubr.f32.gmra.mxu0 %v869
    %v2245 = vpop.f32.mrf.mxu0
    %v2246 = vadd.f32 %v1989, %v2245
    %v2247 = vpop.f32.mrf.mxu0
    %v2248 = vadd.f32 %v1991, %v2247
    %2249 = vmatprep.mubr.f32.mxu0 %v876
    %2250 = vmatmul.mubr.f32.gmra.mxu0 %v875
    %v2251 = vpop.f32.mrf.mxu0
    %v2252 = vadd.f32 %v1995, %v2251
    %v2253 = vpop.f32.mrf.mxu0
    %v2254 = vadd.f32 %v1997, %v2253
    %2255 = vmatprep.mubr.f32.mxu0 %v882
    %2256 = vmatmul.mubr.f32.gmra.mxu0 %v881
    %v2257 = vpop.f32.mrf.mxu0
    %v2258 = vadd.f32 %v2001, %v2257
    %v2259 = vpop.f32.mrf.mxu0
    %v2260 = vadd.f32 %v2003, %v2259
    %2261 = vmatprep.mubr.f32.mxu0 %v888
    %2262 = vmatmul.mubr.f32.gmra.mxu0 %v887
    %v2263 = vpop.f32.mrf.mxu0
    %v2264 = vadd.f32 %v2007, %v2263
    %v2265 = vpop.f32.mrf.mxu0
    %v2266 = vadd.f32 %v2009, %v2265
    %2267 = vmatprep.mubr.f32.mxu0 %v894
    %2268 = vmatmul.mubr.f32.gmra.mxu0 %v893
    %v2269 = vpop.f32.mrf.mxu0
    %v2270 = vadd.f32 %v2013, %v2269
    %v2271 = vpop.f32.mrf.mxu0
    %v2272 = vadd.f32 %v2015, %v2271
    %2273 = vmatprep.mubr.f32.mxu0 %v900
    %2274 = vmatmul.mubr.f32.gmra.mxu0 %v899
    %v2275 = vpop.f32.mrf.mxu0
    %v2276 = vadd.f32 %v2019, %v2275
    %v2277 = vpop.f32.mrf.mxu0
    %v2278 = vadd.f32 %v2021, %v2277
    %2279 = vmatprep.mubr.f32.mxu0 %v906
    %2280 = vmatmul.mubr.f32.gmra.mxu0 %v905
    %v2281 = vpop.f32.mrf.mxu0
    %v2282 = vadd.f32 %v2025, %v2281
    %v2283 = vpop.f32.mrf.mxu0
    %v2284 = vadd.f32 %v2027, %v2283
    %2285 = vmatprep.mubr.f32.mxu0 %v912
    %2286 = vmatmul.mubr.f32.gmra.mxu0 %v911
    %v2287 = vpop.f32.mrf.mxu0
    %v2288 = vadd.f32 %v2031, %v2287
    %v2289 = vpop.f32.mrf.mxu0
    %v2290 = vadd.f32 %v2033, %v2289
    %2291 = vmatprep.mubr.f32.mxu0 %v918
    %2292 = vmatmul.mubr.f32.gmra.mxu0 %v917
    %v2293 = vpop.f32.mrf.mxu0
    %v2294 = vadd.f32 %v2037, %v2293
    %v2295 = vpop.f32.mrf.mxu0
    %v2296 = vadd.f32 %v2039, %v2295
    %2297 = vmatprep.mubr.f32.mxu0 %v924
    %2298 = vmatmul.mubr.f32.gmra.mxu0 %v923
    %v2299 = vpop.f32.mrf.mxu0
    %v2300 = vadd.f32 %v2043, %v2299
    %v2301 = vpop.f32.mrf.mxu0
    %v2302 = vadd.f32 %v2045, %v2301
    %2303 = vmatprep.mubr.f32.mxu0 %v930
    %2304 = vmatmul.mubr.f32.gmra.mxu0 %v929
    %v2305 = vpop.f32.mrf.mxu0
    %v2306 = vadd.f32 %v2049, %v2305
    %v2307 = vpop.f32.mrf.mxu0
    %v2308 = vadd.f32 %v2051, %v2307
    %2309 = vdwg.mxu0
    %2310 = vmatprep.subr.mxu0 %v1024
    %2311 = vmatpush1.msra.mxu0 %v1023
    %2312 = vmatprep.subr.mxu0 %v1018
    %2313 = vmatpush1.msra.mxu0 %v1017
    %2314 = vmatprep.subr.mxu0 %v1012
    %2315 = vmatpush1.msra.mxu0 %v1011
    %2316 = vmatprep.subr.mxu0 %v1006
    %2317 = vmatpush1.msra.mxu0 %v1005
    %2318 = vmatprep.subr.mxu0 %v1000
    %2319 = vmatpush1.msra.mxu0 %v999
    %2320 = vmatprep.subr.mxu0 %v994
    %2321 = vmatpush1.msra.mxu0 %v993
    %2322 = vmatprep.subr.mxu0 %v988
    %2323 = vmatpush1.msra.mxu0 %v987
    %2324 = vmatprep.subr.mxu0 %v982
    %2325 = vmatpush1.msra.mxu0 %v981
    %2326 = vmatprep.subr.mxu0 %v976
    %2327 = vmatpush1.msra.mxu0 %v975
    %2328 = vmatprep.subr.mxu0 %v970
    %2329 = vmatpush1.msra.mxu0 %v969
    %2330 = vmatprep.subr.mxu0 %v964
    %2331 = vmatpush1.msra.mxu0 %v963
    %2332 = vmatprep.subr.mxu0 %v958
    %2333 = vmatpush1.msra.mxu0 %v957
    %2334 = vmatprep.subr.mxu0 %v952
    %2335 = vmatpush1.msra.mxu0 %v951
    %2336 = vmatprep.subr.mxu0 %v946
    %2337 = vmatpush1.msra.mxu0 %v945
    %2338 = vmatprep.subr.mxu0 %v940
    %2339 = vmatpush1.msra.mxu0 %v939
    %2340 = vmatprep.subr.mxu0 %v934
    %2341 = vmatpush1.msra.mxu0 %v933
    %2342 = vmatprep.subr.mxu0 %v1120
    %2343 = vmatpush2.msra.mxu0 %v1119
    %2344 = vmatprep.subr.mxu0 %v1114
    %2345 = vmatpush2.msra.mxu0 %v1113
    %2346 = vmatprep.subr.mxu0 %v1108
    %2347 = vmatpush2.msra.mxu0 %v1107
    %2348 = vmatprep.subr.mxu0 %v1102
    %2349 = vmatpush2.msra.mxu0 %v1101
    %2350 = vmatprep.subr.mxu0 %v1096
    %2351 = vmatpush2.msra.mxu0 %v1095
    %2352 = vmatprep.subr.mxu0 %v1090
    %2353 = vmatpush2.msra.mxu0 %v1089
    %2354 = vmatprep.subr.mxu0 %v1084
    %2355 = vmatpush2.msra.mxu0 %v1083
    %2356 = vmatprep.subr.mxu0 %v1078
    %2357 = vmatpush2.msra.mxu0 %v1077
    %2358 = vmatprep.subr.mxu0 %v1072
    %2359 = vmatpush2.msra.mxu0 %v1071
    %2360 = vmatprep.subr.mxu0 %v1066
    %2361 = vmatpush2.msra.mxu0 %v1065
    %2362 = vmatprep.subr.mxu0 %v1060
    %2363 = vmatpush2.msra.mxu0 %v1059
    %2364 = vmatprep.subr.mxu0 %v1054
    %2365 = vmatpush2.msra.mxu0 %v1053
    %2366 = vmatprep.subr.mxu0 %v1048
    %2367 = vmatpush2.msra.mxu0 %v1047
    %2368 = vmatprep.subr.mxu0 %v1042
    %2369 = vmatpush2.msra.mxu0 %v1041
    %2370 = vmatprep.subr.mxu0 %v1036
    %2371 = vmatpush2.msra.mxu0 %v1035
    %2372 = vmatprep.subr.mxu0 %v1030
    %2373 = vmatpush2.msra.mxu0 %v1029
    %2374 = vmatprep.mubr.f32.mxu0 %v740
    %2375 = vmatmul.mubr.f32.gmra.mxu0 %v739
    %v2376 = vpop.f32.mrf.mxu0
    %v2377 = vadd.f32 %v1520, %v2376
    %v2378 = vpop.f32.mrf.mxu0
    %v2379 = vadd.f32 %v1524, %v2378
    %2380 = vmatprep.mubr.f32.mxu0 %v746
    %2381 = vmatmul.mubr.f32.gmra.mxu0 %v745
    %v2382 = vpop.f32.mrf.mxu0
    %v2383 = vadd.f32 %v1520, %v2382
    %v2384 = vpop.f32.mrf.mxu0
    %v2385 = vadd.f32 %v1524, %v2384
    %2386 = vmatprep.mubr.f32.mxu0 %v752
    %2387 = vmatmul.mubr.f32.gmra.mxu0 %v751
    %v2388 = vpop.f32.mrf.mxu0
    %v2389 = vadd.f32 %v1520, %v2388
    %v2390 = vpop.f32.mrf.mxu0
    %v2391 = vadd.f32 %v1524, %v2390
    %2392 = vmatprep.mubr.f32.mxu0 %v758
    %2393 = vmatmul.mubr.f32.gmra.mxu0 %v757
    %v2394 = vpop.f32.mrf.mxu0
    %v2395 = vadd.f32 %v1520, %v2394
    %v2396 = vpop.f32.mrf.mxu0
    %v2397 = vadd.f32 %v1524, %v2396
    %2398 = vmatprep.mubr.f32.mxu0 %v764
    %2399 = vmatmul.mubr.f32.gmra.mxu0 %v763
    %v2400 = vpop.f32.mrf.mxu0
    %v2401 = vadd.f32 %v1520, %v2400
    %v2402 = vpop.f32.mrf.mxu0
    %v2403 = vadd.f32 %v1524, %v2402
    %2404 = vmatprep.mubr.f32.mxu0 %v770
    %2405 = vmatmul.mubr.f32.gmra.mxu0 %v769
    %v2406 = vpop.f32.mrf.mxu0
    %v2407 = vadd.f32 %v1520, %v2406
    %v2408 = vpop.f32.mrf.mxu0
    %v2409 = vadd.f32 %v1524, %v2408
    %2410 = vmatprep.mubr.f32.mxu0 %v776
    %2411 = vmatmul.mubr.f32.gmra.mxu0 %v775
    %v2412 = vpop.f32.mrf.mxu0
    %v2413 = vadd.f32 %v1520, %v2412
    %v2414 = vpop.f32.mrf.mxu0
    %v2415 = vadd.f32 %v1524, %v2414
    %2416 = vmatprep.mubr.f32.mxu0 %v782
    %2417 = vmatmul.mubr.f32.gmra.mxu0 %v781
    %v2418 = vpop.f32.mrf.mxu0
    %v2419 = vadd.f32 %v1520, %v2418
    %v2420 = vpop.f32.mrf.mxu0
    %v2421 = vadd.f32 %v1524, %v2420
    %2422 = vmatprep.mubr.f32.mxu0 %v788
    %2423 = vmatmul.mubr.f32.gmra.mxu0 %v787
    %v2424 = vpop.f32.mrf.mxu0
    %v2425 = vadd.f32 %v1520, %v2424
    %v2426 = vpop.f32.mrf.mxu0
    %v2427 = vadd.f32 %v1524, %v2426
    %2428 = vmatprep.mubr.f32.mxu0 %v794
    %2429 = vmatmul.mubr.f32.gmra.mxu0 %v793
    %v2430 = vpop.f32.mrf.mxu0
    %v2431 = vadd.f32 %v1520, %v2430
    %v2432 = vpop.f32.mrf.mxu0
    %v2433 = vadd.f32 %v1524, %v2432
    %2434 = vmatprep.mubr.f32.mxu0 %v800
    %2435 = vmatmul.mubr.f32.gmra.mxu0 %v799
    %v2436 = vpop.f32.mrf.mxu0
    %v2437 = vadd.f32 %v1520, %v2436
    %v2438 = vpop.f32.mrf.mxu0
    %v2439 = vadd.f32 %v1524, %v2438
    %2440 = vmatprep.mubr.f32.mxu0 %v806
    %2441 = vmatmul.mubr.f32.gmra.mxu0 %v805
    %v2442 = vpop.f32.mrf.mxu0
    %v2443 = vadd.f32 %v1520, %v2442
    %v2444 = vpop.f32.mrf.mxu0
    %v2445 = vadd.f32 %v1524, %v2444
    %2446 = vmatprep.mubr.f32.mxu0 %v812
    %2447 = vmatmul.mubr.f32.gmra.mxu0 %v811
    %v2448 = vpop.f32.mrf.mxu0
    %v2449 = vadd.f32 %v1520, %v2448
    %v2450 = vpop.f32.mrf.mxu0
    %v2451 = vadd.f32 %v1524, %v2450
    %2452 = vmatprep.mubr.f32.mxu0 %v818
    %2453 = vmatmul.mubr.f32.gmra.mxu0 %v817
    %v2454 = vpop.f32.mrf.mxu0
    %v2455 = vadd.f32 %v1520, %v2454
    %v2456 = vpop.f32.mrf.mxu0
    %v2457 = vadd.f32 %v1524, %v2456
    %2458 = vmatprep.mubr.f32.mxu0 %v824
    %2459 = vmatmul.mubr.f32.gmra.mxu0 %v823
    %v2460 = vpop.f32.mrf.mxu0
    %v2461 = vadd.f32 %v1520, %v2460
    %v2462 = vpop.f32.mrf.mxu0
    %v2463 = vadd.f32 %v1524, %v2462
    %2464 = vmatprep.mubr.f32.mxu0 %v830
    %2465 = vmatmul.mubr.f32.gmra.mxu0 %v829
    %v2466 = vpop.f32.mrf.mxu0
    %v2467 = vadd.f32 %v1520, %v2466
    %v2468 = vpop.f32.mrf.mxu0
    %v2469 = vadd.f32 %v1524, %v2468
    %2470 = vmatprep.mubr.f32.mxu0 %v836
    %2471 = vmatmul.mubr.f32.gmra.mxu0 %v835
    %v2472 = vpop.f32.mrf.mxu0
    %v2473 = vadd.f32 %v1520, %v2472
    %v2474 = vpop.f32.mrf.mxu0
    %v2475 = vadd.f32 %v1524, %v2474
    %2476 = vmatprep.mubr.f32.mxu0 %v842
    %2477 = vmatmul.mubr.f32.gmra.mxu0 %v841
    %v2478 = vpop.f32.mrf.mxu0
    %v2479 = vadd.f32 %v1520, %v2478
    %v2480 = vpop.f32.mrf.mxu0
    %v2481 = vadd.f32 %v1524, %v2480
    %2482 = vmatprep.mubr.f32.mxu0 %v848
    %2483 = vmatmul.mubr.f32.gmra.mxu0 %v847
    %v2484 = vpop.f32.mrf.mxu0
    %v2485 = vadd.f32 %v1520, %v2484
    %v2486 = vpop.f32.mrf.mxu0
    %v2487 = vadd.f32 %v1524, %v2486
    %2488 = vmatprep.mubr.f32.mxu0 %v854
    %2489 = vmatmul.mubr.f32.gmra.mxu0 %v853
    %v2490 = vpop.f32.mrf.mxu0
    %v2491 = vadd.f32 %v1520, %v2490
    %v2492 = vpop.f32.mrf.mxu0
    %v2493 = vadd.f32 %v1524, %v2492
    %2494 = vmatprep.mubr.f32.mxu0 %v860
    %2495 = vmatmul.mubr.f32.gmra.mxu0 %v859
    %v2496 = vpop.f32.mrf.mxu0
    %v2497 = vadd.f32 %v1520, %v2496
    %v2498 = vpop.f32.mrf.mxu0
    %v2499 = vadd.f32 %v1524, %v2498
    %2500 = vmatprep.mubr.f32.mxu0 %v866
    %2501 = vmatmul.mubr.f32.gmra.mxu0 %v865
    %v2502 = vpop.f32.mrf.mxu0
    %v2503 = vadd.f32 %v1520, %v2502
    %v2504 = vpop.f32.mrf.mxu0
    %v2505 = vadd.f32 %v1524, %v2504
    %2506 = vmatprep.mubr.f32.mxu0 %v872
    %2507 = vmatmul.mubr.f32.gmra.mxu0 %v871
    %v2508 = vpop.f32.mrf.mxu0
    %v2509 = vadd.f32 %v1520, %v2508
    %v2510 = vpop.f32.mrf.mxu0
    %v2511 = vadd.f32 %v1524, %v2510
    %2512 = vmatprep.mubr.f32.mxu0 %v878
    %2513 = vmatmul.mubr.f32.gmra.mxu0 %v877
    %v2514 = vpop.f32.mrf.mxu0
    %v2515 = vadd.f32 %v1520, %v2514
    %v2516 = vpop.f32.mrf.mxu0
    %v2517 = vadd.f32 %v1524, %v2516
    %2518 = vmatprep.mubr.f32.mxu0 %v884
    %2519 = vmatmul.mubr.f32.gmra.mxu0 %v883
    %v2520 = vpop.f32.mrf.mxu0
    %v2521 = vadd.f32 %v1520, %v2520
    %v2522 = vpop.f32.mrf.mxu0
    %v2523 = vadd.f32 %v1524, %v2522
    %2524 = vmatprep.mubr.f32.mxu0 %v890
    %2525 = vmatmul.mubr.f32.gmra.mxu0 %v889
    %v2526 = vpop.f32.mrf.mxu0
    %v2527 = vadd.f32 %v1520, %v2526
    %v2528 = vpop.f32.mrf.mxu0
    %v2529 = vadd.f32 %v1524, %v2528
    %2530 = vmatprep.mubr.f32.mxu0 %v896
    %2531 = vmatmul.mubr.f32.gmra.mxu0 %v895
    %v2532 = vpop.f32.mrf.mxu0
    %v2533 = vadd.f32 %v1520, %v2532
    %v2534 = vpop.f32.mrf.mxu0
    %v2535 = vadd.f32 %v1524, %v2534
    %2536 = vmatprep.mubr.f32.mxu0 %v902
    %2537 = vmatmul.mubr.f32.gmra.mxu0 %v901
    %v2538 = vpop.f32.mrf.mxu0
    %v2539 = vadd.f32 %v1520, %v2538
    %v2540 = vpop.f32.mrf.mxu0
    %v2541 = vadd.f32 %v1524, %v2540
    %2542 = vmatprep.mubr.f32.mxu0 %v908
    %2543 = vmatmul.mubr.f32.gmra.mxu0 %v907
    %v2544 = vpop.f32.mrf.mxu0
    %v2545 = vadd.f32 %v1520, %v2544
    %v2546 = vpop.f32.mrf.mxu0
    %v2547 = vadd.f32 %v1524, %v2546
    %2548 = vmatprep.mubr.f32.mxu0 %v914
    %2549 = vmatmul.mubr.f32.gmra.mxu0 %v913
    %v2550 = vpop.f32.mrf.mxu0
    %v2551 = vadd.f32 %v1520, %v2550
    %v2552 = vpop.f32.mrf.mxu0
    %v2553 = vadd.f32 %v1524, %v2552
    %2554 = vmatprep.mubr.f32.mxu0 %v920
    %2555 = vmatmul.mubr.f32.gmra.mxu0 %v919
    %v2556 = vpop.f32.mrf.mxu0
    %v2557 = vadd.f32 %v1520, %v2556
    %v2558 = vpop.f32.mrf.mxu0
    %v2559 = vadd.f32 %v1524, %v2558
    %2560 = vmatprep.mubr.f32.mxu0 %v926
    %2561 = vmatmul.mubr.f32.gmra.mxu0 %v925
    %v2562 = vpop.f32.mrf.mxu0
    %v2563 = vadd.f32 %v1520, %v2562
    %v2564 = vpop.f32.mrf.mxu0
    %v2565 = vadd.f32 %v1524, %v2564
    %2566 = vdwg.mxu0
    %2567 = vmatprep.subr.mxu0 %v1216
    %2568 = vmatpush1.msra.mxu0 %v1215
    %2569 = vmatprep.subr.mxu0 %v1210
    %2570 = vmatpush1.msra.mxu0 %v1209
    %2571 = vmatprep.subr.mxu0 %v1204
    %2572 = vmatpush1.msra.mxu0 %v1203
    %2573 = vmatprep.subr.mxu0 %v1198
    %2574 = vmatpush1.msra.mxu0 %v1197
    %2575 = vmatprep.subr.mxu0 %v1192
    %2576 = vmatpush1.msra.mxu0 %v1191
    %2577 = vmatprep.subr.mxu0 %v1186
    %2578 = vmatpush1.msra.mxu0 %v1185
    %2579 = vmatprep.subr.mxu0 %v1180
    %2580 = vmatpush1.msra.mxu0 %v1179
    %2581 = vmatprep.subr.mxu0 %v1174
    %2582 = vmatpush1.msra.mxu0 %v1173
    %2583 = vmatprep.subr.mxu0 %v1168
    %2584 = vmatpush1.msra.mxu0 %v1167
    %2585 = vmatprep.subr.mxu0 %v1162
    %2586 = vmatpush1.msra.mxu0 %v1161
    %2587 = vmatprep.subr.mxu0 %v1156
    %2588 = vmatpush1.msra.mxu0 %v1155
    %2589 = vmatprep.subr.mxu0 %v1150
    %2590 = vmatpush1.msra.mxu0 %v1149
    %2591 = vmatprep.subr.mxu0 %v1144
    %2592 = vmatpush1.msra.mxu0 %v1143
    %2593 = vmatprep.subr.mxu0 %v1138
    %2594 = vmatpush1.msra.mxu0 %v1137
    %2595 = vmatprep.subr.mxu0 %v1132
    %2596 = vmatpush1.msra.mxu0 %v1131
    %2597 = vmatprep.subr.mxu0 %v1126
    %2598 = vmatpush1.msra.mxu0 %v1125
    %2599 = vmatprep.subr.mxu0 %v1312
    %2600 = vmatpush2.msra.mxu0 %v1311
    %2601 = vmatprep.subr.mxu0 %v1306
    %2602 = vmatpush2.msra.mxu0 %v1305
    %2603 = vmatprep.subr.mxu0 %v1300
    %2604 = vmatpush2.msra.mxu0 %v1299
    %2605 = vmatprep.subr.mxu0 %v1294
    %2606 = vmatpush2.msra.mxu0 %v1293
    %2607 = vmatprep.subr.mxu0 %v1288
    %2608 = vmatpush2.msra.mxu0 %v1287
    %2609 = vmatprep.subr.mxu0 %v1282
    %2610 = vmatpush2.msra.mxu0 %v1281
    %2611 = vmatprep.subr.mxu0 %v1276
    %2612 = vmatpush2.msra.mxu0 %v1275
    %2613 = vmatprep.subr.mxu0 %v1270
    %2614 = vmatpush2.msra.mxu0 %v1269
    %2615 = vmatprep.subr.mxu0 %v1264
    %2616 = vmatpush2.msra.mxu0 %v1263
    %2617 = vmatprep.subr.mxu0 %v1258
    %2618 = vmatpush2.msra.mxu0 %v1257
    %2619 = vmatprep.subr.mxu0 %v1252
    %2620 = vmatpush2.msra.mxu0 %v1251
    %2621 = vmatprep.subr.mxu0 %v1246
    %2622 = vmatpush2.msra.mxu0 %v1245
    %2623 = vmatprep.subr.mxu0 %v1240
    %2624 = vmatpush2.msra.mxu0 %v1239
    %2625 = vmatprep.subr.mxu0 %v1234
    %2626 = vmatpush2.msra.mxu0 %v1233
    %2627 = vmatprep.subr.mxu0 %v1228
    %2628 = vmatpush2.msra.mxu0 %v1227
    %2629 = vmatprep.subr.mxu0 %v1222
    %2630 = vmatpush2.msra.mxu0 %v1221
    %2631 = vmatprep.mubr.f32.mxu0 %v742
    %2632 = vmatmul.mubr.f32.gmra.mxu0 %v741
    %v2633 = vpop.f32.mrf.mxu0
    %v2634 = vadd.f32 %v2377, %v2633
    %v2635 = vpop.f32.mrf.mxu0
    %v2636 = vadd.f32 %v2379, %v2635
    %2637 = vmatprep.mubr.f32.mxu0 %v748
    %2638 = vmatmul.mubr.f32.gmra.mxu0 %v747
    %v2639 = vpop.f32.mrf.mxu0
    %v2640 = vadd.f32 %v2383, %v2639
    %v2641 = vpop.f32.mrf.mxu0
    %v2642 = vadd.f32 %v2385, %v2641
    %2643 = vmatprep.mubr.f32.mxu0 %v754
    %2644 = vmatmul.mubr.f32.gmra.mxu0 %v753
    %v2645 = vpop.f32.mrf.mxu0
    %v2646 = vadd.f32 %v2389, %v2645
    %v2647 = vpop.f32.mrf.mxu0
    %v2648 = vadd.f32 %v2391, %v2647
    %2649 = vmatprep.mubr.f32.mxu0 %v760
    %2650 = vmatmul.mubr.f32.gmra.mxu0 %v759
    %v2651 = vpop.f32.mrf.mxu0
    %v2652 = vadd.f32 %v2395, %v2651
    %v2653 = vpop.f32.mrf.mxu0
    %v2654 = vadd.f32 %v2397, %v2653
    %2655 = vmatprep.mubr.f32.mxu0 %v766
    %2656 = vmatmul.mubr.f32.gmra.mxu0 %v765
    %v2657 = vpop.f32.mrf.mxu0
    %v2658 = vadd.f32 %v2401, %v2657
    %v2659 = vpop.f32.mrf.mxu0
    %v2660 = vadd.f32 %v2403, %v2659
    %2661 = vmatprep.mubr.f32.mxu0 %v772
    %2662 = vmatmul.mubr.f32.gmra.mxu0 %v771
    %v2663 = vpop.f32.mrf.mxu0
    %v2664 = vadd.f32 %v2407, %v2663
    %v2665 = vpop.f32.mrf.mxu0
    %v2666 = vadd.f32 %v2409, %v2665
    %2667 = vmatprep.mubr.f32.mxu0 %v778
    %2668 = vmatmul.mubr.f32.gmra.mxu0 %v777
    %v2669 = vpop.f32.mrf.mxu0
    %v2670 = vadd.f32 %v2413, %v2669
    %v2671 = vpop.f32.mrf.mxu0
    %v2672 = vadd.f32 %v2415, %v2671
    %2673 = vmatprep.mubr.f32.mxu0 %v784
    %2674 = vmatmul.mubr.f32.gmra.mxu0 %v783
    %v2675 = vpop.f32.mrf.mxu0
    %v2676 = vadd.f32 %v2419, %v2675
    %v2677 = vpop.f32.mrf.mxu0
    %v2678 = vadd.f32 %v2421, %v2677
    %2679 = vmatprep.mubr.f32.mxu0 %v790
    %2680 = vmatmul.mubr.f32.gmra.mxu0 %v789
    %v2681 = vpop.f32.mrf.mxu0
    %v2682 = vadd.f32 %v2425, %v2681
    %v2683 = vpop.f32.mrf.mxu0
    %v2684 = vadd.f32 %v2427, %v2683
    %2685 = vmatprep.mubr.f32.mxu0 %v796
    %2686 = vmatmul.mubr.f32.gmra.mxu0 %v795
    %v2687 = vpop.f32.mrf.mxu0
    %v2688 = vadd.f32 %v2431, %v2687
    %v2689 = vpop.f32.mrf.mxu0
    %v2690 = vadd.f32 %v2433, %v2689
    %2691 = vmatprep.mubr.f32.mxu0 %v802
    %2692 = vmatmul.mubr.f32.gmra.mxu0 %v801
    %v2693 = vpop.f32.mrf.mxu0
    %v2694 = vadd.f32 %v2437, %v2693
    %v2695 = vpop.f32.mrf.mxu0
    %v2696 = vadd.f32 %v2439, %v2695
    %2697 = vmatprep.mubr.f32.mxu0 %v808
    %2698 = vmatmul.mubr.f32.gmra.mxu0 %v807
    %v2699 = vpop.f32.mrf.mxu0
    %v2700 = vadd.f32 %v2443, %v2699
    %v2701 = vpop.f32.mrf.mxu0
    %v2702 = vadd.f32 %v2445, %v2701
    %2703 = vmatprep.mubr.f32.mxu0 %v814
    %2704 = vmatmul.mubr.f32.gmra.mxu0 %v813
    %v2705 = vpop.f32.mrf.mxu0
    %v2706 = vadd.f32 %v2449, %v2705
    %v2707 = vpop.f32.mrf.mxu0
    %v2708 = vadd.f32 %v2451, %v2707
    %2709 = vmatprep.mubr.f32.mxu0 %v820
    %2710 = vmatmul.mubr.f32.gmra.mxu0 %v819
    %v2711 = vpop.f32.mrf.mxu0
    %v2712 = vadd.f32 %v2455, %v2711
    %v2713 = vpop.f32.mrf.mxu0
    %v2714 = vadd.f32 %v2457, %v2713
    %2715 = vmatprep.mubr.f32.mxu0 %v826
    %2716 = vmatmul.mubr.f32.gmra.mxu0 %v825
    %v2717 = vpop.f32.mrf.mxu0
    %v2718 = vadd.f32 %v2461, %v2717
    %v2719 = vpop.f32.mrf.mxu0
    %v2720 = vadd.f32 %v2463, %v2719
    %2721 = vmatprep.mubr.f32.mxu0 %v832
    %2722 = vmatmul.mubr.f32.gmra.mxu0 %v831
    %v2723 = vpop.f32.mrf.mxu0
    %v2724 = vadd.f32 %v2467, %v2723
    %v2725 = vpop.f32.mrf.mxu0
    %v2726 = vadd.f32 %v2469, %v2725
    %2727 = vmatprep.mubr.f32.mxu0 %v838
    %2728 = vmatmul.mubr.f32.gmra.mxu0 %v837
    %v2729 = vpop.f32.mrf.mxu0
    %v2730 = vadd.f32 %v2473, %v2729
    %v2731 = vpop.f32.mrf.mxu0
    %v2732 = vadd.f32 %v2475, %v2731
    %2733 = vmatprep.mubr.f32.mxu0 %v844
    %2734 = vmatmul.mubr.f32.gmra.mxu0 %v843
    %v2735 = vpop.f32.mrf.mxu0
    %v2736 = vadd.f32 %v2479, %v2735
    %v2737 = vpop.f32.mrf.mxu0
    %v2738 = vadd.f32 %v2481, %v2737
    %2739 = vmatprep.mubr.f32.mxu0 %v850
    %2740 = vmatmul.mubr.f32.gmra.mxu0 %v849
    %v2741 = vpop.f32.mrf.mxu0
    %v2742 = vadd.f32 %v2485, %v2741
    %v2743 = vpop.f32.mrf.mxu0
    %v2744 = vadd.f32 %v2487, %v2743
    %2745 = vmatprep.mubr.f32.mxu0 %v856
    %2746 = vmatmul.mubr.f32.gmra.mxu0 %v855
    %v2747 = vpop.f32.mrf.mxu0
    %v2748 = vadd.f32 %v2491, %v2747
    %v2749 = vpop.f32.mrf.mxu0
    %v2750 = vadd.f32 %v2493, %v2749
    %2751 = vmatprep.mubr.f32.mxu0 %v862
    %2752 = vmatmul.mubr.f32.gmra.mxu0 %v861
    %v2753 = vpop.f32.mrf.mxu0
    %v2754 = vadd.f32 %v2497, %v2753
    %v2755 = vpop.f32.mrf.mxu0
    %v2756 = vadd.f32 %v2499, %v2755
    %2757 = vmatprep.mubr.f32.mxu0 %v868
    %2758 = vmatmul.mubr.f32.gmra.mxu0 %v867
    %v2759 = vpop.f32.mrf.mxu0
    %v2760 = vadd.f32 %v2503, %v2759
    %v2761 = vpop.f32.mrf.mxu0
    %v2762 = vadd.f32 %v2505, %v2761
    %2763 = vmatprep.mubr.f32.mxu0 %v874
    %2764 = vmatmul.mubr.f32.gmra.mxu0 %v873
    %v2765 = vpop.f32.mrf.mxu0
    %v2766 = vadd.f32 %v2509, %v2765
    %v2767 = vpop.f32.mrf.mxu0
    %v2768 = vadd.f32 %v2511, %v2767
    %2769 = vmatprep.mubr.f32.mxu0 %v880
    %2770 = vmatmul.mubr.f32.gmra.mxu0 %v879
    %v2771 = vpop.f32.mrf.mxu0
    %v2772 = vadd.f32 %v2515, %v2771
    %v2773 = vpop.f32.mrf.mxu0
    %v2774 = vadd.f32 %v2517, %v2773
    %2775 = vmatprep.mubr.f32.mxu0 %v886
    %2776 = vmatmul.mubr.f32.gmra.mxu0 %v885
    %v2777 = vpop.f32.mrf.mxu0
    %v2778 = vadd.f32 %v2521, %v2777
    %v2779 = vpop.f32.mrf.mxu0
    %v2780 = vadd.f32 %v2523, %v2779
    %2781 = vmatprep.mubr.f32.mxu0 %v892
    %2782 = vmatmul.mubr.f32.gmra.mxu0 %v891
    %v2783 = vpop.f32.mrf.mxu0
    %v2784 = vadd.f32 %v2527, %v2783
    %v2785 = vpop.f32.mrf.mxu0
    %v2786 = vadd.f32 %v2529, %v2785
    %2787 = vmatprep.mubr.f32.mxu0 %v898
    %2788 = vmatmul.mubr.f32.gmra.mxu0 %v897
    %v2789 = vpop.f32.mrf.mxu0
    %v2790 = vadd.f32 %v2533, %v2789
    %v2791 = vpop.f32.mrf.mxu0
    %v2792 = vadd.f32 %v2535, %v2791
    %2793 = vmatprep.mubr.f32.mxu0 %v904
    %2794 = vmatmul.mubr.f32.gmra.mxu0 %v903
    %v2795 = vpop.f32.mrf.mxu0
    %v2796 = vadd.f32 %v2539, %v2795
    %v2797 = vpop.f32.mrf.mxu0
    %v2798 = vadd.f32 %v2541, %v2797
    %2799 = vmatprep.mubr.f32.mxu0 %v910
    %2800 = vmatmul.mubr.f32.gmra.mxu0 %v909
    %v2801 = vpop.f32.mrf.mxu0
    %v2802 = vadd.f32 %v2545, %v2801
    %v2803 = vpop.f32.mrf.mxu0
    %v2804 = vadd.f32 %v2547, %v2803
    %2805 = vmatprep.mubr.f32.mxu0 %v916
    %2806 = vmatmul.mubr.f32.gmra.mxu0 %v915
    %v2807 = vpop.f32.mrf.mxu0
    %v2808 = vadd.f32 %v2551, %v2807
    %v2809 = vpop.f32.mrf.mxu0
    %v2810 = vadd.f32 %v2553, %v2809
    %2811 = vmatprep.mubr.f32.mxu0 %v922
    %2812 = vmatmul.mubr.f32.gmra.mxu0 %v921
    %v2813 = vpop.f32.mrf.mxu0
    %v2814 = vadd.f32 %v2557, %v2813
    %v2815 = vpop.f32.mrf.mxu0
    %v2816 = vadd.f32 %v2559, %v2815
    %2817 = vmatprep.mubr.f32.mxu0 %v928
    %2818 = vmatmul.mubr.f32.gmra.mxu0 %v927
    %v2819 = vpop.f32.mrf.mxu0
    %v2820 = vadd.f32 %v2563, %v2819
    %v2821 = vpop.f32.mrf.mxu0
    %v2822 = vadd.f32 %v2565, %v2821
    %2823 = vdwg.mxu0
    %2824 = vmatprep.subr.mxu0 %v1408
    %2825 = vmatpush1.msra.mxu0 %v1407
    %2826 = vmatprep.subr.mxu0 %v1402
    %2827 = vmatpush1.msra.mxu0 %v1401
    %2828 = vmatprep.subr.mxu0 %v1396
    %2829 = vmatpush1.msra.mxu0 %v1395
    %2830 = vmatprep.subr.mxu0 %v1390
    %2831 = vmatpush1.msra.mxu0 %v1389
    %2832 = vmatprep.subr.mxu0 %v1384
    %2833 = vmatpush1.msra.mxu0 %v1383
    %2834 = vmatprep.subr.mxu0 %v1378
    %2835 = vmatpush1.msra.mxu0 %v1377
    %2836 = vmatprep.subr.mxu0 %v1372
    %2837 = vmatpush1.msra.mxu0 %v1371
    %2838 = vmatprep.subr.mxu0 %v1366
    %2839 = vmatpush1.msra.mxu0 %v1365
    %2840 = vmatprep.subr.mxu0 %v1360
    %2841 = vmatpush1.msra.mxu0 %v1359
    %2842 = vmatprep.subr.mxu0 %v1354
    %2843 = vmatpush1.msra.mxu0 %v1353
    %2844 = vmatprep.subr.mxu0 %v1348
    %2845 = vmatpush1.msra.mxu0 %v1347
    %2846 = vmatprep.subr.mxu0 %v1342
    %2847 = vmatpush1.msra.mxu0 %v1341
    %2848 = vmatprep.subr.mxu0 %v1336
    %2849 = vmatpush1.msra.mxu0 %v1335
    %2850 = vmatprep.subr.mxu0 %v1330
    %2851 = vmatpush1.msra.mxu0 %v1329
    %2852 = vmatprep.subr.mxu0 %v1324
    %2853 = vmatpush1.msra.mxu0 %v1323
    %2854 = vmatprep.subr.mxu0 %v1318
    %2855 = vmatpush1.msra.mxu0 %v1317
    %2856 = vmatprep.subr.mxu0 %v1504
    %2857 = vmatpush2.msra.mxu0 %v1503
    %2858 = vmatprep.subr.mxu0 %v1498
    %2859 = vmatpush2.msra.mxu0 %v1497
    %2860 = vmatprep.subr.mxu0 %v1492
    %2861 = vmatpush2.msra.mxu0 %v1491
    %2862 = vmatprep.subr.mxu0 %v1486
    %2863 = vmatpush2.msra.mxu0 %v1485
    %2864 = vmatprep.subr.mxu0 %v1480
    %2865 = vmatpush2.msra.mxu0 %v1479
    %2866 = vmatprep.subr.mxu0 %v1474
    %2867 = vmatpush2.msra.mxu0 %v1473
    %2868 = vmatprep.subr.mxu0 %v1468
    %2869 = vmatpush2.msra.mxu0 %v1467
    %2870 = vmatprep.subr.mxu0 %v1462
    %2871 = vmatpush2.msra.mxu0 %v1461
    %2872 = vmatprep.subr.mxu0 %v1456
    %2873 = vmatpush2.msra.mxu0 %v1455
    %2874 = vmatprep.subr.mxu0 %v1450
    %2875 = vmatpush2.msra.mxu0 %v1449
    %2876 = vmatprep.subr.mxu0 %v1444
    %2877 = vmatpush2.msra.mxu0 %v1443
    %2878 = vmatprep.subr.mxu0 %v1438
    %2879 = vmatpush2.msra.mxu0 %v1437
    %2880 = vmatprep.subr.mxu0 %v1432
    %2881 = vmatpush2.msra.mxu0 %v1431
    %2882 = vmatprep.subr.mxu0 %v1426
    %2883 = vmatpush2.msra.mxu0 %v1425
    %2884 = vmatprep.subr.mxu0 %v1420
    %2885 = vmatpush2.msra.mxu0 %v1419
    %2886 = vmatprep.subr.mxu0 %v1414
    %2887 = vmatpush2.msra.mxu0 %v1413
    %2888 = vmatprep.mubr.f32.mxu0 %v744
    %2889 = vmatmul.mubr.f32.gmra.mxu0 %v743
    %v2890 = vpop.f32.mrf.mxu0
    %v2891 = vadd.f32 %v2634, %v2890
    %v2892 = vpop.f32.mrf.mxu0
    %v2893 = vadd.f32 %v2636, %v2892
    %2894 = vmatprep.mubr.f32.mxu0 %v750
    %2895 = vmatmul.mubr.f32.gmra.mxu0 %v749
    %v2896 = vpop.f32.mrf.mxu0
    %v2897 = vadd.f32 %v2640, %v2896
    %v2898 = vpop.f32.mrf.mxu0
    %v2899 = vadd.f32 %v2642, %v2898
    %2900 = vmatprep.mubr.f32.mxu0 %v756
    %2901 = vmatmul.mubr.f32.gmra.mxu0 %v755
    %v2902 = vpop.f32.mrf.mxu0
    %v2903 = vadd.f32 %v2646, %v2902
    %v2904 = vpop.f32.mrf.mxu0
    %v2905 = vadd.f32 %v2648, %v2904
    %2906 = vmatprep.mubr.f32.mxu0 %v762
    %2907 = vmatmul.mubr.f32.gmra.mxu0 %v761
    %v2908 = vpop.f32.mrf.mxu0
    %v2909 = vadd.f32 %v2652, %v2908
    %v2910 = vpop.f32.mrf.mxu0
    %v2911 = vadd.f32 %v2654, %v2910
    %2912 = vmatprep.mubr.f32.mxu0 %v768
    %2913 = vmatmul.mubr.f32.gmra.mxu0 %v767
    %v2914 = vpop.f32.mrf.mxu0
    %v2915 = vadd.f32 %v2658, %v2914
    %v2916 = vpop.f32.mrf.mxu0
    %v2917 = vadd.f32 %v2660, %v2916
    %2918 = vmatprep.mubr.f32.mxu0 %v774
    %2919 = vmatmul.mubr.f32.gmra.mxu0 %v773
    %v2920 = vpop.f32.mrf.mxu0
    %v2921 = vadd.f32 %v2664, %v2920
    %v2922 = vpop.f32.mrf.mxu0
    %v2923 = vadd.f32 %v2666, %v2922
    %2924 = vmatprep.mubr.f32.mxu0 %v780
    %2925 = vmatmul.mubr.f32.gmra.mxu0 %v779
    %v2926 = vpop.f32.mrf.mxu0
    %v2927 = vadd.f32 %v2670, %v2926
    %v2928 = vpop.f32.mrf.mxu0
    %v2929 = vadd.f32 %v2672, %v2928
    %2930 = vmatprep.mubr.f32.mxu0 %v786
    %2931 = vmatmul.mubr.f32.gmra.mxu0 %v785
    %v2932 = vpop.f32.mrf.mxu0
    %v2933 = vadd.f32 %v2676, %v2932
    %v2934 = vpop.f32.mrf.mxu0
    %v2935 = vadd.f32 %v2678, %v2934
    %2936 = vmatprep.mubr.f32.mxu0 %v792
    %2937 = vmatmul.mubr.f32.gmra.mxu0 %v791
    %v2938 = vpop.f32.mrf.mxu0
    %v2939 = vadd.f32 %v2682, %v2938
    %v2940 = vpop.f32.mrf.mxu0
    %v2941 = vadd.f32 %v2684, %v2940
    %2942 = vmatprep.mubr.f32.mxu0 %v798
    %2943 = vmatmul.mubr.f32.gmra.mxu0 %v797
    %v2944 = vpop.f32.mrf.mxu0
    %v2945 = vadd.f32 %v2688, %v2944
    %v2946 = vpop.f32.mrf.mxu0
    %v2947 = vadd.f32 %v2690, %v2946
    %2948 = vmatprep.mubr.f32.mxu0 %v804
    %2949 = vmatmul.mubr.f32.gmra.mxu0 %v803
    %v2950 = vpop.f32.mrf.mxu0
    %v2951 = vadd.f32 %v2694, %v2950
    %v2952 = vpop.f32.mrf.mxu0
    %v2953 = vadd.f32 %v2696, %v2952
    %2954 = vmatprep.mubr.f32.mxu0 %v810
    %2955 = vmatmul.mubr.f32.gmra.mxu0 %v809
    %v2956 = vpop.f32.mrf.mxu0
    %v2957 = vadd.f32 %v2700, %v2956
    %v2958 = vpop.f32.mrf.mxu0
    %v2959 = vadd.f32 %v2702, %v2958
    %2960 = vmatprep.mubr.f32.mxu0 %v816
    %2961 = vmatmul.mubr.f32.gmra.mxu0 %v815
    %v2962 = vpop.f32.mrf.mxu0
    %v2963 = vadd.f32 %v2706, %v2962
    %v2964 = vpop.f32.mrf.mxu0
    %v2965 = vadd.f32 %v2708, %v2964
    %2966 = vmatprep.mubr.f32.mxu0 %v822
    %2967 = vmatmul.mubr.f32.gmra.mxu0 %v821
    %v2968 = vpop.f32.mrf.mxu0
    %v2969 = vadd.f32 %v2712, %v2968
    %v2970 = vpop.f32.mrf.mxu0
    %v2971 = vadd.f32 %v2714, %v2970
    %2972 = vmatprep.mubr.f32.mxu0 %v828
    %2973 = vmatmul.mubr.f32.gmra.mxu0 %v827
    %v2974 = vpop.f32.mrf.mxu0
    %v2975 = vadd.f32 %v2718, %v2974
    %v2976 = vpop.f32.mrf.mxu0
    %v2977 = vadd.f32 %v2720, %v2976
    %2978 = vmatprep.mubr.f32.mxu0 %v834
    %2979 = vmatmul.mubr.f32.gmra.mxu0 %v833
    %v2980 = vpop.f32.mrf.mxu0
    %v2981 = vadd.f32 %v2724, %v2980
    %v2982 = vpop.f32.mrf.mxu0
    %v2983 = vadd.f32 %v2726, %v2982
    %2984 = vmatprep.mubr.f32.mxu0 %v840
    %2985 = vmatmul.mubr.f32.gmra.mxu0 %v839
    %v2986 = vpop.f32.mrf.mxu0
    %v2987 = vadd.f32 %v2730, %v2986
    %v2988 = vpop.f32.mrf.mxu0
    %v2989 = vadd.f32 %v2732, %v2988
    %2990 = vmatprep.mubr.f32.mxu0 %v846
    %2991 = vmatmul.mubr.f32.gmra.mxu0 %v845
    %v2992 = vpop.f32.mrf.mxu0
    %v2993 = vadd.f32 %v2736, %v2992
    %v2994 = vpop.f32.mrf.mxu0
    %v2995 = vadd.f32 %v2738, %v2994
    %2996 = vmatprep.mubr.f32.mxu0 %v852
    %2997 = vmatmul.mubr.f32.gmra.mxu0 %v851
    %v2998 = vpop.f32.mrf.mxu0
    %v2999 = vadd.f32 %v2742, %v2998
    %v3000 = vpop.f32.mrf.mxu0
    %v3001 = vadd.f32 %v2744, %v3000
    %3002 = vmatprep.mubr.f32.mxu0 %v858
    %3003 = vmatmul.mubr.f32.gmra.mxu0 %v857
    %v3004 = vpop.f32.mrf.mxu0
    %v3005 = vadd.f32 %v2748, %v3004
    %v3006 = vpop.f32.mrf.mxu0
    %v3007 = vadd.f32 %v2750, %v3006
    %3008 = vmatprep.mubr.f32.mxu0 %v864
    %3009 = vmatmul.mubr.f32.gmra.mxu0 %v863
    %v3010 = vpop.f32.mrf.mxu0
    %v3011 = vadd.f32 %v2754, %v3010
    %v3012 = vpop.f32.mrf.mxu0
    %v3013 = vadd.f32 %v2756, %v3012
    %3014 = vmatprep.mubr.f32.mxu0 %v870
    %3015 = vmatmul.mubr.f32.gmra.mxu0 %v869
    %v3016 = vpop.f32.mrf.mxu0
    %v3017 = vadd.f32 %v2760, %v3016
    %v3018 = vpop.f32.mrf.mxu0
    %v3019 = vadd.f32 %v2762, %v3018
    %3020 = vmatprep.mubr.f32.mxu0 %v876
    %3021 = vmatmul.mubr.f32.gmra.mxu0 %v875
    %v3022 = vpop.f32.mrf.mxu0
    %v3023 = vadd.f32 %v2766, %v3022
    %v3024 = vpop.f32.mrf.mxu0
    %v3025 = vadd.f32 %v2768, %v3024
    %3026 = vmatprep.mubr.f32.mxu0 %v882
    %3027 = vmatmul.mubr.f32.gmra.mxu0 %v881
    %v3028 = vpop.f32.mrf.mxu0
    %v3029 = vadd.f32 %v2772, %v3028
    %v3030 = vpop.f32.mrf.mxu0
    %v3031 = vadd.f32 %v2774, %v3030
    %3032 = vmatprep.mubr.f32.mxu0 %v888
    %3033 = vmatmul.mubr.f32.gmra.mxu0 %v887
    %v3034 = vpop.f32.mrf.mxu0
    %v3035 = vadd.f32 %v2778, %v3034
    %v3036 = vpop.f32.mrf.mxu0
    %v3037 = vadd.f32 %v2780, %v3036
    %3038 = vmatprep.mubr.f32.mxu0 %v894
    %3039 = vmatmul.mubr.f32.gmra.mxu0 %v893
    %v3040 = vpop.f32.mrf.mxu0
    %v3041 = vadd.f32 %v2784, %v3040
    %v3042 = vpop.f32.mrf.mxu0
    %v3043 = vadd.f32 %v2786, %v3042
    %3044 = vmatprep.mubr.f32.mxu0 %v900
    %3045 = vmatmul.mubr.f32.gmra.mxu0 %v899
    %v3046 = vpop.f32.mrf.mxu0
    %v3047 = vadd.f32 %v2790, %v3046
    %v3048 = vpop.f32.mrf.mxu0
    %v3049 = vadd.f32 %v2792, %v3048
    %3050 = vmatprep.mubr.f32.mxu0 %v906
    %3051 = vmatmul.mubr.f32.gmra.mxu0 %v905
    %v3052 = vpop.f32.mrf.mxu0
    %v3053 = vadd.f32 %v2796, %v3052
    %v3054 = vpop.f32.mrf.mxu0
    %v3055 = vadd.f32 %v2798, %v3054
    %3056 = vmatprep.mubr.f32.mxu0 %v912
    %3057 = vmatmul.mubr.f32.gmra.mxu0 %v911
    %v3058 = vpop.f32.mrf.mxu0
    %v3059 = vadd.f32 %v2802, %v3058
    %v3060 = vpop.f32.mrf.mxu0
    %v3061 = vadd.f32 %v2804, %v3060
    %3062 = vmatprep.mubr.f32.mxu0 %v918
    %3063 = vmatmul.mubr.f32.gmra.mxu0 %v917
    %v3064 = vpop.f32.mrf.mxu0
    %v3065 = vadd.f32 %v2808, %v3064
    %v3066 = vpop.f32.mrf.mxu0
    %v3067 = vadd.f32 %v2810, %v3066
    %3068 = vmatprep.mubr.f32.mxu0 %v924
    %3069 = vmatmul.mubr.f32.gmra.mxu0 %v923
    %v3070 = vpop.f32.mrf.mxu0
    %v3071 = vadd.f32 %v2814, %v3070
    %v3072 = vpop.f32.mrf.mxu0
    %v3073 = vadd.f32 %v2816, %v3072
    %3074 = vmatprep.mubr.f32.mxu0 %v930
    %3075 = vmatmul.mubr.f32.gmra.mxu0 %v929
    %v3076 = vpop.f32.mrf.mxu0
    %v3077 = vadd.f32 %v2820, %v3076
    %v3078 = vpop.f32.mrf.mxu0
    %v3079 = vadd.f32 %v2822, %v3078
    %3080 = vdwg.mxu0
    %3081 = vmatprep.subr.mxu0 %v1026
    %3082 = vmatpush1.msra.mxu0 %v1025
    %3083 = vmatprep.subr.mxu0 %v1020
    %3084 = vmatpush1.msra.mxu0 %v1019
    %3085 = vmatprep.subr.mxu0 %v1014
    %3086 = vmatpush1.msra.mxu0 %v1013
    %3087 = vmatprep.subr.mxu0 %v1008
    %3088 = vmatpush1.msra.mxu0 %v1007
    %3089 = vmatprep.subr.mxu0 %v1002
    %3090 = vmatpush1.msra.mxu0 %v1001
    %3091 = vmatprep.subr.mxu0 %v996
    %3092 = vmatpush1.msra.mxu0 %v995
    %3093 = vmatprep.subr.mxu0 %v990
    %3094 = vmatpush1.msra.mxu0 %v989
    %3095 = vmatprep.subr.mxu0 %v984
    %3096 = vmatpush1.msra.mxu0 %v983
    %3097 = vmatprep.subr.mxu0 %v978
    %3098 = vmatpush1.msra.mxu0 %v977
    %3099 = vmatprep.subr.mxu0 %v972
    %3100 = vmatpush1.msra.mxu0 %v971
    %3101 = vmatprep.subr.mxu0 %v966
    %3102 = vmatpush1.msra.mxu0 %v965
    %3103 = vmatprep.subr.mxu0 %v960
    %3104 = vmatpush1.msra.mxu0 %v959
    %3105 = vmatprep.subr.mxu0 %v954
    %3106 = vmatpush1.msra.mxu0 %v953
    %3107 = vmatprep.subr.mxu0 %v948
    %3108 = vmatpush1.msra.mxu0 %v947
    %3109 = vmatprep.subr.mxu0 %v942
    %3110 = vmatpush1.msra.mxu0 %v941
    %3111 = vmatprep.subr.mxu0 %v936
    %3112 = vmatpush1.msra.mxu0 %v935
    %3113 = vmatprep.subr.mxu0 %v1122
    %3114 = vmatpush2.msra.mxu0 %v1121
    %3115 = vmatprep.subr.mxu0 %v1116
    %3116 = vmatpush2.msra.mxu0 %v1115
    %3117 = vmatprep.subr.mxu0 %v1110
    %3118 = vmatpush2.msra.mxu0 %v1109
    %3119 = vmatprep.subr.mxu0 %v1104
    %3120 = vmatpush2.msra.mxu0 %v1103
    %3121 = vmatprep.subr.mxu0 %v1098
    %3122 = vmatpush2.msra.mxu0 %v1097
    %3123 = vmatprep.subr.mxu0 %v1092
    %3124 = vmatpush2.msra.mxu0 %v1091
    %3125 = vmatprep.subr.mxu0 %v1086
    %3126 = vmatpush2.msra.mxu0 %v1085
    %3127 = vmatprep.subr.mxu0 %v1080
    %3128 = vmatpush2.msra.mxu0 %v1079
    %3129 = vmatprep.subr.mxu0 %v1074
    %3130 = vmatpush2.msra.mxu0 %v1073
    %3131 = vmatprep.subr.mxu0 %v1068
    %3132 = vmatpush2.msra.mxu0 %v1067
    %3133 = vmatprep.subr.mxu0 %v1062
    %3134 = vmatpush2.msra.mxu0 %v1061
    %3135 = vmatprep.subr.mxu0 %v1056
    %3136 = vmatpush2.msra.mxu0 %v1055
    %3137 = vmatprep.subr.mxu0 %v1050
    %3138 = vmatpush2.msra.mxu0 %v1049
    %3139 = vmatprep.subr.mxu0 %v1044
    %3140 = vmatpush2.msra.mxu0 %v1043
    %3141 = vmatprep.subr.mxu0 %v1038
    %3142 = vmatpush2.msra.mxu0 %v1037
    %3143 = vmatprep.subr.mxu0 %v1032
    %3144 = vmatpush2.msra.mxu0 %v1031
    %3145 = vmatprep.mubr.f32.mxu0 %v740
    %3146 = vmatmul.mubr.f32.gmra.mxu0 %v739
    %v3147 = vpop.f32.mrf.mxu0
    %v3148 = vadd.f32 %v1528, %v3147
    %v3149 = vpop.f32.mrf.mxu0
    %v3150 = vadd.f32 %v1532, %v3149
    %3151 = vmatprep.mubr.f32.mxu0 %v746
    %3152 = vmatmul.mubr.f32.gmra.mxu0 %v745
    %v3153 = vpop.f32.mrf.mxu0
    %v3154 = vadd.f32 %v1528, %v3153
    %v3155 = vpop.f32.mrf.mxu0
    %v3156 = vadd.f32 %v1532, %v3155
    %3157 = vmatprep.mubr.f32.mxu0 %v752
    %3158 = vmatmul.mubr.f32.gmra.mxu0 %v751
    %v3159 = vpop.f32.mrf.mxu0
    %v3160 = vadd.f32 %v1528, %v3159
    %v3161 = vpop.f32.mrf.mxu0
    %v3162 = vadd.f32 %v1532, %v3161
    %3163 = vmatprep.mubr.f32.mxu0 %v758
    %3164 = vmatmul.mubr.f32.gmra.mxu0 %v757
    %v3165 = vpop.f32.mrf.mxu0
    %v3166 = vadd.f32 %v1528, %v3165
    %v3167 = vpop.f32.mrf.mxu0
    %v3168 = vadd.f32 %v1532, %v3167
    %3169 = vmatprep.mubr.f32.mxu0 %v764
    %3170 = vmatmul.mubr.f32.gmra.mxu0 %v763
    %v3171 = vpop.f32.mrf.mxu0
    %v3172 = vadd.f32 %v1528, %v3171
    %v3173 = vpop.f32.mrf.mxu0
    %v3174 = vadd.f32 %v1532, %v3173
    %3175 = vmatprep.mubr.f32.mxu0 %v770
    %3176 = vmatmul.mubr.f32.gmra.mxu0 %v769
    %v3177 = vpop.f32.mrf.mxu0
    %v3178 = vadd.f32 %v1528, %v3177
    %v3179 = vpop.f32.mrf.mxu0
    %v3180 = vadd.f32 %v1532, %v3179
    %3181 = vmatprep.mubr.f32.mxu0 %v776
    %3182 = vmatmul.mubr.f32.gmra.mxu0 %v775
    %v3183 = vpop.f32.mrf.mxu0
    %v3184 = vadd.f32 %v1528, %v3183
    %v3185 = vpop.f32.mrf.mxu0
    %v3186 = vadd.f32 %v1532, %v3185
    %3187 = vmatprep.mubr.f32.mxu0 %v782
    %3188 = vmatmul.mubr.f32.gmra.mxu0 %v781
    %v3189 = vpop.f32.mrf.mxu0
    %v3190 = vadd.f32 %v1528, %v3189
    %v3191 = vpop.f32.mrf.mxu0
    %v3192 = vadd.f32 %v1532, %v3191
    %3193 = vmatprep.mubr.f32.mxu0 %v788
    %3194 = vmatmul.mubr.f32.gmra.mxu0 %v787
    %v3195 = vpop.f32.mrf.mxu0
    %v3196 = vadd.f32 %v1528, %v3195
    %v3197 = vpop.f32.mrf.mxu0
    %v3198 = vadd.f32 %v1532, %v3197
    %3199 = vmatprep.mubr.f32.mxu0 %v794
    %3200 = vmatmul.mubr.f32.gmra.mxu0 %v793
    %v3201 = vpop.f32.mrf.mxu0
    %v3202 = vadd.f32 %v1528, %v3201
    %v3203 = vpop.f32.mrf.mxu0
    %v3204 = vadd.f32 %v1532, %v3203
    %3205 = vmatprep.mubr.f32.mxu0 %v800
    %3206 = vmatmul.mubr.f32.gmra.mxu0 %v799
    %v3207 = vpop.f32.mrf.mxu0
    %v3208 = vadd.f32 %v1528, %v3207
    %v3209 = vpop.f32.mrf.mxu0
    %v3210 = vadd.f32 %v1532, %v3209
    %3211 = vmatprep.mubr.f32.mxu0 %v806
    %3212 = vmatmul.mubr.f32.gmra.mxu0 %v805
    %v3213 = vpop.f32.mrf.mxu0
    %v3214 = vadd.f32 %v1528, %v3213
    %v3215 = vpop.f32.mrf.mxu0
    %v3216 = vadd.f32 %v1532, %v3215
    %3217 = vmatprep.mubr.f32.mxu0 %v812
    %3218 = vmatmul.mubr.f32.gmra.mxu0 %v811
    %v3219 = vpop.f32.mrf.mxu0
    %v3220 = vadd.f32 %v1528, %v3219
    %v3221 = vpop.f32.mrf.mxu0
    %v3222 = vadd.f32 %v1532, %v3221
    %3223 = vmatprep.mubr.f32.mxu0 %v818
    %3224 = vmatmul.mubr.f32.gmra.mxu0 %v817
    %v3225 = vpop.f32.mrf.mxu0
    %v3226 = vadd.f32 %v1528, %v3225
    %v3227 = vpop.f32.mrf.mxu0
    %v3228 = vadd.f32 %v1532, %v3227
    %3229 = vmatprep.mubr.f32.mxu0 %v824
    %3230 = vmatmul.mubr.f32.gmra.mxu0 %v823
    %v3231 = vpop.f32.mrf.mxu0
    %v3232 = vadd.f32 %v1528, %v3231
    %v3233 = vpop.f32.mrf.mxu0
    %v3234 = vadd.f32 %v1532, %v3233
    %3235 = vmatprep.mubr.f32.mxu0 %v830
    %3236 = vmatmul.mubr.f32.gmra.mxu0 %v829
    %v3237 = vpop.f32.mrf.mxu0
    %v3238 = vadd.f32 %v1528, %v3237
    %v3239 = vpop.f32.mrf.mxu0
    %v3240 = vadd.f32 %v1532, %v3239
    %3241 = vmatprep.mubr.f32.mxu0 %v836
    %3242 = vmatmul.mubr.f32.gmra.mxu0 %v835
    %v3243 = vpop.f32.mrf.mxu0
    %v3244 = vadd.f32 %v1528, %v3243
    %v3245 = vpop.f32.mrf.mxu0
    %v3246 = vadd.f32 %v1532, %v3245
    %3247 = vmatprep.mubr.f32.mxu0 %v842
    %3248 = vmatmul.mubr.f32.gmra.mxu0 %v841
    %v3249 = vpop.f32.mrf.mxu0
    %v3250 = vadd.f32 %v1528, %v3249
    %v3251 = vpop.f32.mrf.mxu0
    %v3252 = vadd.f32 %v1532, %v3251
    %3253 = vmatprep.mubr.f32.mxu0 %v848
    %3254 = vmatmul.mubr.f32.gmra.mxu0 %v847
    %v3255 = vpop.f32.mrf.mxu0
    %v3256 = vadd.f32 %v1528, %v3255
    %v3257 = vpop.f32.mrf.mxu0
    %v3258 = vadd.f32 %v1532, %v3257
    %3259 = vmatprep.mubr.f32.mxu0 %v854
    %3260 = vmatmul.mubr.f32.gmra.mxu0 %v853
    %v3261 = vpop.f32.mrf.mxu0
    %v3262 = vadd.f32 %v1528, %v3261
    %v3263 = vpop.f32.mrf.mxu0
    %v3264 = vadd.f32 %v1532, %v3263
    %3265 = vmatprep.mubr.f32.mxu0 %v860
    %3266 = vmatmul.mubr.f32.gmra.mxu0 %v859
    %v3267 = vpop.f32.mrf.mxu0
    %v3268 = vadd.f32 %v1528, %v3267
    %v3269 = vpop.f32.mrf.mxu0
    %v3270 = vadd.f32 %v1532, %v3269
    %3271 = vmatprep.mubr.f32.mxu0 %v866
    %3272 = vmatmul.mubr.f32.gmra.mxu0 %v865
    %v3273 = vpop.f32.mrf.mxu0
    %v3274 = vadd.f32 %v1528, %v3273
    %v3275 = vpop.f32.mrf.mxu0
    %v3276 = vadd.f32 %v1532, %v3275
    %3277 = vmatprep.mubr.f32.mxu0 %v872
    %3278 = vmatmul.mubr.f32.gmra.mxu0 %v871
    %v3279 = vpop.f32.mrf.mxu0
    %v3280 = vadd.f32 %v1528, %v3279
    %v3281 = vpop.f32.mrf.mxu0
    %v3282 = vadd.f32 %v1532, %v3281
    %3283 = vmatprep.mubr.f32.mxu0 %v878
    %3284 = vmatmul.mubr.f32.gmra.mxu0 %v877
    %v3285 = vpop.f32.mrf.mxu0
    %v3286 = vadd.f32 %v1528, %v3285
    %v3287 = vpop.f32.mrf.mxu0
    %v3288 = vadd.f32 %v1532, %v3287
    %3289 = vmatprep.mubr.f32.mxu0 %v884
    %3290 = vmatmul.mubr.f32.gmra.mxu0 %v883
    %v3291 = vpop.f32.mrf.mxu0
    %v3292 = vadd.f32 %v1528, %v3291
    %v3293 = vpop.f32.mrf.mxu0
    %v3294 = vadd.f32 %v1532, %v3293
    %3295 = vmatprep.mubr.f32.mxu0 %v890
    %3296 = vmatmul.mubr.f32.gmra.mxu0 %v889
    %v3297 = vpop.f32.mrf.mxu0
    %v3298 = vadd.f32 %v1528, %v3297
    %v3299 = vpop.f32.mrf.mxu0
    %v3300 = vadd.f32 %v1532, %v3299
    %3301 = vmatprep.mubr.f32.mxu0 %v896
    %3302 = vmatmul.mubr.f32.gmra.mxu0 %v895
    %v3303 = vpop.f32.mrf.mxu0
    %v3304 = vadd.f32 %v1528, %v3303
    %v3305 = vpop.f32.mrf.mxu0
    %v3306 = vadd.f32 %v1532, %v3305
    %3307 = vmatprep.mubr.f32.mxu0 %v902
    %3308 = vmatmul.mubr.f32.gmra.mxu0 %v901
    %v3309 = vpop.f32.mrf.mxu0
    %v3310 = vadd.f32 %v1528, %v3309
    %v3311 = vpop.f32.mrf.mxu0
    %v3312 = vadd.f32 %v1532, %v3311
    %3313 = vmatprep.mubr.f32.mxu0 %v908
    %3314 = vmatmul.mubr.f32.gmra.mxu0 %v907
    %v3315 = vpop.f32.mrf.mxu0
    %v3316 = vadd.f32 %v1528, %v3315
    %v3317 = vpop.f32.mrf.mxu0
    %v3318 = vadd.f32 %v1532, %v3317
    %3319 = vmatprep.mubr.f32.mxu0 %v914
    %3320 = vmatmul.mubr.f32.gmra.mxu0 %v913
    %v3321 = vpop.f32.mrf.mxu0
    %v3322 = vadd.f32 %v1528, %v3321
    %v3323 = vpop.f32.mrf.mxu0
    %v3324 = vadd.f32 %v1532, %v3323
    %3325 = vmatprep.mubr.f32.mxu0 %v920
    %3326 = vmatmul.mubr.f32.gmra.mxu0 %v919
    %v3327 = vpop.f32.mrf.mxu0
    %v3328 = vadd.f32 %v1528, %v3327
    %v3329 = vpop.f32.mrf.mxu0
    %v3330 = vadd.f32 %v1532, %v3329
    %3331 = vmatprep.mubr.f32.mxu0 %v926
    %3332 = vmatmul.mubr.f32.gmra.mxu0 %v925
    %v3333 = vpop.f32.mrf.mxu0
    %v3334 = vadd.f32 %v1528, %v3333
    %v3335 = vpop.f32.mrf.mxu0
    %v3336 = vadd.f32 %v1532, %v3335
    %3337 = vdwg.mxu0
    %3338 = vmatprep.subr.mxu0 %v1218
    %3339 = vmatpush1.msra.mxu0 %v1217
    %3340 = vmatprep.subr.mxu0 %v1212
    %3341 = vmatpush1.msra.mxu0 %v1211
    %3342 = vmatprep.subr.mxu0 %v1206
    %3343 = vmatpush1.msra.mxu0 %v1205
    %3344 = vmatprep.subr.mxu0 %v1200
    %3345 = vmatpush1.msra.mxu0 %v1199
    %3346 = vmatprep.subr.mxu0 %v1194
    %3347 = vmatpush1.msra.mxu0 %v1193
    %3348 = vmatprep.subr.mxu0 %v1188
    %3349 = vmatpush1.msra.mxu0 %v1187
    %3350 = vmatprep.subr.mxu0 %v1182
    %3351 = vmatpush1.msra.mxu0 %v1181
    %3352 = vmatprep.subr.mxu0 %v1176
    %3353 = vmatpush1.msra.mxu0 %v1175
    %3354 = vmatprep.subr.mxu0 %v1170
    %3355 = vmatpush1.msra.mxu0 %v1169
    %3356 = vmatprep.subr.mxu0 %v1164
    %3357 = vmatpush1.msra.mxu0 %v1163
    %3358 = vmatprep.subr.mxu0 %v1158
    %3359 = vmatpush1.msra.mxu0 %v1157
    %3360 = vmatprep.subr.mxu0 %v1152
    %3361 = vmatpush1.msra.mxu0 %v1151
    %3362 = vmatprep.subr.mxu0 %v1146
    %3363 = vmatpush1.msra.mxu0 %v1145
    %3364 = vmatprep.subr.mxu0 %v1140
    %3365 = vmatpush1.msra.mxu0 %v1139
    %3366 = vmatprep.subr.mxu0 %v1134
    %3367 = vmatpush1.msra.mxu0 %v1133
    %3368 = vmatprep.subr.mxu0 %v1128
    %3369 = vmatpush1.msra.mxu0 %v1127
    %3370 = vmatprep.subr.mxu0 %v1314
    %3371 = vmatpush2.msra.mxu0 %v1313
    %3372 = vmatprep.subr.mxu0 %v1308
    %3373 = vmatpush2.msra.mxu0 %v1307
    %3374 = vmatprep.subr.mxu0 %v1302
    %3375 = vmatpush2.msra.mxu0 %v1301
    %3376 = vmatprep.subr.mxu0 %v1296
    %3377 = vmatpush2.msra.mxu0 %v1295
    %3378 = vmatprep.subr.mxu0 %v1290
    %3379 = vmatpush2.msra.mxu0 %v1289
    %3380 = vmatprep.subr.mxu0 %v1284
    %3381 = vmatpush2.msra.mxu0 %v1283
    %3382 = vmatprep.subr.mxu0 %v1278
    %3383 = vmatpush2.msra.mxu0 %v1277
    %3384 = vmatprep.subr.mxu0 %v1272
    %3385 = vmatpush2.msra.mxu0 %v1271
    %3386 = vmatprep.subr.mxu0 %v1266
    %3387 = vmatpush2.msra.mxu0 %v1265
    %3388 = vmatprep.subr.mxu0 %v1260
    %3389 = vmatpush2.msra.mxu0 %v1259
    %3390 = vmatprep.subr.mxu0 %v1254
    %3391 = vmatpush2.msra.mxu0 %v1253
    %3392 = vmatprep.subr.mxu0 %v1248
    %3393 = vmatpush2.msra.mxu0 %v1247
    %3394 = vmatprep.subr.mxu0 %v1242
    %3395 = vmatpush2.msra.mxu0 %v1241
    %3396 = vmatprep.subr.mxu0 %v1236
    %3397 = vmatpush2.msra.mxu0 %v1235
    %3398 = vmatprep.subr.mxu0 %v1230
    %3399 = vmatpush2.msra.mxu0 %v1229
    %3400 = vmatprep.subr.mxu0 %v1224
    %3401 = vmatpush2.msra.mxu0 %v1223
    %3402 = vmatprep.mubr.f32.mxu0 %v742
    %3403 = vmatmul.mubr.f32.gmra.mxu0 %v741
    %v3404 = vpop.f32.mrf.mxu0
    %v3405 = vadd.f32 %v3148, %v3404
    %v3406 = vpop.f32.mrf.mxu0
    %v3407 = vadd.f32 %v3150, %v3406
    %3408 = vmatprep.mubr.f32.mxu0 %v748
    %3409 = vmatmul.mubr.f32.gmra.mxu0 %v747
    %v3410 = vpop.f32.mrf.mxu0
    %v3411 = vadd.f32 %v3154, %v3410
    %v3412 = vpop.f32.mrf.mxu0
    %v3413 = vadd.f32 %v3156, %v3412
    %3414 = vmatprep.mubr.f32.mxu0 %v754
    %3415 = vmatmul.mubr.f32.gmra.mxu0 %v753
    %v3416 = vpop.f32.mrf.mxu0
    %v3417 = vadd.f32 %v3160, %v3416
    %v3418 = vpop.f32.mrf.mxu0
    %v3419 = vadd.f32 %v3162, %v3418
    %3420 = vmatprep.mubr.f32.mxu0 %v760
    %3421 = vmatmul.mubr.f32.gmra.mxu0 %v759
    %v3422 = vpop.f32.mrf.mxu0
    %v3423 = vadd.f32 %v3166, %v3422
    %v3424 = vpop.f32.mrf.mxu0
    %v3425 = vadd.f32 %v3168, %v3424
    %3426 = vmatprep.mubr.f32.mxu0 %v766
    %3427 = vmatmul.mubr.f32.gmra.mxu0 %v765
    %v3428 = vpop.f32.mrf.mxu0
    %v3429 = vadd.f32 %v3172, %v3428
    %v3430 = vpop.f32.mrf.mxu0
    %v3431 = vadd.f32 %v3174, %v3430
    %3432 = vmatprep.mubr.f32.mxu0 %v772
    %3433 = vmatmul.mubr.f32.gmra.mxu0 %v771
    %v3434 = vpop.f32.mrf.mxu0
    %v3435 = vadd.f32 %v3178, %v3434
    %v3436 = vpop.f32.mrf.mxu0
    %v3437 = vadd.f32 %v3180, %v3436
    %3438 = vmatprep.mubr.f32.mxu0 %v778
    %3439 = vmatmul.mubr.f32.gmra.mxu0 %v777
    %v3440 = vpop.f32.mrf.mxu0
    %v3441 = vadd.f32 %v3184, %v3440
    %v3442 = vpop.f32.mrf.mxu0
    %v3443 = vadd.f32 %v3186, %v3442
    %3444 = vmatprep.mubr.f32.mxu0 %v784
    %3445 = vmatmul.mubr.f32.gmra.mxu0 %v783
    %v3446 = vpop.f32.mrf.mxu0
    %v3447 = vadd.f32 %v3190, %v3446
    %v3448 = vpop.f32.mrf.mxu0
    %v3449 = vadd.f32 %v3192, %v3448
    %3450 = vmatprep.mubr.f32.mxu0 %v790
    %3451 = vmatmul.mubr.f32.gmra.mxu0 %v789
    %v3452 = vpop.f32.mrf.mxu0
    %v3453 = vadd.f32 %v3196, %v3452
    %v3454 = vpop.f32.mrf.mxu0
    %v3455 = vadd.f32 %v3198, %v3454
    %3456 = vmatprep.mubr.f32.mxu0 %v796
    %3457 = vmatmul.mubr.f32.gmra.mxu0 %v795
    %v3458 = vpop.f32.mrf.mxu0
    %v3459 = vadd.f32 %v3202, %v3458
    %v3460 = vpop.f32.mrf.mxu0
    %v3461 = vadd.f32 %v3204, %v3460
    %3462 = vmatprep.mubr.f32.mxu0 %v802
    %3463 = vmatmul.mubr.f32.gmra.mxu0 %v801
    %v3464 = vpop.f32.mrf.mxu0
    %v3465 = vadd.f32 %v3208, %v3464
    %v3466 = vpop.f32.mrf.mxu0
    %v3467 = vadd.f32 %v3210, %v3466
    %3468 = vmatprep.mubr.f32.mxu0 %v808
    %3469 = vmatmul.mubr.f32.gmra.mxu0 %v807
    %v3470 = vpop.f32.mrf.mxu0
    %v3471 = vadd.f32 %v3214, %v3470
    %v3472 = vpop.f32.mrf.mxu0
    %v3473 = vadd.f32 %v3216, %v3472
    %3474 = vmatprep.mubr.f32.mxu0 %v814
    %3475 = vmatmul.mubr.f32.gmra.mxu0 %v813
    %v3476 = vpop.f32.mrf.mxu0
    %v3477 = vadd.f32 %v3220, %v3476
    %v3478 = vpop.f32.mrf.mxu0
    %v3479 = vadd.f32 %v3222, %v3478
    %3480 = vmatprep.mubr.f32.mxu0 %v820
    %3481 = vmatmul.mubr.f32.gmra.mxu0 %v819
    %v3482 = vpop.f32.mrf.mxu0
    %v3483 = vadd.f32 %v3226, %v3482
    %v3484 = vpop.f32.mrf.mxu0
    %v3485 = vadd.f32 %v3228, %v3484
    %3486 = vmatprep.mubr.f32.mxu0 %v826
    %3487 = vmatmul.mubr.f32.gmra.mxu0 %v825
    %v3488 = vpop.f32.mrf.mxu0
    %v3489 = vadd.f32 %v3232, %v3488
    %v3490 = vpop.f32.mrf.mxu0
    %v3491 = vadd.f32 %v3234, %v3490
    %3492 = vmatprep.mubr.f32.mxu0 %v832
    %3493 = vmatmul.mubr.f32.gmra.mxu0 %v831
    %v3494 = vpop.f32.mrf.mxu0
    %v3495 = vadd.f32 %v3238, %v3494
    %v3496 = vpop.f32.mrf.mxu0
    %v3497 = vadd.f32 %v3240, %v3496
    %3498 = vmatprep.mubr.f32.mxu0 %v838
    %3499 = vmatmul.mubr.f32.gmra.mxu0 %v837
    %v3500 = vpop.f32.mrf.mxu0
    %v3501 = vadd.f32 %v3244, %v3500
    %v3502 = vpop.f32.mrf.mxu0
    %v3503 = vadd.f32 %v3246, %v3502
    %3504 = vmatprep.mubr.f32.mxu0 %v844
    %3505 = vmatmul.mubr.f32.gmra.mxu0 %v843
    %v3506 = vpop.f32.mrf.mxu0
    %v3507 = vadd.f32 %v3250, %v3506
    %v3508 = vpop.f32.mrf.mxu0
    %v3509 = vadd.f32 %v3252, %v3508
    %3510 = vmatprep.mubr.f32.mxu0 %v850
    %3511 = vmatmul.mubr.f32.gmra.mxu0 %v849
    %v3512 = vpop.f32.mrf.mxu0
    %v3513 = vadd.f32 %v3256, %v3512
    %v3514 = vpop.f32.mrf.mxu0
    %v3515 = vadd.f32 %v3258, %v3514
    %3516 = vmatprep.mubr.f32.mxu0 %v856
    %3517 = vmatmul.mubr.f32.gmra.mxu0 %v855
    %v3518 = vpop.f32.mrf.mxu0
    %v3519 = vadd.f32 %v3262, %v3518
    %v3520 = vpop.f32.mrf.mxu0
    %v3521 = vadd.f32 %v3264, %v3520
    %3522 = vmatprep.mubr.f32.mxu0 %v862
    %3523 = vmatmul.mubr.f32.gmra.mxu0 %v861
    %v3524 = vpop.f32.mrf.mxu0
    %v3525 = vadd.f32 %v3268, %v3524
    %v3526 = vpop.f32.mrf.mxu0
    %v3527 = vadd.f32 %v3270, %v3526
    %3528 = vmatprep.mubr.f32.mxu0 %v868
    %3529 = vmatmul.mubr.f32.gmra.mxu0 %v867
    %v3530 = vpop.f32.mrf.mxu0
    %v3531 = vadd.f32 %v3274, %v3530
    %v3532 = vpop.f32.mrf.mxu0
    %v3533 = vadd.f32 %v3276, %v3532
    %3534 = vmatprep.mubr.f32.mxu0 %v874
    %3535 = vmatmul.mubr.f32.gmra.mxu0 %v873
    %v3536 = vpop.f32.mrf.mxu0
    %v3537 = vadd.f32 %v3280, %v3536
    %v3538 = vpop.f32.mrf.mxu0
    %v3539 = vadd.f32 %v3282, %v3538
    %3540 = vmatprep.mubr.f32.mxu0 %v880
    %3541 = vmatmul.mubr.f32.gmra.mxu0 %v879
    %v3542 = vpop.f32.mrf.mxu0
    %v3543 = vadd.f32 %v3286, %v3542
    %v3544 = vpop.f32.mrf.mxu0
    %v3545 = vadd.f32 %v3288, %v3544
    %3546 = vmatprep.mubr.f32.mxu0 %v886
    %3547 = vmatmul.mubr.f32.gmra.mxu0 %v885
    %v3548 = vpop.f32.mrf.mxu0
    %v3549 = vadd.f32 %v3292, %v3548
    %v3550 = vpop.f32.mrf.mxu0
    %v3551 = vadd.f32 %v3294, %v3550
    %3552 = vmatprep.mubr.f32.mxu0 %v892
    %3553 = vmatmul.mubr.f32.gmra.mxu0 %v891
    %v3554 = vpop.f32.mrf.mxu0
    %v3555 = vadd.f32 %v3298, %v3554
    %v3556 = vpop.f32.mrf.mxu0
    %v3557 = vadd.f32 %v3300, %v3556
    %3558 = vmatprep.mubr.f32.mxu0 %v898
    %3559 = vmatmul.mubr.f32.gmra.mxu0 %v897
    %v3560 = vpop.f32.mrf.mxu0
    %v3561 = vadd.f32 %v3304, %v3560
    %v3562 = vpop.f32.mrf.mxu0
    %v3563 = vadd.f32 %v3306, %v3562
    %3564 = vmatprep.mubr.f32.mxu0 %v904
    %3565 = vmatmul.mubr.f32.gmra.mxu0 %v903
    %v3566 = vpop.f32.mrf.mxu0
    %v3567 = vadd.f32 %v3310, %v3566
    %v3568 = vpop.f32.mrf.mxu0
    %v3569 = vadd.f32 %v3312, %v3568
    %3570 = vmatprep.mubr.f32.mxu0 %v910
    %3571 = vmatmul.mubr.f32.gmra.mxu0 %v909
    %v3572 = vpop.f32.mrf.mxu0
    %v3573 = vadd.f32 %v3316, %v3572
    %v3574 = vpop.f32.mrf.mxu0
    %v3575 = vadd.f32 %v3318, %v3574
    %3576 = vmatprep.mubr.f32.mxu0 %v916
    %3577 = vmatmul.mubr.f32.gmra.mxu0 %v915
    %v3578 = vpop.f32.mrf.mxu0
    %v3579 = vadd.f32 %v3322, %v3578
    %v3580 = vpop.f32.mrf.mxu0
    %v3581 = vadd.f32 %v3324, %v3580
    %3582 = vmatprep.mubr.f32.mxu0 %v922
    %3583 = vmatmul.mubr.f32.gmra.mxu0 %v921
    %v3584 = vpop.f32.mrf.mxu0
    %v3585 = vadd.f32 %v3328, %v3584
    %v3586 = vpop.f32.mrf.mxu0
    %v3587 = vadd.f32 %v3330, %v3586
    %3588 = vmatprep.mubr.f32.mxu0 %v928
    %3589 = vmatmul.mubr.f32.gmra.mxu0 %v927
    %v3590 = vpop.f32.mrf.mxu0
    %v3591 = vadd.f32 %v3334, %v3590
    %v3592 = vpop.f32.mrf.mxu0
    %v3593 = vadd.f32 %v3336, %v3592
    %3594 = vdwg.mxu0
    %3595 = vmatprep.subr.mxu0 %v1410
    %3596 = vmatpush1.msra.mxu0 %v1409
    %3597 = vmatprep.subr.mxu0 %v1404
    %3598 = vmatpush1.msra.mxu0 %v1403
    %3599 = vmatprep.subr.mxu0 %v1398
    %3600 = vmatpush1.msra.mxu0 %v1397
    %3601 = vmatprep.subr.mxu0 %v1392
    %3602 = vmatpush1.msra.mxu0 %v1391
    %3603 = vmatprep.subr.mxu0 %v1386
    %3604 = vmatpush1.msra.mxu0 %v1385
    %3605 = vmatprep.subr.mxu0 %v1380
    %3606 = vmatpush1.msra.mxu0 %v1379
    %3607 = vmatprep.subr.mxu0 %v1374
    %3608 = vmatpush1.msra.mxu0 %v1373
    %3609 = vmatprep.subr.mxu0 %v1368
    %3610 = vmatpush1.msra.mxu0 %v1367
    %3611 = vmatprep.subr.mxu0 %v1362
    %3612 = vmatpush1.msra.mxu0 %v1361
    %3613 = vmatprep.subr.mxu0 %v1356
    %3614 = vmatpush1.msra.mxu0 %v1355
    %3615 = vmatprep.subr.mxu0 %v1350
    %3616 = vmatpush1.msra.mxu0 %v1349
    %3617 = vmatprep.subr.mxu0 %v1344
    %3618 = vmatpush1.msra.mxu0 %v1343
    %3619 = vmatprep.subr.mxu0 %v1338
    %3620 = vmatpush1.msra.mxu0 %v1337
    %3621 = vmatprep.subr.mxu0 %v1332
    %3622 = vmatpush1.msra.mxu0 %v1331
    %3623 = vmatprep.subr.mxu0 %v1326
    %3624 = vmatpush1.msra.mxu0 %v1325
    %3625 = vmatprep.subr.mxu0 %v1320
    %3626 = vmatpush1.msra.mxu0 %v1319
    %3627 = vmatprep.subr.mxu0 %v1506
    %3628 = vmatpush2.msra.mxu0 %v1505
    %3629 = vmatprep.subr.mxu0 %v1500
    %3630 = vmatpush2.msra.mxu0 %v1499
    %3631 = vmatprep.subr.mxu0 %v1494
    %3632 = vmatpush2.msra.mxu0 %v1493
    %3633 = vmatprep.subr.mxu0 %v1488
    %3634 = vmatpush2.msra.mxu0 %v1487
    %3635 = vmatprep.subr.mxu0 %v1482
    %3636 = vmatpush2.msra.mxu0 %v1481
    %3637 = vmatprep.subr.mxu0 %v1476
    %3638 = vmatpush2.msra.mxu0 %v1475
    %3639 = vmatprep.subr.mxu0 %v1470
    %3640 = vmatpush2.msra.mxu0 %v1469
    %3641 = vmatprep.subr.mxu0 %v1464
    %3642 = vmatpush2.msra.mxu0 %v1463
    %3643 = vmatprep.subr.mxu0 %v1458
    %3644 = vmatpush2.msra.mxu0 %v1457
    %3645 = vmatprep.subr.mxu0 %v1452
    %3646 = vmatpush2.msra.mxu0 %v1451
    %3647 = vmatprep.subr.mxu0 %v1446
    %3648 = vmatpush2.msra.mxu0 %v1445
    %3649 = vmatprep.subr.mxu0 %v1440
    %3650 = vmatpush2.msra.mxu0 %v1439
    %3651 = vmatprep.subr.mxu0 %v1434
    %3652 = vmatpush2.msra.mxu0 %v1433
    %3653 = vmatprep.subr.mxu0 %v1428
    %3654 = vmatpush2.msra.mxu0 %v1427
    %3655 = vmatprep.subr.mxu0 %v1422
    %3656 = vmatpush2.msra.mxu0 %v1421
    %3657 = vmatprep.subr.mxu0 %v1416
    %3658 = vmatpush2.msra.mxu0 %v1415
    %3659 = vmatprep.mubr.f32.mxu0 %v744
    %3660 = vmatmul.mubr.f32.gmra.mxu0 %v743
    %v3661 = vpop.f32.mrf.mxu0
    %v3662 = vadd.f32 %v3405, %v3661
    %v3663 = vpop.f32.mrf.mxu0
    %v3664 = vadd.f32 %v3407, %v3663
    %3665 = vmatprep.mubr.f32.mxu0 %v750
    %3666 = vmatmul.mubr.f32.gmra.mxu0 %v749
    %v3667 = vpop.f32.mrf.mxu0
    %v3668 = vadd.f32 %v3411, %v3667
    %v3669 = vpop.f32.mrf.mxu0
    %v3670 = vadd.f32 %v3413, %v3669
    %3671 = vmatprep.mubr.f32.mxu0 %v756
    %3672 = vmatmul.mubr.f32.gmra.mxu0 %v755
    %v3673 = vpop.f32.mrf.mxu0
    %v3674 = vadd.f32 %v3417, %v3673
    %v3675 = vpop.f32.mrf.mxu0
    %v3676 = vadd.f32 %v3419, %v3675
    %3677 = vmatprep.mubr.f32.mxu0 %v762
    %3678 = vmatmul.mubr.f32.gmra.mxu0 %v761
    %v3679 = vpop.f32.mrf.mxu0
    %v3680 = vadd.f32 %v3423, %v3679
    %v3681 = vpop.f32.mrf.mxu0
    %v3682 = vadd.f32 %v3425, %v3681
    %3683 = vmatprep.mubr.f32.mxu0 %v768
    %3684 = vmatmul.mubr.f32.gmra.mxu0 %v767
    %v3685 = vpop.f32.mrf.mxu0
    %v3686 = vadd.f32 %v3429, %v3685
    %v3687 = vpop.f32.mrf.mxu0
    %v3688 = vadd.f32 %v3431, %v3687
    %3689 = vmatprep.mubr.f32.mxu0 %v774
    %3690 = vmatmul.mubr.f32.gmra.mxu0 %v773
    %v3691 = vpop.f32.mrf.mxu0
    %v3692 = vadd.f32 %v3435, %v3691
    %v3693 = vpop.f32.mrf.mxu0
    %v3694 = vadd.f32 %v3437, %v3693
    %3695 = vmatprep.mubr.f32.mxu0 %v780
    %3696 = vmatmul.mubr.f32.gmra.mxu0 %v779
    %v3697 = vpop.f32.mrf.mxu0
    %v3698 = vadd.f32 %v3441, %v3697
    %v3699 = vpop.f32.mrf.mxu0
    %v3700 = vadd.f32 %v3443, %v3699
    %3701 = vmatprep.mubr.f32.mxu0 %v786
    %3702 = vmatmul.mubr.f32.gmra.mxu0 %v785
    %v3703 = vpop.f32.mrf.mxu0
    %v3704 = vadd.f32 %v3447, %v3703
    %v3705 = vpop.f32.mrf.mxu0
    %v3706 = vadd.f32 %v3449, %v3705
    %3707 = vmatprep.mubr.f32.mxu0 %v792
    %3708 = vmatmul.mubr.f32.gmra.mxu0 %v791
    %v3709 = vpop.f32.mrf.mxu0
    %v3710 = vadd.f32 %v3453, %v3709
    %v3711 = vpop.f32.mrf.mxu0
    %v3712 = vadd.f32 %v3455, %v3711
    %3713 = vmatprep.mubr.f32.mxu0 %v798
    %3714 = vmatmul.mubr.f32.gmra.mxu0 %v797
    %v3715 = vpop.f32.mrf.mxu0
    %v3716 = vadd.f32 %v3459, %v3715
    %v3717 = vpop.f32.mrf.mxu0
    %v3718 = vadd.f32 %v3461, %v3717
    %3719 = vmatprep.mubr.f32.mxu0 %v804
    %3720 = vmatmul.mubr.f32.gmra.mxu0 %v803
    %v3721 = vpop.f32.mrf.mxu0
    %v3722 = vadd.f32 %v3465, %v3721
    %v3723 = vpop.f32.mrf.mxu0
    %v3724 = vadd.f32 %v3467, %v3723
    %3725 = vmatprep.mubr.f32.mxu0 %v810
    %3726 = vmatmul.mubr.f32.gmra.mxu0 %v809
    %v3727 = vpop.f32.mrf.mxu0
    %v3728 = vadd.f32 %v3471, %v3727
    %v3729 = vpop.f32.mrf.mxu0
    %v3730 = vadd.f32 %v3473, %v3729
    %3731 = vmatprep.mubr.f32.mxu0 %v816
    %3732 = vmatmul.mubr.f32.gmra.mxu0 %v815
    %v3733 = vpop.f32.mrf.mxu0
    %v3734 = vadd.f32 %v3477, %v3733
    %v3735 = vpop.f32.mrf.mxu0
    %v3736 = vadd.f32 %v3479, %v3735
    %3737 = vmatprep.mubr.f32.mxu0 %v822
    %3738 = vmatmul.mubr.f32.gmra.mxu0 %v821
    %v3739 = vpop.f32.mrf.mxu0
    %v3740 = vadd.f32 %v3483, %v3739
    %v3741 = vpop.f32.mrf.mxu0
    %v3742 = vadd.f32 %v3485, %v3741
    %3743 = vmatprep.mubr.f32.mxu0 %v828
    %3744 = vmatmul.mubr.f32.gmra.mxu0 %v827
    %v3745 = vpop.f32.mrf.mxu0
    %v3746 = vadd.f32 %v3489, %v3745
    %v3747 = vpop.f32.mrf.mxu0
    %v3748 = vadd.f32 %v3491, %v3747
    %3749 = vmatprep.mubr.f32.mxu0 %v834
    %3750 = vmatmul.mubr.f32.gmra.mxu0 %v833
    %v3751 = vpop.f32.mrf.mxu0
    %v3752 = vadd.f32 %v3495, %v3751
    %v3753 = vpop.f32.mrf.mxu0
    %v3754 = vadd.f32 %v3497, %v3753
    %3755 = vmatprep.mubr.f32.mxu0 %v840
    %3756 = vmatmul.mubr.f32.gmra.mxu0 %v839
    %v3757 = vpop.f32.mrf.mxu0
    %v3758 = vadd.f32 %v3501, %v3757
    %v3759 = vpop.f32.mrf.mxu0
    %v3760 = vadd.f32 %v3503, %v3759
    %3761 = vmatprep.mubr.f32.mxu0 %v846
    %3762 = vmatmul.mubr.f32.gmra.mxu0 %v845
    %v3763 = vpop.f32.mrf.mxu0
    %v3764 = vadd.f32 %v3507, %v3763
    %v3765 = vpop.f32.mrf.mxu0
    %v3766 = vadd.f32 %v3509, %v3765
    %3767 = vmatprep.mubr.f32.mxu0 %v852
    %3768 = vmatmul.mubr.f32.gmra.mxu0 %v851
    %v3769 = vpop.f32.mrf.mxu0
    %v3770 = vadd.f32 %v3513, %v3769
    %v3771 = vpop.f32.mrf.mxu0
    %v3772 = vadd.f32 %v3515, %v3771
    %3773 = vmatprep.mubr.f32.mxu0 %v858
    %3774 = vmatmul.mubr.f32.gmra.mxu0 %v857
    %v3775 = vpop.f32.mrf.mxu0
    %v3776 = vadd.f32 %v3519, %v3775
    %v3777 = vpop.f32.mrf.mxu0
    %v3778 = vadd.f32 %v3521, %v3777
    %3779 = vmatprep.mubr.f32.mxu0 %v864
    %3780 = vmatmul.mubr.f32.gmra.mxu0 %v863
    %v3781 = vpop.f32.mrf.mxu0
    %v3782 = vadd.f32 %v3525, %v3781
    %v3783 = vpop.f32.mrf.mxu0
    %v3784 = vadd.f32 %v3527, %v3783
    %3785 = vmatprep.mubr.f32.mxu0 %v870
    %3786 = vmatmul.mubr.f32.gmra.mxu0 %v869
    %v3787 = vpop.f32.mrf.mxu0
    %v3788 = vadd.f32 %v3531, %v3787
    %v3789 = vpop.f32.mrf.mxu0
    %v3790 = vadd.f32 %v3533, %v3789
    %3791 = vmatprep.mubr.f32.mxu0 %v876
    %3792 = vmatmul.mubr.f32.gmra.mxu0 %v875
    %v3793 = vpop.f32.mrf.mxu0
    %v3794 = vadd.f32 %v3537, %v3793
    %v3795 = vpop.f32.mrf.mxu0
    %v3796 = vadd.f32 %v3539, %v3795
    %3797 = vmatprep.mubr.f32.mxu0 %v882
    %3798 = vmatmul.mubr.f32.gmra.mxu0 %v881
    %v3799 = vpop.f32.mrf.mxu0
    %v3800 = vadd.f32 %v3543, %v3799
    %v3801 = vpop.f32.mrf.mxu0
    %v3802 = vadd.f32 %v3545, %v3801
    %3803 = vmatprep.mubr.f32.mxu0 %v888
    %3804 = vmatmul.mubr.f32.gmra.mxu0 %v887
    %v3805 = vpop.f32.mrf.mxu0
    %v3806 = vadd.f32 %v3549, %v3805
    %v3807 = vpop.f32.mrf.mxu0
    %v3808 = vadd.f32 %v3551, %v3807
    %3809 = vmatprep.mubr.f32.mxu0 %v894
    %3810 = vmatmul.mubr.f32.gmra.mxu0 %v893
    %v3811 = vpop.f32.mrf.mxu0
    %v3812 = vadd.f32 %v3555, %v3811
    %v3813 = vpop.f32.mrf.mxu0
    %v3814 = vadd.f32 %v3557, %v3813
    %3815 = vmatprep.mubr.f32.mxu0 %v900
    %3816 = vmatmul.mubr.f32.gmra.mxu0 %v899
    %v3817 = vpop.f32.mrf.mxu0
    %v3818 = vadd.f32 %v3561, %v3817
    %v3819 = vpop.f32.mrf.mxu0
    %v3820 = vadd.f32 %v3563, %v3819
    %3821 = vmatprep.mubr.f32.mxu0 %v906
    %3822 = vmatmul.mubr.f32.gmra.mxu0 %v905
    %v3823 = vpop.f32.mrf.mxu0
    %v3824 = vadd.f32 %v3567, %v3823
    %v3825 = vpop.f32.mrf.mxu0
    %v3826 = vadd.f32 %v3569, %v3825
    %3827 = vmatprep.mubr.f32.mxu0 %v912
    %3828 = vmatmul.mubr.f32.gmra.mxu0 %v911
    %v3829 = vpop.f32.mrf.mxu0
    %v3830 = vadd.f32 %v3573, %v3829
    %v3831 = vpop.f32.mrf.mxu0
    %v3832 = vadd.f32 %v3575, %v3831
    %3833 = vmatprep.mubr.f32.mxu0 %v918
    %3834 = vmatmul.mubr.f32.gmra.mxu0 %v917
    %v3835 = vpop.f32.mrf.mxu0
    %v3836 = vadd.f32 %v3579, %v3835
    %v3837 = vpop.f32.mrf.mxu0
    %v3838 = vadd.f32 %v3581, %v3837
    %3839 = vmatprep.mubr.f32.mxu0 %v924
    %3840 = vmatmul.mubr.f32.gmra.mxu0 %v923
    %v3841 = vpop.f32.mrf.mxu0
    %v3842 = vadd.f32 %v3585, %v3841
    %v3843 = vpop.f32.mrf.mxu0
    %v3844 = vadd.f32 %v3587, %v3843
    %3845 = vmatprep.mubr.f32.mxu0 %v930
    %3846 = vmatmul.mubr.f32.gmra.mxu0 %v929
    %v3847 = vpop.f32.mrf.mxu0
    %v3848 = vadd.f32 %v3591, %v3847
    %v3849 = vpop.f32.mrf.mxu0
    %v3850 = vadd.f32 %v3593, %v3849
    %3851 = vdwg.mxu0
    %3852 = vst [vmem:[#allocation11] sm:$0xff] %v2120
    %3853 = vst [vmem:[#allocation11 + $0x8] sm:$0xff] %v2122
    %3854 = vst [vmem:[#allocation11 + $0x10] sm:$0xff] %v2891
    %3855 = vst [vmem:[#allocation11 + $0x18] sm:$0xff] %v2893
    %3856 = vst [vmem:[#allocation11 + $0x20] sm:$0xff] %v3662
    %3857 = vst [vmem:[#allocation11 + $0x28] sm:$0xff] %v3664
    %3858 = vst [vmem:[#allocation11 + $0x30] sm:$0xff] %v2126
    %3859 = vst [vmem:[#allocation11 + $0x38] sm:$0xff] %v2128
    %3860 = vst [vmem:[#allocation11 + $0x40] sm:$0xff] %v2897
    %3861 = vst [vmem:[#allocation11 + $0x48] sm:$0xff] %v2899
    %3862 = vst [vmem:[#allocation11 + $0x50] sm:$0xff] %v3668
    %3863 = vst [vmem:[#allocation11 + $0x58] sm:$0xff] %v3670
    %3864 = vst [vmem:[#allocation11 + $0x60] sm:$0xff] %v2132
    %3865 = vst [vmem:[#allocation11 + $0x68] sm:$0xff] %v2134
    %3866 = vst [vmem:[#allocation11 + $0x70] sm:$0xff] %v2903
    %3867 = vst [vmem:[#allocation11 + $0x78] sm:$0xff] %v2905
    %3868 = vst [vmem:[#allocation11 + $0x80] sm:$0xff] %v3674
    %3869 = vst [vmem:[#allocation11 + $0x88] sm:$0xff] %v3676
    %3870 = vst [vmem:[#allocation11 + $0x90] sm:$0xff] %v2138
    %3871 = vst [vmem:[#allocation11 + $0x98] sm:$0xff] %v2140
    %3872 = vst [vmem:[#allocation11 + $0xa0] sm:$0xff] %v2909
    %3873 = vst [vmem:[#allocation11 + $0xa8] sm:$0xff] %v2911
    %3874 = vst [vmem:[#allocation11 + $0xb0] sm:$0xff] %v3680
    %3875 = vst [vmem:[#allocation11 + $0xb8] sm:$0xff] %v3682
    %3876 = vst [vmem:[#allocation11 + $0xc0] sm:$0xff] %v2144
    %3877 = vst [vmem:[#allocation11 + $0xc8] sm:$0xff] %v2146
    %3878 = vst [vmem:[#allocation11 + $0xd0] sm:$0xff] %v2915
    %3879 = vst [vmem:[#allocation11 + $0xd8] sm:$0xff] %v2917
    %3880 = vst [vmem:[#allocation11 + $0xe0] sm:$0xff] %v3686
    %3881 = vst [vmem:[#allocation11 + $0xe8] sm:$0xff] %v3688
    %3882 = vst [vmem:[#allocation11 + $0xf0] sm:$0xff] %v2150
    %3883 = vst [vmem:[#allocation11 + $0xf8] sm:$0xff] %v2152
    %3884 = vst [vmem:[#allocation11 + $0x100] sm:$0xff] %v2921
    %3885 = vst [vmem:[#allocation11 + $0x108] sm:$0xff] %v2923
    %3886 = vst [vmem:[#allocation11 + $0x110] sm:$0xff] %v3692
    %3887 = vst [vmem:[#allocation11 + $0x118] sm:$0xff] %v3694
    %3888 = vst [vmem:[#allocation11 + $0x120] sm:$0xff] %v2156
    %3889 = vst [vmem:[#allocation11 + $0x128] sm:$0xff] %v2158
    %3890 = vst [vmem:[#allocation11 + $0x130] sm:$0xff] %v2927
    %3891 = vst [vmem:[#allocation11 + $0x138] sm:$0xff] %v2929
    %3892 = vst [vmem:[#allocation11 + $0x140] sm:$0xff] %v3698
    %3893 = vst [vmem:[#allocation11 + $0x148] sm:$0xff] %v3700
    %3894 = vst [vmem:[#allocation11 + $0x150] sm:$0xff] %v2162
    %3895 = vst [vmem:[#allocation11 + $0x158] sm:$0xff] %v2164
    %3896 = vst [vmem:[#allocation11 + $0x160] sm:$0xff] %v2933
    %3897 = vst [vmem:[#allocation11 + $0x168] sm:$0xff] %v2935
    %3898 = vst [vmem:[#allocation11 + $0x170] sm:$0xff] %v3704
    %3899 = vst [vmem:[#allocation11 + $0x178] sm:$0xff] %v3706
    %3900 = vst [vmem:[#allocation11 + $0x180] sm:$0xff] %v2168
    %3901 = vst [vmem:[#allocation11 + $0x188] sm:$0xff] %v2170
    %3902 = vst [vmem:[#allocation11 + $0x190] sm:$0xff] %v2939
    %3903 = vst [vmem:[#allocation11 + $0x198] sm:$0xff] %v2941
    %3904 = vst [vmem:[#allocation11 + $0x1a0] sm:$0xff] %v3710
    %3905 = vst [vmem:[#allocation11 + $0x1a8] sm:$0xff] %v3712
    %3906 = vst [vmem:[#allocation11 + $0x1b0] sm:$0xff] %v2174
    %3907 = vst [vmem:[#allocation11 + $0x1b8] sm:$0xff] %v2176
    %3908 = vst [vmem:[#allocation11 + $0x1c0] sm:$0xff] %v2945
    %3909 = vst [vmem:[#allocation11 + $0x1c8] sm:$0xff] %v2947
    %3910 = vst [vmem:[#allocation11 + $0x1d0] sm:$0xff] %v3716
    %3911 = vst [vmem:[#allocation11 + $0x1d8] sm:$0xff] %v3718
    %3912 = vst [vmem:[#allocation11 + $0x1e0] sm:$0xff] %v2180
    %3913 = vst [vmem:[#allocation11 + $0x1e8] sm:$0xff] %v2182
    %3914 = vst [vmem:[#allocation11 + $0x1f0] sm:$0xff] %v2951
    %3915 = vst [vmem:[#allocation11 + $0x1f8] sm:$0xff] %v2953
    %3916 = vst [vmem:[#allocation11 + $0x200] sm:$0xff] %v3722
    %3917 = vst [vmem:[#allocation11 + $0x208] sm:$0xff] %v3724
    %3918 = vst [vmem:[#allocation11 + $0x210] sm:$0xff] %v2186
    %3919 = vst [vmem:[#allocation11 + $0x218] sm:$0xff] %v2188
    %3920 = vst [vmem:[#allocation11 + $0x220] sm:$0xff] %v2957
    %3921 = vst [vmem:[#allocation11 + $0x228] sm:$0xff] %v2959
    %3922 = vst [vmem:[#allocation11 + $0x230] sm:$0xff] %v3728
    %3923 = vst [vmem:[#allocation11 + $0x238] sm:$0xff] %v3730
    %3924 = vst [vmem:[#allocation11 + $0x240] sm:$0xff] %v2192
    %3925 = vst [vmem:[#allocation11 + $0x248] sm:$0xff] %v2194
    %3926 = vst [vmem:[#allocation11 + $0x250] sm:$0xff] %v2963
    %3927 = vst [vmem:[#allocation11 + $0x258] sm:$0xff] %v2965
    %3928 = vst [vmem:[#allocation11 + $0x260] sm:$0xff] %v3734
    %3929 = vst [vmem:[#allocation11 + $0x268] sm:$0xff] %v3736
    %3930 = vst [vmem:[#allocation11 + $0x270] sm:$0xff] %v2198
    %3931 = vst [vmem:[#allocation11 + $0x278] sm:$0xff] %v2200
    %3932 = vst [vmem:[#allocation11 + $0x280] sm:$0xff] %v2969
    %3933 = vst [vmem:[#allocation11 + $0x288] sm:$0xff] %v2971
    %3934 = vst [vmem:[#allocation11 + $0x290] sm:$0xff] %v3740
    %3935 = vst [vmem:[#allocation11 + $0x298] sm:$0xff] %v3742
    %3936 = vst [vmem:[#allocation11 + $0x2a0] sm:$0xff] %v2204
    %3937 = vst [vmem:[#allocation11 + $0x2a8] sm:$0xff] %v2206
    %3938 = vst [vmem:[#allocation11 + $0x2b0] sm:$0xff] %v2975
    %3939 = vst [vmem:[#allocation11 + $0x2b8] sm:$0xff] %v2977
    %3940 = vst [vmem:[#allocation11 + $0x2c0] sm:$0xff] %v3746
    %3941 = vst [vmem:[#allocation11 + $0x2c8] sm:$0xff] %v3748
    %3942 = vst [vmem:[#allocation11 + $0x2d0] sm:$0xff] %v2210
    %3943 = vst [vmem:[#allocation11 + $0x2d8] sm:$0xff] %v2212
    %3944 = vst [vmem:[#allocation11 + $0x2e0] sm:$0xff] %v2981
    %3945 = vst [vmem:[#allocation11 + $0x2e8] sm:$0xff] %v2983
    %3946 = vst [vmem:[#allocation11 + $0x2f0] sm:$0xff] %v3752
    %3947 = vst [vmem:[#allocation11 + $0x2f8] sm:$0xff] %v3754
    %3948 = vst [vmem:[#allocation11 + $0x300] sm:$0xff] %v2216
    %3949 = vst [vmem:[#allocation11 + $0x308] sm:$0xff] %v2218
    %3950 = vst [vmem:[#allocation11 + $0x310] sm:$0xff] %v2987
    %3951 = vst [vmem:[#allocation11 + $0x318] sm:$0xff] %v2989
    %3952 = vst [vmem:[#allocation11 + $0x320] sm:$0xff] %v3758
    %3953 = vst [vmem:[#allocation11 + $0x328] sm:$0xff] %v3760
    %3954 = vst [vmem:[#allocation11 + $0x330] sm:$0xff] %v2222
    %3955 = vst [vmem:[#allocation11 + $0x338] sm:$0xff] %v2224
    %3956 = vst [vmem:[#allocation11 + $0x340] sm:$0xff] %v2993
    %3957 = vst [vmem:[#allocation11 + $0x348] sm:$0xff] %v2995
    %3958 = vst [vmem:[#allocation11 + $0x350] sm:$0xff] %v3764
    %3959 = vst [vmem:[#allocation11 + $0x358] sm:$0xff] %v3766
    %3960 = vst [vmem:[#allocation11 + $0x360] sm:$0xff] %v2228
    %3961 = vst [vmem:[#allocation11 + $0x368] sm:$0xff] %v2230
    %3962 = vst [vmem:[#allocation11 + $0x370] sm:$0xff] %v2999
    %3963 = vst [vmem:[#allocation11 + $0x378] sm:$0xff] %v3001
    %3964 = vst [vmem:[#allocation11 + $0x380] sm:$0xff] %v3770
    %3965 = vst [vmem:[#allocation11 + $0x388] sm:$0xff] %v3772
    %3966 = vst [vmem:[#allocation11 + $0x390] sm:$0xff] %v2234
    %3967 = vst [vmem:[#allocation11 + $0x398] sm:$0xff] %v2236
    %3968 = vst [vmem:[#allocation11 + $0x3a0] sm:$0xff] %v3005
    %3969 = vst [vmem:[#allocation11 + $0x3a8] sm:$0xff] %v3007
    %3970 = vst [vmem:[#allocation11 + $0x3b0] sm:$0xff] %v3776
    %3971 = vst [vmem:[#allocation11 + $0x3b8] sm:$0xff] %v3778
    %3972 = vst [vmem:[#allocation11 + $0x3c0] sm:$0xff] %v2240
    %3973 = vst [vmem:[#allocation11 + $0x3c8] sm:$0xff] %v2242
    %3974 = vst [vmem:[#allocation11 + $0x3d0] sm:$0xff] %v3011
    %3975 = vst [vmem:[#allocation11 + $0x3d8] sm:$0xff] %v3013
    %3976 = vst [vmem:[#allocation11 + $0x3e0] sm:$0xff] %v3782
    %3977 = vst [vmem:[#allocation11 + $0x3e8] sm:$0xff] %v3784
    %3978 = vst [vmem:[#allocation11 + $0x3f0] sm:$0xff] %v2246
    %3979 = vst [vmem:[#allocation11 + $0x3f8] sm:$0xff] %v2248
    %3980 = vst [vmem:[#allocation11 + $0x400] sm:$0xff] %v3017
    %3981 = vst [vmem:[#allocation11 + $0x408] sm:$0xff] %v3019
    %3982 = vst [vmem:[#allocation11 + $0x410] sm:$0xff] %v3788
    %3983 = vst [vmem:[#allocation11 + $0x418] sm:$0xff] %v3790
    %3984 = vst [vmem:[#allocation11 + $0x420] sm:$0xff] %v2252
    %3985 = vst [vmem:[#allocation11 + $0x428] sm:$0xff] %v2254
    %3986 = vst [vmem:[#allocation11 + $0x430] sm:$0xff] %v3023
    %3987 = vst [vmem:[#allocation11 + $0x438] sm:$0xff] %v3025
    %3988 = vst [vmem:[#allocation11 + $0x440] sm:$0xff] %v3794
    %3989 = vst [vmem:[#allocation11 + $0x448] sm:$0xff] %v3796
    %3990 = vst [vmem:[#allocation11 + $0x450] sm:$0xff] %v2258
    %3991 = vst [vmem:[#allocation11 + $0x458] sm:$0xff] %v2260
    %3992 = vst [vmem:[#allocation11 + $0x460] sm:$0xff] %v3029
    %3993 = vst [vmem:[#allocation11 + $0x468] sm:$0xff] %v3031
    %3994 = vst [vmem:[#allocation11 + $0x470] sm:$0xff] %v3800
    %3995 = vst [vmem:[#allocation11 + $0x478] sm:$0xff] %v3802
    %3996 = vst [vmem:[#allocation11 + $0x480] sm:$0xff] %v2264
    %3997 = vst [vmem:[#allocation11 + $0x488] sm:$0xff] %v2266
    %3998 = vst [vmem:[#allocation11 + $0x490] sm:$0xff] %v3035
    %3999 = vst [vmem:[#allocation11 + $0x498] sm:$0xff] %v3037
    %4000 = vst [vmem:[#allocation11 + $0x4a0] sm:$0xff] %v3806
    %4001 = vst [vmem:[#allocation11 + $0x4a8] sm:$0xff] %v3808
    %4002 = vst [vmem:[#allocation11 + $0x4b0] sm:$0xff] %v2270
    %4003 = vst [vmem:[#allocation11 + $0x4b8] sm:$0xff] %v2272
    %4004 = vst [vmem:[#allocation11 + $0x4c0] sm:$0xff] %v3041
    %4005 = vst [vmem:[#allocation11 + $0x4c8] sm:$0xff] %v3043
    %4006 = vst [vmem:[#allocation11 + $0x4d0] sm:$0xff] %v3812
    %4007 = vst [vmem:[#allocation11 + $0x4d8] sm:$0xff] %v3814
    %4008 = vst [vmem:[#allocation11 + $0x4e0] sm:$0xff] %v2276
    %4009 = vst [vmem:[#allocation11 + $0x4e8] sm:$0xff] %v2278
    %4010 = vst [vmem:[#allocation11 + $0x4f0] sm:$0xff] %v3047
    %4011 = vst [vmem:[#allocation11 + $0x4f8] sm:$0xff] %v3049
    %4012 = vst [vmem:[#allocation11 + $0x500] sm:$0xff] %v3818
    %4013 = vst [vmem:[#allocation11 + $0x508] sm:$0xff] %v3820
    %4014 = vst [vmem:[#allocation11 + $0x510] sm:$0xff] %v2282
    %4015 = vst [vmem:[#allocation11 + $0x518] sm:$0xff] %v2284
    %4016 = vst [vmem:[#allocation11 + $0x520] sm:$0xff] %v3053
    %4017 = vst [vmem:[#allocation11 + $0x528] sm:$0xff] %v3055
    %4018 = vst [vmem:[#allocation11 + $0x530] sm:$0xff] %v3824
    %4019 = vst [vmem:[#allocation11 + $0x538] sm:$0xff] %v3826
    %4020 = vst [vmem:[#allocation11 + $0x540] sm:$0xff] %v2288
    %4021 = vst [vmem:[#allocation11 + $0x548] sm:$0xff] %v2290
    %4022 = vst [vmem:[#allocation11 + $0x550] sm:$0xff] %v3059
    %4023 = vst [vmem:[#allocation11 + $0x558] sm:$0xff] %v3061
    %4024 = vst [vmem:[#allocation11 + $0x560] sm:$0xff] %v3830
    %4025 = vst [vmem:[#allocation11 + $0x568] sm:$0xff] %v3832
    %4026 = vst [vmem:[#allocation11 + $0x570] sm:$0xff] %v2294
    %4027 = vst [vmem:[#allocation11 + $0x578] sm:$0xff] %v2296
    %4028 = vst [vmem:[#allocation11 + $0x580] sm:$0xff] %v3065
    %4029 = vst [vmem:[#allocation11 + $0x588] sm:$0xff] %v3067
    %4030 = vst [vmem:[#allocation11 + $0x590] sm:$0xff] %v3836
    %4031 = vst [vmem:[#allocation11 + $0x598] sm:$0xff] %v3838
    %4032 = vst [vmem:[#allocation11 + $0x5a0] sm:$0xff] %v2300
    %4033 = vst [vmem:[#allocation11 + $0x5a8] sm:$0xff] %v2302
    %4034 = vst [vmem:[#allocation11 + $0x5b0] sm:$0xff] %v3071
    %4035 = vst [vmem:[#allocation11 + $0x5b8] sm:$0xff] %v3073
    %4036 = vst [vmem:[#allocation11 + $0x5c0] sm:$0xff] %v3842
    %4037 = vst [vmem:[#allocation11 + $0x5c8] sm:$0xff] %v3844
    %4038 = vst [vmem:[#allocation11 + $0x5d0] sm:$0xff] %v2306
    %4039 = vst [vmem:[#allocation11 + $0x5d8] sm:$0xff] %v2308
    %4040 = vst [vmem:[#allocation11 + $0x5e0] sm:$0xff] %v3077
    %4041 = vst [vmem:[#allocation11 + $0x5e8] sm:$0xff] %v3079
    %4042 = vst [vmem:[#allocation11 + $0x5f0] sm:$0xff] %v3848
    %4043 = vst [vmem:[#allocation11 + $0x5f8] sm:$0xff] %v3850
    // Predicated region
    $region48: #{tpu_custom_call.1} parent=1 // pred_check
      _
    $region49: #{tpu_custom_call.1} parent=1 // pred_check_branch
      %4045 = sbr.rel (0) target = $region51
    $region50: #{tpu_custom_call.1} parent=1 // pred_region
      %s4047 = ssub.s32 24576, 24576
      %4048 = vsyncadd [#allocation7], %s4047
      %s4049 = sshll.u32 [#allocation11], 4
      %s4050 = int_to_ptr.vmem [resolvable:$true] %s4049
      %4055 = dma.vmem_to_hbm [thread:$0]  %s4050, 24576, %s4, [#allocation7], 768, 768, 48
    $region51: #{tpu_custom_call.1} parent=1 // pred_fallthru
      _
    // Predicated region
    $region52: #{tpu_custom_call.1} parent=1 // pred_check
      _
    $region53: #{tpu_custom_call.1} parent=1 // pred_check_branch
      %4057 = sbr.rel (0) target = $region55
    $region54: #{tpu_custom_call.1} parent=1 // pred_region
      %4058 = dma.done [#allocation7], 24576
    $region55: #{tpu_custom_call.1} parent=1 // pred_fallthru
      _
    %4059 = vsyncpa [#allocation6], 1
    %4060 = vsyncpa [#allocation9], 1
    %4061 = vsyncpa [#allocation7], 1

</llo_original>
